<compile_context>
chip_gen: v6e
topology: v6e:2x2x1
jax: 0.10.0
libtpu: 0.0.40
codegen_flags: <defaults>
</compile_context>

<pallas_src>
import functools
import math

import numpy as np
import jax
import jax.numpy as jnp
from jax import lax
from jax.experimental import pallas as pl
from jax.experimental.pallas import tpu as pltpu


# ------------------------------ fused kernel -------------------------------

def _net_kernel(bb, x_ref, wb1_ref, b1t_ref, wb2_ref, b2t_ref,
                ce1_ref, co1_ref, ce2_ref, co2_ref,
                wfc1_ref, b3_ref, wfc2_ref, b4_ref,
                o_ref, rp1_ref, rp2_ref):
    """One grid step = bb samples, h-major slab layout (row = h*bb + b)."""
    dot = functools.partial(jnp.dot, preferred_element_type=jnp.float32)

    # ---- conv1 (1->10, k=5, valid) as 5 banded matmuls ---------------------
    # x slab: [28*bb, 28]; row shift by di is a contiguous 8-aligned slice.
    acc = dot(x_ref[0:24 * bb, :], wb1_ref[0])
    for di in range(1, 5):
        acc = acc + dot(x_ref[di * bb:(di + 24) * bb, :], wb1_ref[di])
    c1 = acc + b1t_ref[...]                                  # [24*bb, 240]

    # ---- 2x2 max-pool + ReLU ------------------------------------------------
    # Row pool: adjacent h-blocks of bb rows -> slice + max (VPU) into scratch.
    for k in range(12):
        rp1_ref[k * bb:(k + 1) * bb, :] = jnp.maximum(
            c1[(2 * k) * bb:(2 * k + 1) * bb, :],
            c1[(2 * k + 1) * bb:(2 * k + 2) * bb, :])
    r1 = rp1_ref[...]                                        # [12*bb, 240]
    # Column pool via 0/1 selector matmuls (MXU), then ReLU.
    p1 = jnp.maximum(
        jnp.maximum(dot(r1, ce1_ref[...]), dot(r1, co1_ref[...])), 0.0)
    # p1: [12*bb, 120]  (cols = ci*12 + w)

    # ---- conv2 (10->20, k=5, valid) as 5 banded matmuls --------------------
    acc2 = dot(p1[0:8 * bb, :], wb2_ref[0])
    for di in range(1, 5):
        acc2 = acc2 + dot(p1[di * bb:(di + 8) * bb, :], wb2_ref[di])
    c2 = acc2 + b2t_ref[...]                                 # [8*bb, 160]
    # nn.Dropout2d(): identity in eval mode.
    # TODO(synk): training-mode channel dropout (pltpu.prng_*) not implemented.

    # ---- 2x2 max-pool + ReLU ------------------------------------------------
    for k in range(4):
        rp2_ref[k * bb:(k + 1) * bb, :] = jnp.maximum(
            c2[(2 * k) * bb:(2 * k + 1) * bb, :],
            c2[(2 * k + 1) * bb:(2 * k + 2) * bb, :])
    r2 = rp2_ref[...]                                        # [4*bb, 160]
    p2 = jnp.maximum(
        jnp.maximum(dot(r2, ce2_ref[...]), dot(r2, co2_ref[...])), 0.0)
    # p2: [4*bb, 80]  (cols = co*4 + w3)

    # ---- fc1 (320->50) + ReLU, batched over bb ------------------------------
    # torch flatten order folded into the host-permuted wfc1 weights.
    h = dot(p2[0:bb, :], wfc1_ref[0])
    for h3 in range(1, 4):
        h = h + dot(p2[h3 * bb:(h3 + 1) * bb, :], wfc1_ref[h3])
    h = jnp.maximum(h + b3_ref[...], 0.0)                    # [bb, 50]
    # F.dropout(training=False): identity in eval mode.

    # ---- fc2 (50->10) + log_softmax -----------------------------------------
    z = dot(h, wfc2_ref[...]) + b4_ref[...]                  # [bb, 10]
    m = jnp.max(z, axis=1, keepdims=True)
    s = z - m
    lse = jnp.log(jnp.sum(jnp.exp(s), axis=1, keepdims=True))
    o_ref[...] = s - lse


# ------------------------ host-side weight pre-layout -----------------------

def _prep_weights(params):
    f32 = jnp.float32
    w1 = params["conv1_w"].astype(f32)                   # [10, 1, 5, 5]
    w2 = params["conv2_w"].astype(f32)                   # [20, 10, 5, 5]

    # conv1 band matrices: wb1[di, w, co*24+wo] = w1[co, 0, di, w-wo], 0<=w-wo<5
    e1 = np.zeros((5, 28, 24), np.float32)
    for dj in range(5):
        e1[dj, np.arange(24) + dj, np.arange(24)] = 1.0
    wb1 = jnp.einsum("jwv,cij->iwcv", jnp.asarray(e1), w1[:, 0]).reshape(5, 28, 240)
    b1t = jnp.repeat(params["conv1_b"].astype(f32), 24).reshape(1, 240)

    # conv2 band matrices: wb2[di, ci*12+w, co*8+wo] = w2[co, ci, di, w-wo]
    e2 = np.zeros((5, 12, 8), np.float32)
    for dj in range(5):
        e2[dj, np.arange(8) + dj, np.arange(8)] = 1.0
    wb2 = jnp.einsum("jwv,acij->icwav", jnp.asarray(e2), w2).reshape(5, 120, 160)
    b2t = jnp.repeat(params["conv2_b"].astype(f32), 8).reshape(1, 160)

    # fc1 weights permuted from torch flatten order (co*16 + h3*4 + w3) to the
    # kernel's activation layout (row block = h3, col = co*4 + w3).
    wfc1 = (params["fc1_w"].astype(f32).reshape(50, 20, 4, 4)
            .transpose(2, 1, 3, 0).reshape(4, 80, 50))
    b3 = params["fc1_b"].astype(f32).reshape(1, 50)
    wfc2 = params["fc2_w"].astype(f32).T                 # [50, 10]
    b4 = params["fc2_b"].astype(f32).reshape(1, 10)
    return wb1, b1t, wb2, b2t, wfc1, b3, wfc2, b4


def _build_selectors():
    """0/1 column-pool selection matrices (right matmuls, shared across batch)."""
    def col_pool_sel(w_in, c):
        wo = w_in // 2
        ce = np.zeros((c * w_in, c * wo), np.float32)
        co = np.zeros((c * w_in, c * wo), np.float32)
        for ci in range(c):
            ce[ci * w_in + 2 * np.arange(wo), ci * wo + np.arange(wo)] = 1.0
            co[ci * w_in + 2 * np.arange(wo) + 1, ci * wo + np.arange(wo)] = 1.0
        return ce, co

    ce1, co1 = col_pool_sel(24, 10)
    ce2, co2 = col_pool_sel(8, 20)
    return tuple(jnp.asarray(a) for a in (ce1, co1, ce2, co2))


# ------------------------------- forward pass -------------------------------

def net_forward(params, x, block_b=32):
    """x: [N, 1, 28, 28] -> log-probs [N, 10]. Single fused, batched kernel."""
    assert block_b % 8 == 0
    n = x.shape[0]
    bb = max(8, min(block_b, 8 * ((n + 7) // 8)))        # samples per grid step
    n_pad = ((n + bb - 1) // bb) * bb
    g = n_pad // bb

    wb1, b1t, wb2, b2t, wfc1, b3, wfc2, b4 = _prep_weights(params)
    ce1, co1, ce2, co2 = _build_selectors()

    xs = x.astype(jnp.float32).reshape(n, 28, 28)        # Cin == 1
    if n_pad != n:
        xs = jnp.pad(xs, ((0, n_pad - n), (0, 0), (0, 0)))
    # h-major slab per batch block: row = (block*28 + h) * bb + b  (cheap host
    # layout plumbing; the kernel then only needs aligned contiguous slices).
    x_t = xs.reshape(g, bb, 28, 28).transpose(0, 2, 1, 3).reshape(g * 28 * bb, 28)

    args = (x_t, wb1, b1t, wb2, b2t, ce1, co1, ce2, co2, wfc1, b3, wfc2, b4)

    def _const_spec(a):
        return pl.BlockSpec(a.shape, lambda i, _z=(0,) * a.ndim: _z)

    in_specs = [pl.BlockSpec((28 * bb, 28), lambda i: (i, 0))]
    in_specs += [_const_spec(a) for a in args[1:]]

    out = pl.pallas_call(
        functools.partial(_net_kernel, bb),
        out_shape=jax.ShapeDtypeStruct((n_pad, 10), jnp.float32),
        grid=(g,),
        in_specs=in_specs,
        out_specs=pl.BlockSpec((bb, 10), lambda i: (i, 0)),
        scratch_shapes=[pltpu.VMEM((12 * bb, 240), jnp.float32),
                        pltpu.VMEM((4 * bb, 160), jnp.float32)],
        compiler_params=pltpu.CompilerParams(
            dimension_semantics=("parallel",),
            vmem_limit_bytes=32 * 1024 * 1024),
    )(*args)
    return out[:n]


# ------------------------------ parameters ----------------------------------

def init_params(key):
    """Deterministic init matching the PyTorch module's shapes (bias enabled)."""
    def u(k, shape, fan_in):
        bound = 1.0 / math.sqrt(fan_in)
        return jax.random.uniform(k, shape, jnp.float32, -bound, bound)

    ks = jax.random.split(key, 8)
    return {
        "conv1_w": u(ks[0], (10, 1, 5, 5), 25),
        "conv1_b": u(ks[1], (10,), 25),
        "conv2_w": u(ks[2], (20, 10, 5, 5), 250),
        "conv2_b": u(ks[3], (20,), 250),
        "fc1_w":   u(ks[4], (50, 320), 320),    # torch layout [out, in]
        "fc1_b":   u(ks[5], (50,), 320),
        "fc2_w":   u(ks[6], (10, 50), 50),
        "fc2_b":   u(ks[7], (10,), 50),
    }


# --------------------------- pure-JAX reference ------------------------------

def reference_forward(params, x):
    dn = ("NCHW", "OIHW", "NCHW")
    y = lax.conv_general_dilated(x, params["conv1_w"], (1, 1), "VALID",
                                 dimension_numbers=dn)
    y = y + params["conv1_b"][None, :, None, None]
    y = jax.nn.relu(lax.reduce_window(y, -jnp.inf, lax.max,
                                      (1, 1, 2, 2), (1, 1, 2, 2), "VALID"))
    y = lax.conv_general_dilated(y, params["conv2_w"], (1, 1), "VALID",
                                 dimension_numbers=dn)
    y = y + params["conv2_b"][None, :, None, None]
    y = jax.nn.relu(lax.reduce_window(y, -jnp.inf, lax.max,
                                      (1, 1, 2, 2), (1, 1, 2, 2), "VALID"))
    y = y.reshape(y.shape[0], 320)
    y = jax.nn.relu(y @ params["fc1_w"].T + params["fc1_b"])
    y = y @ params["fc2_w"].T + params["fc2_b"]
    return jax.nn.log_softmax(y, axis=1)


if __name__ == "__main__":
    key = jax.random.PRNGKey(0)
    k_param, k_x, k_x2 = jax.random.split(key, 3)
    params = init_params(k_param)

    # MNIST-style input: batch=2, 1 channel, 28x28 (required by the 320 flatten)
    x = jax.random.normal(k_x, (2, 1, 28, 28), dtype=jnp.float32)
    out = jax.jit(net_forward)(params, x)
    out = jax.block_until_ready(out)
    assert out.shape == (2, 10)
    assert bool(jnp.all(jnp.isfinite(out)))
    assert bool(jnp.allclose(jnp.sum(jnp.exp(out), axis=1), 1.0, atol=1e-4))
    ref = jax.jit(reference_forward)(params, x)
    assert bool(jnp.allclose(out, ref, atol=1e-3, rtol=1e-3)), \
        float(jnp.max(jnp.abs(out - ref)))

    # Exercise the multi-block grid + batch-padding path (3 grid steps of 8).
    x2 = jax.random.normal(k_x2, (20, 1, 28, 28), dtype=jnp.float32)
    out2 = jax.jit(functools.partial(net_forward, block_b=8))(params, x2)
    out2 = jax.block_until_ready(out2)
    ref2 = jax.jit(reference_forward)(params, x2)
    assert out2.shape == (20, 10)
    assert bool(jnp.allclose(out2, ref2, atol=1e-3, rtol=1e-3)), \
        float(jnp.max(jnp.abs(out2 - ref2)))

    print("KERNEL_OK")
</pallas_src>

<mosaic_0001>
module attributes {stable_mosaic.version = 11 : i64} {
  func.func @_net_kernel(%arg0: i32, %arg1: memref<224x28xf32, #tpu.memory_space<vmem>>, %arg2: memref<5x28x240xf32, #tpu.memory_space<vmem>>, %arg3: memref<1x240xf32, #tpu.memory_space<vmem>>, %arg4: memref<5x120x160xf32, #tpu.memory_space<vmem>>, %arg5: memref<1x160xf32, #tpu.memory_space<vmem>>, %arg6: memref<240x120xf32, #tpu.memory_space<vmem>>, %arg7: memref<240x120xf32, #tpu.memory_space<vmem>>, %arg8: memref<160x80xf32, #tpu.memory_space<vmem>>, %arg9: memref<160x80xf32, #tpu.memory_space<vmem>>, %arg10: memref<4x80x50xf32, #tpu.memory_space<vmem>>, %arg11: memref<1x50xf32, #tpu.memory_space<vmem>>, %arg12: memref<50x10xf32, #tpu.memory_space<vmem>>, %arg13: memref<1x10xf32, #tpu.memory_space<vmem>>, %arg14: memref<8x10xf32, #tpu.memory_space<vmem>>, %arg15: memref<96x240xf32, #tpu.memory_space<vmem>>, %arg16: memref<32x160xf32, #tpu.memory_space<vmem>>) attributes {dimension_semantics = [#tpu.dimension_semantics<parallel>], iteration_bounds = array<i64: 1>, scalar_prefetch = 0 : i64, scratch_operands = 2 : i64, tpu.core_type = #tpu.core_type<tc>, window_params = [{transform_indices = @transform_0, window_bounds = array<i64: 224, 28>}, {pipeline_mode = #tpu.pipeline_mode<synchronous>, transform_indices = @transform_1, window_bounds = array<i64: 5, 28, 240>}, {pipeline_mode = #tpu.pipeline_mode<synchronous>, transform_indices = @transform_2, window_bounds = array<i64: 1, 240>}, {pipeline_mode = #tpu.pipeline_mode<synchronous>, transform_indices = @transform_3, window_bounds = array<i64: 5, 120, 160>}, {pipeline_mode = #tpu.pipeline_mode<synchronous>, transform_indices = @transform_4, window_bounds = array<i64: 1, 160>}, {pipeline_mode = #tpu.pipeline_mode<synchronous>, transform_indices = @transform_5, window_bounds = array<i64: 240, 120>}, {pipeline_mode = #tpu.pipeline_mode<synchronous>, transform_indices = @transform_6, window_bounds = array<i64: 240, 120>}, {pipeline_mode = #tpu.pipeline_mode<synchronous>, transform_indices = @transform_7, window_bounds = array<i64: 160, 80>}, {pipeline_mode = #tpu.pipeline_mode<synchronous>, transform_indices = @transform_8, window_bounds = array<i64: 160, 80>}, {pipeline_mode = #tpu.pipeline_mode<synchronous>, transform_indices = @transform_9, window_bounds = array<i64: 4, 80, 50>}, {pipeline_mode = #tpu.pipeline_mode<synchronous>, transform_indices = @transform_10, window_bounds = array<i64: 1, 50>}, {pipeline_mode = #tpu.pipeline_mode<synchronous>, transform_indices = @transform_11, window_bounds = array<i64: 50, 10>}, {pipeline_mode = #tpu.pipeline_mode<synchronous>, transform_indices = @transform_12, window_bounds = array<i64: 1, 10>}, {transform_indices = @transform_13, window_bounds = array<i64: 8, 10>}]} {
    %c0 = arith.constant 0 : index
    %c0_0 = arith.constant 0 : index
    %0 = vector.load %arg1[%c0, %c0_0] : memref<224x28xf32, #tpu.memory_space<vmem>>, vector<192x28xf32>
    %c0_1 = arith.constant 0 : index
    %c0_2 = arith.constant 0 : index
    %c0_3 = arith.constant 0 : index
    %1 = vector.load %arg2[%c0_1, %c0_2, %c0_3] : memref<5x28x240xf32, #tpu.memory_space<vmem>>, vector<1x28x240xf32>
    %2 = vector.shape_cast %1 : vector<1x28x240xf32> to vector<28x240xf32>
    %cst = arith.constant dense<0.000000e+00> : vector<192x240xf32>
    %3 = tpu.matmul %0, %2, %cst {dimension_numbers = #tpu.dot_dimension_numbers<[1], [0], [0], [1], [0, 0, 1, 1], [], []>} : vector<192x28xf32>, vector<28x240xf32>, vector<192x240xf32> -> vector<192x240xf32>
    %c8 = arith.constant 8 : index
    %c0_4 = arith.constant 0 : index
    %4 = vector.load %arg1[%c8, %c0_4] : memref<224x28xf32, #tpu.memory_space<vmem>>, vector<192x28xf32>
    %c1 = arith.constant 1 : index
    %c0_5 = arith.constant 0 : index
    %c0_6 = arith.constant 0 : index
    %5 = vector.load %arg2[%c1, %c0_5, %c0_6] : memref<5x28x240xf32, #tpu.memory_space<vmem>>, vector<1x28x240xf32>
    %6 = vector.shape_cast %5 : vector<1x28x240xf32> to vector<28x240xf32>
    %cst_7 = arith.constant dense<0.000000e+00> : vector<192x240xf32>
    %7 = tpu.matmul %4, %6, %cst_7 {dimension_numbers = #tpu.dot_dimension_numbers<[1], [0], [0], [1], [0, 0, 1, 1], [], []>} : vector<192x28xf32>, vector<28x240xf32>, vector<192x240xf32> -> vector<192x240xf32>
    %8 = arith.addf %3, %7 : vector<192x240xf32>
    %c16 = arith.constant 16 : index
    %c0_8 = arith.constant 0 : index
    %9 = vector.load %arg1[%c16, %c0_8] : memref<224x28xf32, #tpu.memory_space<vmem>>, vector<192x28xf32>
    %c2 = arith.constant 2 : index
    %c0_9 = arith.constant 0 : index
    %c0_10 = arith.constant 0 : index
    %10 = vector.load %arg2[%c2, %c0_9, %c0_10] : memref<5x28x240xf32, #tpu.memory_space<vmem>>, vector<1x28x240xf32>
    %11 = vector.shape_cast %10 : vector<1x28x240xf32> to vector<28x240xf32>
    %cst_11 = arith.constant dense<0.000000e+00> : vector<192x240xf32>
    %12 = tpu.matmul %9, %11, %cst_11 {dimension_numbers = #tpu.dot_dimension_numbers<[1], [0], [0], [1], [0, 0, 1, 1], [], []>} : vector<192x28xf32>, vector<28x240xf32>, vector<192x240xf32> -> vector<192x240xf32>
    %13 = arith.addf %8, %12 : vector<192x240xf32>
    %c24 = arith.constant 24 : index
    %c0_12 = arith.constant 0 : index
    %14 = vector.load %arg1[%c24, %c0_12] : memref<224x28xf32, #tpu.memory_space<vmem>>, vector<192x28xf32>
    %c3 = arith.constant 3 : index
    %c0_13 = arith.constant 0 : index
    %c0_14 = arith.constant 0 : index
    %15 = vector.load %arg2[%c3, %c0_13, %c0_14] : memref<5x28x240xf32, #tpu.memory_space<vmem>>, vector<1x28x240xf32>
    %16 = vector.shape_cast %15 : vector<1x28x240xf32> to vector<28x240xf32>
    %cst_15 = arith.constant dense<0.000000e+00> : vector<192x240xf32>
    %17 = tpu.matmul %14, %16, %cst_15 {dimension_numbers = #tpu.dot_dimension_numbers<[1], [0], [0], [1], [0, 0, 1, 1], [], []>} : vector<192x28xf32>, vector<28x240xf32>, vector<192x240xf32> -> vector<192x240xf32>
    %18 = arith.addf %13, %17 : vector<192x240xf32>
    %c32 = arith.constant 32 : index
    %c0_16 = arith.constant 0 : index
    %19 = vector.load %arg1[%c32, %c0_16] : memref<224x28xf32, #tpu.memory_space<vmem>>, vector<192x28xf32>
    %c4 = arith.constant 4 : index
    %c0_17 = arith.constant 0 : index
    %c0_18 = arith.constant 0 : index
    %20 = vector.load %arg2[%c4, %c0_17, %c0_18] : memref<5x28x240xf32, #tpu.memory_space<vmem>>, vector<1x28x240xf32>
    %21 = vector.shape_cast %20 : vector<1x28x240xf32> to vector<28x240xf32>
    %cst_19 = arith.constant dense<0.000000e+00> : vector<192x240xf32>
    %22 = tpu.matmul %19, %21, %cst_19 {dimension_numbers = #tpu.dot_dimension_numbers<[1], [0], [0], [1], [0, 0, 1, 1], [], []>} : vector<192x28xf32>, vector<28x240xf32>, vector<192x240xf32> -> vector<192x240xf32>
    %23 = arith.addf %18, %22 : vector<192x240xf32>
    %c0_20 = arith.constant 0 : index
    %c0_21 = arith.constant 0 : index
    %24 = vector.load %arg3[%c0_20, %c0_21] : memref<1x240xf32, #tpu.memory_space<vmem>>, vector<1x240xf32>
    %25 = vector.broadcast %24 : vector<1x240xf32> to vector<192x240xf32>
    %26 = arith.addf %23, %25 : vector<192x240xf32>
    %27 = vector.extract_strided_slice %26 {offsets = [0, 0], sizes = [8, 240], strides = [1, 1]} : vector<192x240xf32> to vector<8x240xf32>
    %28 = vector.extract_strided_slice %26 {offsets = [8, 0], sizes = [8, 240], strides = [1, 1]} : vector<192x240xf32> to vector<8x240xf32>
    %29 = arith.maximumf %27, %28 : vector<8x240xf32>
    %c0_22 = arith.constant 0 : index
    %c0_23 = arith.constant 0 : index
    %30 = vector.load %arg15[%c0_22, %c0_23] : memref<96x240xf32, #tpu.memory_space<vmem>>, vector<8x240xf32>
    tpu.vector_store %arg15[%c0_22, %c0_23], %29 {strides = array<i32>} : memref<96x240xf32, #tpu.memory_space<vmem>>, vector<8x240xf32>,
    %31 = vector.extract_strided_slice %26 {offsets = [16, 0], sizes = [8, 240], strides = [1, 1]} : vector<192x240xf32> to vector<8x240xf32>
    %32 = vector.extract_strided_slice %26 {offsets = [24, 0], sizes = [8, 240], strides = [1, 1]} : vector<192x240xf32> to vector<8x240xf32>
    %33 = arith.maximumf %31, %32 : vector<8x240xf32>
    %c8_24 = arith.constant 8 : index
    %c0_25 = arith.constant 0 : index
    %34 = vector.load %arg15[%c8_24, %c0_25] : memref<96x240xf32, #tpu.memory_space<vmem>>, vector<8x240xf32>
    tpu.vector_store %arg15[%c8_24, %c0_25], %33 {strides = array<i32>} : memref<96x240xf32, #tpu.memory_space<vmem>>, vector<8x240xf32>,
    %35 = vector.extract_strided_slice %26 {offsets = [32, 0], sizes = [8, 240], strides = [1, 1]} : vector<192x240xf32> to vector<8x240xf32>
    %36 = vector.extract_strided_slice %26 {offsets = [40, 0], sizes = [8, 240], strides = [1, 1]} : vector<192x240xf32> to vector<8x240xf32>
    %37 = arith.maximumf %35, %36 : vector<8x240xf32>
    %c16_26 = arith.constant 16 : index
    %c0_27 = arith.constant 0 : index
    %38 = vector.load %arg15[%c16_26, %c0_27] : memref<96x240xf32, #tpu.memory_space<vmem>>, vector<8x240xf32>
    tpu.vector_store %arg15[%c16_26, %c0_27], %37 {strides = array<i32>} : memref<96x240xf32, #tpu.memory_space<vmem>>, vector<8x240xf32>,
    %39 = vector.extract_strided_slice %26 {offsets = [48, 0], sizes = [8, 240], strides = [1, 1]} : vector<192x240xf32> to vector<8x240xf32>
    %40 = vector.extract_strided_slice %26 {offsets = [56, 0], sizes = [8, 240], strides = [1, 1]} : vector<192x240xf32> to vector<8x240xf32>
    %41 = arith.maximumf %39, %40 : vector<8x240xf32>
    %c24_28 = arith.constant 24 : index
    %c0_29 = arith.constant 0 : index
    %42 = vector.load %arg15[%c24_28, %c0_29] : memref<96x240xf32, #tpu.memory_space<vmem>>, vector<8x240xf32>
    tpu.vector_store %arg15[%c24_28, %c0_29], %41 {strides = array<i32>} : memref<96x240xf32, #tpu.memory_space<vmem>>, vector<8x240xf32>,
    %43 = vector.extract_strided_slice %26 {offsets = [64, 0], sizes = [8, 240], strides = [1, 1]} : vector<192x240xf32> to vector<8x240xf32>
    %44 = vector.extract_strided_slice %26 {offsets = [72, 0], sizes = [8, 240], strides = [1, 1]} : vector<192x240xf32> to vector<8x240xf32>
    %45 = arith.maximumf %43, %44 : vector<8x240xf32>
    %c32_30 = arith.constant 32 : index
    %c0_31 = arith.constant 0 : index
    %46 = vector.load %arg15[%c32_30, %c0_31] : memref<96x240xf32, #tpu.memory_space<vmem>>, vector<8x240xf32>
    tpu.vector_store %arg15[%c32_30, %c0_31], %45 {strides = array<i32>} : memref<96x240xf32, #tpu.memory_space<vmem>>, vector<8x240xf32>,
    %47 = vector.extract_strided_slice %26 {offsets = [80, 0], sizes = [8, 240], strides = [1, 1]} : vector<192x240xf32> to vector<8x240xf32>
    %48 = vector.extract_strided_slice %26 {offsets = [88, 0], sizes = [8, 240], strides = [1, 1]} : vector<192x240xf32> to vector<8x240xf32>
    %49 = arith.maximumf %47, %48 : vector<8x240xf32>
    %c40 = arith.constant 40 : index
    %c0_32 = arith.constant 0 : index
    %50 = vector.load %arg15[%c40, %c0_32] : memref<96x240xf32, #tpu.memory_space<vmem>>, vector<8x240xf32>
    tpu.vector_store %arg15[%c40, %c0_32], %49 {strides = array<i32>} : memref<96x240xf32, #tpu.memory_space<vmem>>, vector<8x240xf32>,
    %51 = vector.extract_strided_slice %26 {offsets = [96, 0], sizes = [8, 240], strides = [1, 1]} : vector<192x240xf32> to vector<8x240xf32>
    %52 = vector.extract_strided_slice %26 {offsets = [104, 0], sizes = [8, 240], strides = [1, 1]} : vector<192x240xf32> to vector<8x240xf32>
    %53 = arith.maximumf %51, %52 : vector<8x240xf32>
    %c48 = arith.constant 48 : index
    %c0_33 = arith.constant 0 : index
    %54 = vector.load %arg15[%c48, %c0_33] : memref<96x240xf32, #tpu.memory_space<vmem>>, vector<8x240xf32>
    tpu.vector_store %arg15[%c48, %c0_33], %53 {strides = array<i32>} : memref<96x240xf32, #tpu.memory_space<vmem>>, vector<8x240xf32>,
    %55 = vector.extract_strided_slice %26 {offsets = [112, 0], sizes = [8, 240], strides = [1, 1]} : vector<192x240xf32> to vector<8x240xf32>
    %56 = vector.extract_strided_slice %26 {offsets = [120, 0], sizes = [8, 240], strides = [1, 1]} : vector<192x240xf32> to vector<8x240xf32>
    %57 = arith.maximumf %55, %56 : vector<8x240xf32>
    %c56 = arith.constant 56 : index
    %c0_34 = arith.constant 0 : index
    %58 = vector.load %arg15[%c56, %c0_34] : memref<96x240xf32, #tpu.memory_space<vmem>>, vector<8x240xf32>
    tpu.vector_store %arg15[%c56, %c0_34], %57 {strides = array<i32>} : memref<96x240xf32, #tpu.memory_space<vmem>>, vector<8x240xf32>,
    %59 = vector.extract_strided_slice %26 {offsets = [128, 0], sizes = [8, 240], strides = [1, 1]} : vector<192x240xf32> to vector<8x240xf32>
    %60 = vector.extract_strided_slice %26 {offsets = [136, 0], sizes = [8, 240], strides = [1, 1]} : vector<192x240xf32> to vector<8x240xf32>
    %61 = arith.maximumf %59, %60 : vector<8x240xf32>
    %c64 = arith.constant 64 : index
    %c0_35 = arith.constant 0 : index
    %62 = vector.load %arg15[%c64, %c0_35] : memref<96x240xf32, #tpu.memory_space<vmem>>, vector<8x240xf32>
    tpu.vector_store %arg15[%c64, %c0_35], %61 {strides = array<i32>} : memref<96x240xf32, #tpu.memory_space<vmem>>, vector<8x240xf32>,
    %63 = vector.extract_strided_slice %26 {offsets = [144, 0], sizes = [8, 240], strides = [1, 1]} : vector<192x240xf32> to vector<8x240xf32>
    %64 = vector.extract_strided_slice %26 {offsets = [152, 0], sizes = [8, 240], strides = [1, 1]} : vector<192x240xf32> to vector<8x240xf32>
    %65 = arith.maximumf %63, %64 : vector<8x240xf32>
    %c72 = arith.constant 72 : index
    %c0_36 = arith.constant 0 : index
    %66 = vector.load %arg15[%c72, %c0_36] : memref<96x240xf32, #tpu.memory_space<vmem>>, vector<8x240xf32>
    tpu.vector_store %arg15[%c72, %c0_36], %65 {strides = array<i32>} : memref<96x240xf32, #tpu.memory_space<vmem>>, vector<8x240xf32>,
    %67 = vector.extract_strided_slice %26 {offsets = [160, 0], sizes = [8, 240], strides = [1, 1]} : vector<192x240xf32> to vector<8x240xf32>
    %68 = vector.extract_strided_slice %26 {offsets = [168, 0], sizes = [8, 240], strides = [1, 1]} : vector<192x240xf32> to vector<8x240xf32>
    %69 = arith.maximumf %67, %68 : vector<8x240xf32>
    %c80 = arith.constant 80 : index
    %c0_37 = arith.constant 0 : index
    %70 = vector.load %arg15[%c80, %c0_37] : memref<96x240xf32, #tpu.memory_space<vmem>>, vector<8x240xf32>
    tpu.vector_store %arg15[%c80, %c0_37], %69 {strides = array<i32>} : memref<96x240xf32, #tpu.memory_space<vmem>>, vector<8x240xf32>,
    %71 = vector.extract_strided_slice %26 {offsets = [176, 0], sizes = [8, 240], strides = [1, 1]} : vector<192x240xf32> to vector<8x240xf32>
    %72 = vector.extract_strided_slice %26 {offsets = [184, 0], sizes = [8, 240], strides = [1, 1]} : vector<192x240xf32> to vector<8x240xf32>
    %73 = arith.maximumf %71, %72 : vector<8x240xf32>
    %c88 = arith.constant 88 : index
    %c0_38 = arith.constant 0 : index
    %74 = vector.load %arg15[%c88, %c0_38] : memref<96x240xf32, #tpu.memory_space<vmem>>, vector<8x240xf32>
    tpu.vector_store %arg15[%c88, %c0_38], %73 {strides = array<i32>} : memref<96x240xf32, #tpu.memory_space<vmem>>, vector<8x240xf32>,
    %c0_39 = arith.constant 0 : index
    %c0_40 = arith.constant 0 : index
    %75 = vector.load %arg15[%c0_39, %c0_40] : memref<96x240xf32, #tpu.memory_space<vmem>>, vector<96x240xf32>
    %c0_41 = arith.constant 0 : index
    %c0_42 = arith.constant 0 : index
    %76 = vector.load %arg6[%c0_41, %c0_42] : memref<240x120xf32, #tpu.memory_space<vmem>>, vector<240x120xf32>
    %cst_43 = arith.constant dense<0.000000e+00> : vector<96x120xf32>
    %77 = tpu.matmul %75, %76, %cst_43 {dimension_numbers = #tpu.dot_dimension_numbers<[1], [0], [0], [1], [0, 0, 1, 1], [], []>} : vector<96x240xf32>, vector<240x120xf32>, vector<96x120xf32> -> vector<96x120xf32>
    %c0_44 = arith.constant 0 : index
    %c0_45 = arith.constant 0 : index
    %78 = vector.load %arg7[%c0_44, %c0_45] : memref<240x120xf32, #tpu.memory_space<vmem>>, vector<240x120xf32>
    %cst_46 = arith.constant dense<0.000000e+00> : vector<96x120xf32>
    %79 = tpu.matmul %75, %78, %cst_46 {dimension_numbers = #tpu.dot_dimension_numbers<[1], [0], [0], [1], [0, 0, 1, 1], [], []>} : vector<96x240xf32>, vector<240x120xf32>, vector<96x120xf32> -> vector<96x120xf32>
    %80 = arith.maximumf %77, %79 : vector<96x120xf32>
    %cst_47 = arith.constant 0.000000e+00 : f32
    %81 = vector.broadcast %cst_47 : f32 to vector<96x120xf32>
    %82 = arith.maximumf %80, %81 : vector<96x120xf32>
    %83 = vector.extract_strided_slice %82 {offsets = [0, 0], sizes = [64, 120], strides = [1, 1]} : vector<96x120xf32> to vector<64x120xf32>
    %c0_48 = arith.constant 0 : index
    %c0_49 = arith.constant 0 : index
    %c0_50 = arith.constant 0 : index
    %84 = vector.load %arg4[%c0_48, %c0_49, %c0_50] : memref<5x120x160xf32, #tpu.memory_space<vmem>>, vector<1x120x160xf32>
    %85 = vector.shape_cast %84 : vector<1x120x160xf32> to vector<120x160xf32>
    %cst_51 = arith.constant dense<0.000000e+00> : vector<64x160xf32>
    %86 = tpu.matmul %83, %85, %cst_51 {dimension_numbers = #tpu.dot_dimension_numbers<[1], [0], [0], [1], [0, 0, 1, 1], [], []>} : vector<64x120xf32>, vector<120x160xf32>, vector<64x160xf32> -> vector<64x160xf32>
    %87 = vector.extract_strided_slice %82 {offsets = [8, 0], sizes = [64, 120], strides = [1, 1]} : vector<96x120xf32> to vector<64x120xf32>
    %c1_52 = arith.constant 1 : index
    %c0_53 = arith.constant 0 : index
    %c0_54 = arith.constant 0 : index
    %88 = vector.load %arg4[%c1_52, %c0_53, %c0_54] : memref<5x120x160xf32, #tpu.memory_space<vmem>>, vector<1x120x160xf32>
    %89 = vector.shape_cast %88 : vector<1x120x160xf32> to vector<120x160xf32>
    %cst_55 = arith.constant dense<0.000000e+00> : vector<64x160xf32>
    %90 = tpu.matmul %87, %89, %cst_55 {dimension_numbers = #tpu.dot_dimension_numbers<[1], [0], [0], [1], [0, 0, 1, 1], [], []>} : vector<64x120xf32>, vector<120x160xf32>, vector<64x160xf32> -> vector<64x160xf32>
    %91 = arith.addf %86, %90 : vector<64x160xf32>
    %92 = vector.extract_strided_slice %82 {offsets = [16, 0], sizes = [64, 120], strides = [1, 1]} : vector<96x120xf32> to vector<64x120xf32>
    %c2_56 = arith.constant 2 : index
    %c0_57 = arith.constant 0 : index
    %c0_58 = arith.constant 0 : index
    %93 = vector.load %arg4[%c2_56, %c0_57, %c0_58] : memref<5x120x160xf32, #tpu.memory_space<vmem>>, vector<1x120x160xf32>
    %94 = vector.shape_cast %93 : vector<1x120x160xf32> to vector<120x160xf32>
    %cst_59 = arith.constant dense<0.000000e+00> : vector<64x160xf32>
    %95 = tpu.matmul %92, %94, %cst_59 {dimension_numbers = #tpu.dot_dimension_numbers<[1], [0], [0], [1], [0, 0, 1, 1], [], []>} : vector<64x120xf32>, vector<120x160xf32>, vector<64x160xf32> -> vector<64x160xf32>
    %96 = arith.addf %91, %95 : vector<64x160xf32>
    %97 = vector.extract_strided_slice %82 {offsets = [24, 0], sizes = [64, 120], strides = [1, 1]} : vector<96x120xf32> to vector<64x120xf32>
    %c3_60 = arith.constant 3 : index
    %c0_61 = arith.constant 0 : index
    %c0_62 = arith.constant 0 : index
    %98 = vector.load %arg4[%c3_60, %c0_61, %c0_62] : memref<5x120x160xf32, #tpu.memory_space<vmem>>, vector<1x120x160xf32>
    %99 = vector.shape_cast %98 : vector<1x120x160xf32> to vector<120x160xf32>
    %cst_63 = arith.constant dense<0.000000e+00> : vector<64x160xf32>
    %100 = tpu.matmul %97, %99, %cst_63 {dimension_numbers = #tpu.dot_dimension_numbers<[1], [0], [0], [1], [0, 0, 1, 1], [], []>} : vector<64x120xf32>, vector<120x160xf32>, vector<64x160xf32> -> vector<64x160xf32>
    %101 = arith.addf %96, %100 : vector<64x160xf32>
    %102 = vector.extract_strided_slice %82 {offsets = [32, 0], sizes = [64, 120], strides = [1, 1]} : vector<96x120xf32> to vector<64x120xf32>
    %c4_64 = arith.constant 4 : index
    %c0_65 = arith.constant 0 : index
    %c0_66 = arith.constant 0 : index
    %103 = vector.load %arg4[%c4_64, %c0_65, %c0_66] : memref<5x120x160xf32, #tpu.memory_space<vmem>>, vector<1x120x160xf32>
    %104 = vector.shape_cast %103 : vector<1x120x160xf32> to vector<120x160xf32>
    %cst_67 = arith.constant dense<0.000000e+00> : vector<64x160xf32>
    %105 = tpu.matmul %102, %104, %cst_67 {dimension_numbers = #tpu.dot_dimension_numbers<[1], [0], [0], [1], [0, 0, 1, 1], [], []>} : vector<64x120xf32>, vector<120x160xf32>, vector<64x160xf32> -> vector<64x160xf32>
    %106 = arith.addf %101, %105 : vector<64x160xf32>
    %c0_68 = arith.constant 0 : index
    %c0_69 = arith.constant 0 : index
    %107 = vector.load %arg5[%c0_68, %c0_69] : memref<1x160xf32, #tpu.memory_space<vmem>>, vector<1x160xf32>
    %108 = vector.broadcast %107 : vector<1x160xf32> to vector<64x160xf32>
    %109 = arith.addf %106, %108 : vector<64x160xf32>
    %110 = vector.extract_strided_slice %109 {offsets = [0, 0], sizes = [8, 160], strides = [1, 1]} : vector<64x160xf32> to vector<8x160xf32>
    %111 = vector.extract_strided_slice %109 {offsets = [8, 0], sizes = [8, 160], strides = [1, 1]} : vector<64x160xf32> to vector<8x160xf32>
    %112 = arith.maximumf %110, %111 : vector<8x160xf32>
    %c0_70 = arith.constant 0 : index
    %c0_71 = arith.constant 0 : index
    %113 = vector.load %arg16[%c0_70, %c0_71] : memref<32x160xf32, #tpu.memory_space<vmem>>, vector<8x160xf32>
    tpu.vector_store %arg16[%c0_70, %c0_71], %112 {strides = array<i32>} : memref<32x160xf32, #tpu.memory_space<vmem>>, vector<8x160xf32>,
    %114 = vector.extract_strided_slice %109 {offsets = [16, 0], sizes = [8, 160], strides = [1, 1]} : vector<64x160xf32> to vector<8x160xf32>
    %115 = vector.extract_strided_slice %109 {offsets = [24, 0], sizes = [8, 160], strides = [1, 1]} : vector<64x160xf32> to vector<8x160xf32>
    %116 = arith.maximumf %114, %115 : vector<8x160xf32>
    %c8_72 = arith.constant 8 : index
    %c0_73 = arith.constant 0 : index
    %117 = vector.load %arg16[%c8_72, %c0_73] : memref<32x160xf32, #tpu.memory_space<vmem>>, vector<8x160xf32>
    tpu.vector_store %arg16[%c8_72, %c0_73], %116 {strides = array<i32>} : memref<32x160xf32, #tpu.memory_space<vmem>>, vector<8x160xf32>,
    %118 = vector.extract_strided_slice %109 {offsets = [32, 0], sizes = [8, 160], strides = [1, 1]} : vector<64x160xf32> to vector<8x160xf32>
    %119 = vector.extract_strided_slice %109 {offsets = [40, 0], sizes = [8, 160], strides = [1, 1]} : vector<64x160xf32> to vector<8x160xf32>
    %120 = arith.maximumf %118, %119 : vector<8x160xf32>
    %c16_74 = arith.constant 16 : index
    %c0_75 = arith.constant 0 : index
    %121 = vector.load %arg16[%c16_74, %c0_75] : memref<32x160xf32, #tpu.memory_space<vmem>>, vector<8x160xf32>
    tpu.vector_store %arg16[%c16_74, %c0_75], %120 {strides = array<i32>} : memref<32x160xf32, #tpu.memory_space<vmem>>, vector<8x160xf32>,
    %122 = vector.extract_strided_slice %109 {offsets = [48, 0], sizes = [8, 160], strides = [1, 1]} : vector<64x160xf32> to vector<8x160xf32>
    %123 = vector.extract_strided_slice %109 {offsets = [56, 0], sizes = [8, 160], strides = [1, 1]} : vector<64x160xf32> to vector<8x160xf32>
    %124 = arith.maximumf %122, %123 : vector<8x160xf32>
    %c24_76 = arith.constant 24 : index
    %c0_77 = arith.constant 0 : index
    %125 = vector.load %arg16[%c24_76, %c0_77] : memref<32x160xf32, #tpu.memory_space<vmem>>, vector<8x160xf32>
    tpu.vector_store %arg16[%c24_76, %c0_77], %124 {strides = array<i32>} : memref<32x160xf32, #tpu.memory_space<vmem>>, vector<8x160xf32>,
    %c0_78 = arith.constant 0 : index
    %c0_79 = arith.constant 0 : index
    %126 = vector.load %arg16[%c0_78, %c0_79] : memref<32x160xf32, #tpu.memory_space<vmem>>, vector<32x160xf32>
    %c0_80 = arith.constant 0 : index
    %c0_81 = arith.constant 0 : index
    %127 = vector.load %arg8[%c0_80, %c0_81] : memref<160x80xf32, #tpu.memory_space<vmem>>, vector<160x80xf32>
    %cst_82 = arith.constant dense<0.000000e+00> : vector<32x80xf32>
    %128 = tpu.matmul %126, %127, %cst_82 {dimension_numbers = #tpu.dot_dimension_numbers<[1], [0], [0], [1], [0, 0, 1, 1], [], []>} : vector<32x160xf32>, vector<160x80xf32>, vector<32x80xf32> -> vector<32x80xf32>
    %c0_83 = arith.constant 0 : index
    %c0_84 = arith.constant 0 : index
    %129 = vector.load %arg9[%c0_83, %c0_84] : memref<160x80xf32, #tpu.memory_space<vmem>>, vector<160x80xf32>
    %cst_85 = arith.constant dense<0.000000e+00> : vector<32x80xf32>
    %130 = tpu.matmul %126, %129, %cst_85 {dimension_numbers = #tpu.dot_dimension_numbers<[1], [0], [0], [1], [0, 0, 1, 1], [], []>} : vector<32x160xf32>, vector<160x80xf32>, vector<32x80xf32> -> vector<32x80xf32>
    %131 = arith.maximumf %128, %130 : vector<32x80xf32>
    %cst_86 = arith.constant 0.000000e+00 : f32
    %132 = vector.broadcast %cst_86 : f32 to vector<32x80xf32>
    %133 = arith.maximumf %131, %132 : vector<32x80xf32>
    %134 = vector.extract_strided_slice %133 {offsets = [0, 0], sizes = [8, 80], strides = [1, 1]} : vector<32x80xf32> to vector<8x80xf32>
    %c0_87 = arith.constant 0 : index
    %c0_88 = arith.constant 0 : index
    %c0_89 = arith.constant 0 : index
    %135 = vector.load %arg10[%c0_87, %c0_88, %c0_89] : memref<4x80x50xf32, #tpu.memory_space<vmem>>, vector<1x80x50xf32>
    %136 = vector.shape_cast %135 : vector<1x80x50xf32> to vector<80x50xf32>
    %cst_90 = arith.constant dense<0.000000e+00> : vector<8x50xf32>
    %137 = tpu.matmul %134, %136, %cst_90 {dimension_numbers = #tpu.dot_dimension_numbers<[1], [0], [0], [1], [0, 0, 1, 1], [], []>} : vector<8x80xf32>, vector<80x50xf32>, vector<8x50xf32> -> vector<8x50xf32>
    %138 = vector.extract_strided_slice %133 {offsets = [8, 0], sizes = [8, 80], strides = [1, 1]} : vector<32x80xf32> to vector<8x80xf32>
    %c1_91 = arith.constant 1 : index
    %c0_92 = arith.constant 0 : index
    %c0_93 = arith.constant 0 : index
    %139 = vector.load %arg10[%c1_91, %c0_92, %c0_93] : memref<4x80x50xf32, #tpu.memory_space<vmem>>, vector<1x80x50xf32>
    %140 = vector.shape_cast %139 : vector<1x80x50xf32> to vector<80x50xf32>
    %cst_94 = arith.constant dense<0.000000e+00> : vector<8x50xf32>
    %141 = tpu.matmul %138, %140, %cst_94 {dimension_numbers = #tpu.dot_dimension_numbers<[1], [0], [0], [1], [0, 0, 1, 1], [], []>} : vector<8x80xf32>, vector<80x50xf32>, vector<8x50xf32> -> vector<8x50xf32>
    %142 = arith.addf %137, %141 : vector<8x50xf32>
    %143 = vector.extract_strided_slice %133 {offsets = [16, 0], sizes = [8, 80], strides = [1, 1]} : vector<32x80xf32> to vector<8x80xf32>
    %c2_95 = arith.constant 2 : index
    %c0_96 = arith.constant 0 : index
    %c0_97 = arith.constant 0 : index
    %144 = vector.load %arg10[%c2_95, %c0_96, %c0_97] : memref<4x80x50xf32, #tpu.memory_space<vmem>>, vector<1x80x50xf32>
    %145 = vector.shape_cast %144 : vector<1x80x50xf32> to vector<80x50xf32>
    %cst_98 = arith.constant dense<0.000000e+00> : vector<8x50xf32>
    %146 = tpu.matmul %143, %145, %cst_98 {dimension_numbers = #tpu.dot_dimension_numbers<[1], [0], [0], [1], [0, 0, 1, 1], [], []>} : vector<8x80xf32>, vector<80x50xf32>, vector<8x50xf32> -> vector<8x50xf32>
    %147 = arith.addf %142, %146 : vector<8x50xf32>
    %148 = vector.extract_strided_slice %133 {offsets = [24, 0], sizes = [8, 80], strides = [1, 1]} : vector<32x80xf32> to vector<8x80xf32>
    %c3_99 = arith.constant 3 : index
    %c0_100 = arith.constant 0 : index
    %c0_101 = arith.constant 0 : index
    %149 = vector.load %arg10[%c3_99, %c0_100, %c0_101] : memref<4x80x50xf32, #tpu.memory_space<vmem>>, vector<1x80x50xf32>
    %150 = vector.shape_cast %149 : vector<1x80x50xf32> to vector<80x50xf32>
    %cst_102 = arith.constant dense<0.000000e+00> : vector<8x50xf32>
    %151 = tpu.matmul %148, %150, %cst_102 {dimension_numbers = #tpu.dot_dimension_numbers<[1], [0], [0], [1], [0, 0, 1, 1], [], []>} : vector<8x80xf32>, vector<80x50xf32>, vector<8x50xf32> -> vector<8x50xf32>
    %152 = arith.addf %147, %151 : vector<8x50xf32>
    %c0_103 = arith.constant 0 : index
    %c0_104 = arith.constant 0 : index
    %153 = vector.load %arg11[%c0_103, %c0_104] : memref<1x50xf32, #tpu.memory_space<vmem>>, vector<1x50xf32>
    %154 = vector.broadcast %153 : vector<1x50xf32> to vector<8x50xf32>
    %155 = arith.addf %152, %154 : vector<8x50xf32>
    %cst_105 = arith.constant 0.000000e+00 : f32
    %156 = vector.broadcast %cst_105 : f32 to vector<8x50xf32>
    %157 = arith.maximumf %155, %156 : vector<8x50xf32>
    %c0_106 = arith.constant 0 : index
    %c0_107 = arith.constant 0 : index
    %158 = vector.load %arg12[%c0_106, %c0_107] : memref<50x10xf32, #tpu.memory_space<vmem>>, vector<50x10xf32>
    %cst_108 = arith.constant dense<0.000000e+00> : vector<8x10xf32>
    %159 = tpu.matmul %157, %158, %cst_108 {dimension_numbers = #tpu.dot_dimension_numbers<[1], [0], [0], [1], [0, 0, 1, 1], [], []>} : vector<8x50xf32>, vector<50x10xf32>, vector<8x10xf32> -> vector<8x10xf32>
    %c0_109 = arith.constant 0 : index
    %c0_110 = arith.constant 0 : index
    %160 = vector.load %arg13[%c0_109, %c0_110] : memref<1x10xf32, #tpu.memory_space<vmem>>, vector<1x10xf32>
    %161 = vector.broadcast %160 : vector<1x10xf32> to vector<8x10xf32>
    %162 = arith.addf %159, %161 : vector<8x10xf32>
    %cst_111 = arith.constant dense<0xFF800000> : vector<8xf32>
    %163 = vector.multi_reduction <maximumf>, %162, %cst_111 [1] : vector<8x10xf32> to vector<8xf32>
    %164 = vector.shape_cast %163 : vector<8xf32> to vector<8x1xf32>
    %165 = vector.broadcast %164 : vector<8x1xf32> to vector<8x10xf32>
    %166 = arith.subf %162, %165 : vector<8x10xf32>
    %167 = math.exp %166 : vector<8x10xf32>
    %cst_112 = arith.constant dense<0.000000e+00> : vector<8xf32>
    %168 = vector.multi_reduction <add>, %167, %cst_112 [1] : vector<8x10xf32> to vector<8xf32>
    %169 = vector.shape_cast %168 : vector<8xf32> to vector<8x1xf32>
    %170 = math.log %169 : vector<8x1xf32>
    %171 = vector.broadcast %170 : vector<8x1xf32> to vector<8x10xf32>
    %172 = arith.subf %166, %171 : vector<8x10xf32>
    %c0_113 = arith.constant 0 : index
    %c0_114 = arith.constant 0 : index
    %173 = vector.load %arg14[%c0_113, %c0_114] : memref<8x10xf32, #tpu.memory_space<vmem>>, vector<8x10xf32>
    tpu.vector_store %arg14[%c0_113, %c0_114], %172 {strides = array<i32>} : memref<8x10xf32, #tpu.memory_space<vmem>>, vector<8x10xf32>,
    return
  }
  func.func @transform_0(%arg0: i32) -> (i32, i32) {
    %c0_i32 = arith.constant 0 : i32
    %c0_i32_0 = arith.constant 0 : i32
    return %arg0, %c0_i32 : i32, i32
  }
  func.func @transform_1(%arg0: i32) -> (i32, i32, i32) {
    %c0_i32 = arith.constant 0 : i32
    %c0_i32_0 = arith.constant 0 : i32
    %c0_i32_1 = arith.constant 0 : i32
    %c0_i32_2 = arith.constant 0 : i32
    return %c0_i32, %c0_i32_0, %c0_i32_1 : i32, i32, i32
  }
  func.func @transform_2(%arg0: i32) -> (i32, i32) {
    %c0_i32 = arith.constant 0 : i32
    %c0_i32_0 = arith.constant 0 : i32
    %c0_i32_1 = arith.constant 0 : i32
    return %c0_i32, %c0_i32_0 : i32, i32
  }
  func.func @transform_3(%arg0: i32) -> (i32, i32, i32) {
    %c0_i32 = arith.constant 0 : i32
    %c0_i32_0 = arith.constant 0 : i32
    %c0_i32_1 = arith.constant 0 : i32
    %c0_i32_2 = arith.constant 0 : i32
    return %c0_i32, %c0_i32_0, %c0_i32_1 : i32, i32, i32
  }
  func.func @transform_4(%arg0: i32) -> (i32, i32) {
    %c0_i32 = arith.constant 0 : i32
    %c0_i32_0 = arith.constant 0 : i32
    %c0_i32_1 = arith.constant 0 : i32
    return %c0_i32, %c0_i32_0 : i32, i32
  }
  func.func @transform_5(%arg0: i32) -> (i32, i32) {
    %c0_i32 = arith.constant 0 : i32
    %c0_i32_0 = arith.constant 0 : i32
    %c0_i32_1 = arith.constant 0 : i32
    return %c0_i32, %c0_i32_0 : i32, i32
  }
  func.func @transform_6(%arg0: i32) -> (i32, i32) {
    %c0_i32 = arith.constant 0 : i32
    %c0_i32_0 = arith.constant 0 : i32
    %c0_i32_1 = arith.constant 0 : i32
    return %c0_i32, %c0_i32_0 : i32, i32
  }
  func.func @transform_7(%arg0: i32) -> (i32, i32) {
    %c0_i32 = arith.constant 0 : i32
    %c0_i32_0 = arith.constant 0 : i32
    %c0_i32_1 = arith.constant 0 : i32
    return %c0_i32, %c0_i32_0 : i32, i32
  }
  func.func @transform_8(%arg0: i32) -> (i32, i32) {
    %c0_i32 = arith.constant 0 : i32
    %c0_i32_0 = arith.constant 0 : i32
    %c0_i32_1 = arith.constant 0 : i32
    return %c0_i32, %c0_i32_0 : i32, i32
  }
  func.func @transform_9(%arg0: i32) -> (i32, i32, i32) {
    %c0_i32 = arith.constant 0 : i32
    %c0_i32_0 = arith.constant 0 : i32
    %c0_i32_1 = arith.constant 0 : i32
    %c0_i32_2 = arith.constant 0 : i32
    return %c0_i32, %c0_i32_0, %c0_i32_1 : i32, i32, i32
  }
  func.func @transform_10(%arg0: i32) -> (i32, i32) {
    %c0_i32 = arith.constant 0 : i32
    %c0_i32_0 = arith.constant 0 : i32
    %c0_i32_1 = arith.constant 0 : i32
    return %c0_i32, %c0_i32_0 : i32, i32
  }
  func.func @transform_11(%arg0: i32) -> (i32, i32) {
    %c0_i32 = arith.constant 0 : i32
    %c0_i32_0 = arith.constant 0 : i32
    %c0_i32_1 = arith.constant 0 : i32
    return %c0_i32, %c0_i32_0 : i32, i32
  }
  func.func @transform_12(%arg0: i32) -> (i32, i32) {
    %c0_i32 = arith.constant 0 : i32
    %c0_i32_0 = arith.constant 0 : i32
    %c0_i32_1 = arith.constant 0 : i32
    return %c0_i32, %c0_i32_0 : i32, i32
  }
  func.func @transform_13(%arg0: i32) -> (i32, i32) {
    %c0_i32 = arith.constant 0 : i32
    %c0_i32_0 = arith.constant 0 : i32
    return %arg0, %c0_i32 : i32, i32
  }
}

</mosaic_0001>

<llo_original>
// kernel: net_forward.1
$region0: #{net_forward.1}
  #allocation0 [shape = 'u32[]', space=smem, size = 0x4, offset = 0x4, fixed_abs, tag = 'smem constant byte address 0x4 - core index']
  #allocation1 [shape = 'u32[144,128]{1,0:T(1,128)}', space=vmem, size = 0x12000, scoped, tag = 'internal scratch']
  #allocation2 [shape = 'f32[96,240]{1,0:T(8,128)}', space=vmem, size = 0x18000, scoped, tag = 'scratch operand']
  #allocation3 [shape = 'f32[32,160]{1,0:T(8,128)}', space=vmem, size = 0x8000, scoped, tag = 'scratch operand']
  %s0 = inlined_call_operand.vmem [shape: f32[224,28], index: 0, kind: input, shape index: {}]
  %s1 = inlined_call_operand.vmem [shape: f32[5,28,240], index: 1, kind: input, shape index: {}]
  %s2 = inlined_call_operand.vmem [shape: f32[1,240], index: 2, kind: input, shape index: {}]
  %s3 = inlined_call_operand.vmem [shape: f32[5,120,160], index: 3, kind: input, shape index: {}]
  %s4 = inlined_call_operand.vmem [shape: f32[1,160], index: 4, kind: input, shape index: {}]
  %s5 = inlined_call_operand.vmem [shape: f32[240,120], index: 5, kind: input, shape index: {}]
  %s6 = inlined_call_operand.vmem [shape: f32[240,120], index: 6, kind: input, shape index: {}]
  %s7 = inlined_call_operand.vmem [shape: f32[160,80], index: 7, kind: input, shape index: {}]
  %s8 = inlined_call_operand.vmem [shape: f32[160,80], index: 8, kind: input, shape index: {}]
  %s9 = inlined_call_operand.vmem [shape: f32[4,80,50], index: 9, kind: input, shape index: {}]
  %s10 = inlined_call_operand.vmem [shape: f32[1,50], index: 10, kind: input, shape index: {}]
  %s11 = inlined_call_operand.vmem [shape: f32[50,10], index: 11, kind: input, shape index: {}]
  %s12 = inlined_call_operand.vmem [shape: f32[1,10], index: 12, kind: input, shape index: {}]
  %s13 = inlined_call_operand.vmem [shape: f32[8,10], index: 13, kind: output, shape index: {}]
  %s14 = sld [smem:[#allocation0]]
  $region62: #{net_forward.1} parent=0
    _
  %s16 = ssub.s32 1, %s14
  %s17 = scalar_select 0, %s16, %s14
  // Predicated region
  $region2: #{net_forward.1} parent=0 // pred_check
    _
  $region3: #{net_forward.1} parent=0 // pred_check_branch
    %19 = sbr.rel (0) target = $region5
  $region4: #{net_forward.1} parent=0 // pred_region
    _
  $region5: #{net_forward.1} parent=0 // pred_fallthru
    _
  // Predicated region
  $region6: #{net_forward.1} parent=0 // pred_check
    _
  $region7: #{net_forward.1} parent=0 // pred_check_branch
    %21 = sbr.rel (0) target = $region9
  $region8: #{net_forward.1} parent=0 // pred_region
    _
  $region9: #{net_forward.1} parent=0 // pred_fallthru
    _
  // Predicated region
  $region10: #{net_forward.1} parent=0 // pred_check
    _
  $region11: #{net_forward.1} parent=0 // pred_check_branch
    %23 = sbr.rel (0) target = $region13
  $region12: #{net_forward.1} parent=0 // pred_region
    _
  $region13: #{net_forward.1} parent=0 // pred_fallthru
    _
  // Predicated region
  $region14: #{net_forward.1} parent=0 // pred_check
    _
  $region15: #{net_forward.1} parent=0 // pred_check_branch
    %25 = sbr.rel (0) target = $region17
  $region16: #{net_forward.1} parent=0 // pred_region
    _
  $region17: #{net_forward.1} parent=0 // pred_fallthru
    _
  // Predicated region
  $region18: #{net_forward.1} parent=0 // pred_check
    _
  $region19: #{net_forward.1} parent=0 // pred_check_branch
    %27 = sbr.rel (0) target = $region21
  $region20: #{net_forward.1} parent=0 // pred_region
    _
  $region21: #{net_forward.1} parent=0 // pred_fallthru
    _
  // Predicated region
  $region22: #{net_forward.1} parent=0 // pred_check
    _
  $region23: #{net_forward.1} parent=0 // pred_check_branch
    %29 = sbr.rel (0) target = $region25
  $region24: #{net_forward.1} parent=0 // pred_region
    _
  $region25: #{net_forward.1} parent=0 // pred_fallthru
    _
  // Predicated region
  $region26: #{net_forward.1} parent=0 // pred_check
    _
  $region27: #{net_forward.1} parent=0 // pred_check_branch
    %31 = sbr.rel (0) target = $region29
  $region28: #{net_forward.1} parent=0 // pred_region
    _
  $region29: #{net_forward.1} parent=0 // pred_fallthru
    _
  // Predicated region
  $region30: #{net_forward.1} parent=0 // pred_check
    _
  $region31: #{net_forward.1} parent=0 // pred_check_branch
    %33 = sbr.rel (0) target = $region33
  $region32: #{net_forward.1} parent=0 // pred_region
    _
  $region33: #{net_forward.1} parent=0 // pred_fallthru
    _
  // Predicated region
  $region34: #{net_forward.1} parent=0 // pred_check
    _
  $region35: #{net_forward.1} parent=0 // pred_check_branch
    %35 = sbr.rel (0) target = $region37
  $region36: #{net_forward.1} parent=0 // pred_region
    _
  $region37: #{net_forward.1} parent=0 // pred_fallthru
    _
  // Predicated region
  $region38: #{net_forward.1} parent=0 // pred_check
    _
  $region39: #{net_forward.1} parent=0 // pred_check_branch
    %37 = sbr.rel (0) target = $region41
  $region40: #{net_forward.1} parent=0 // pred_region
    _
  $region41: #{net_forward.1} parent=0 // pred_fallthru
    _
  // Predicated region
  $region42: #{net_forward.1} parent=0 // pred_check
    _
  $region43: #{net_forward.1} parent=0 // pred_check_branch
    %39 = sbr.rel (0) target = $region45
  $region44: #{net_forward.1} parent=0 // pred_region
    _
  $region45: #{net_forward.1} parent=0 // pred_fallthru
    _
  // Predicated region
  $region46: #{net_forward.1} parent=0 // pred_check
    _
  $region47: #{net_forward.1} parent=0 // pred_check_branch
    %41 = sbr.rel (0) target = $region49
  $region48: #{net_forward.1} parent=0 // pred_region
    _
  $region49: #{net_forward.1} parent=0 // pred_fallthru
    _
  // Predicated region
  $region50: #{net_forward.1} parent=0 // pred_check
    _
  $region51: #{net_forward.1} parent=0 // pred_check_branch
    %43 = sbr.rel (0) target = $region53
  $region52: #{net_forward.1} parent=0 // pred_region
    _
  $region53: #{net_forward.1} parent=0 // pred_fallthru
    _
  %v44 = vld [vmem:[%s0] sm:$0xff]
  %v45 = vld [vmem:[%s0 + $0x8] sm:$0xff]
  %v46 = vld [vmem:[%s0 + $0x10] sm:$0xff]
  %v47 = vld [vmem:[%s0 + $0x18] sm:$0xff]
  %v48 = vld [vmem:[%s0 + $0x20] sm:$0xff]
  %v49 = vld [vmem:[%s0 + $0x28] sm:$0xff]
  %v50 = vld [vmem:[%s0 + $0x30] sm:$0xff]
  %v51 = vld [vmem:[%s0 + $0x38] sm:$0xff]
  %v52 = vld [vmem:[%s0 + $0x40] sm:$0xff]
  %v53 = vld [vmem:[%s0 + $0x48] sm:$0xff]
  %v54 = vld [vmem:[%s0 + $0x50] sm:$0xff]
  %v55 = vld [vmem:[%s0 + $0x58] sm:$0xff]
  %v56 = vld [vmem:[%s0 + $0x60] sm:$0xff]
  %v57 = vld [vmem:[%s0 + $0x68] sm:$0xff]
  %v58 = vld [vmem:[%s0 + $0x70] sm:$0xff]
  %v59 = vld [vmem:[%s0 + $0x78] sm:$0xff]
  %v60 = vld [vmem:[%s0 + $0x80] sm:$0xff]
  %v61 = vld [vmem:[%s0 + $0x88] sm:$0xff]
  %v62 = vld [vmem:[%s0 + $0x90] sm:$0xff]
  %v63 = vld [vmem:[%s0 + $0x98] sm:$0xff]
  %v64 = vld [vmem:[%s0 + $0xa0] sm:$0xff]
  %v65 = vld [vmem:[%s0 + $0xa8] sm:$0xff]
  %v66 = vld [vmem:[%s0 + $0xb0] sm:$0xff]
  %v67 = vld [vmem:[%s0 + $0xb8] sm:$0xff]
  %v68 = vld [vmem:[%s1] sm:$0xff]
  %v69 = vld [vmem:[%s1 + $0x8] sm:$0xff]
  %v70 = vld [vmem:[%s1 + $0x10] sm:$0xff]
  %v71 = vld [vmem:[%s1 + $0x18] sm:$0xff]
  %v72 = vld [vmem:[%s1 + $0x20] sm:$0xff]
  %v73 = vld [vmem:[%s1 + $0x28] sm:$0xff]
  %v74 = vld [vmem:[%s1 + $0x30] sm:$0xf]
  %v75 = vld [vmem:[%s1 + $0x38] sm:$0xf]
  %v76 = vld [vmem:[%s0 + $0xc0] sm:$0xff]
  %s77 = scalar_lea.vmem %s1, 64
  %v78 = vld [vmem:[%s77] sm:$0xff]
  %v79 = vld [vmem:[%s77 + $0x8] sm:$0xff]
  %v80 = vld [vmem:[%s77 + $0x10] sm:$0xff]
  %v81 = vld [vmem:[%s77 + $0x18] sm:$0xff]
  %v82 = vld [vmem:[%s77 + $0x20] sm:$0xff]
  %v83 = vld [vmem:[%s77 + $0x28] sm:$0xff]
  %v84 = vld [vmem:[%s77 + $0x30] sm:$0xf]
  %v85 = vld [vmem:[%s77 + $0x38] sm:$0xf]
  %vm86 = vcmask 228352
  %v88 = vsel %vm86, %v45, 0
  %v91 = vsel %vm86, %v46, 0
  %v94 = vsel %vm86, %v47, 0
  %v97 = vsel %vm86, %v48, 0
  %v100 = vsel %vm86, %v49, 0
  %v103 = vsel %vm86, %v50, 0
  %v106 = vsel %vm86, %v51, 0
  %v109 = vsel %vm86, %v52, 0
  %v112 = vsel %vm86, %v53, 0
  %v115 = vsel %vm86, %v54, 0
  %v118 = vsel %vm86, %v55, 0
  %v121 = vsel %vm86, %v56, 0
  %v124 = vsel %vm86, %v57, 0
  %v127 = vsel %vm86, %v58, 0
  %v130 = vsel %vm86, %v59, 0
  %v133 = vsel %vm86, %v60, 0
  %v136 = vsel %vm86, %v61, 0
  %v139 = vsel %vm86, %v62, 0
  %v142 = vsel %vm86, %v63, 0
  %v145 = vsel %vm86, %v64, 0
  %v148 = vsel %vm86, %v65, 0
  %v151 = vsel %vm86, %v66, 0
  %v154 = vsel %vm86, %v67, 0
  %v157 = vsel %vm86, %v76, 0
  %vm159 = vcmask 1043456
  %v161 = vsel %vm159, %v84, 0
  %v164 = vsel %vm159, %v85, 0
  %166 = vmatprep.subr.mxu0 0.0
  %167 = vmatpush1.msra.mxu0 0.0
  %168 = vmatprep.subr.mxu0 0.0
  %169 = vmatpush1.msra.mxu0 0.0
  %170 = vmatprep.subr.mxu0 0.0
  %171 = vmatpush1.msra.mxu0 0.0
  %172 = vmatprep.subr.mxu0 0.0
  %173 = vmatpush1.msra.mxu0 0.0
  %174 = vmatprep.subr.mxu0 0.0
  %175 = vmatpush1.msra.mxu0 0.0
  %176 = vmatprep.subr.mxu0 0.0
  %177 = vmatpush1.msra.mxu0 0.0
  %178 = vmatprep.subr.mxu0 0.0
  %179 = vmatpush1.msra.mxu0 0.0
  %180 = vmatprep.subr.mxu0 0.0
  %181 = vmatpush1.msra.mxu0 0.0
  %182 = vmatprep.subr.mxu0 0.0
  %183 = vmatpush1.msra.mxu0 0.0
  %184 = vmatprep.subr.mxu0 0.0
  %185 = vmatpush1.msra.mxu0 0.0
  %186 = vmatprep.subr.mxu0 0.0
  %187 = vmatpush1.msra.mxu0 0.0
  %188 = vmatprep.subr.mxu0 0.0
  %189 = vmatpush1.msra.mxu0 0.0
  %190 = vmatprep.subr.mxu0 %v164
  %191 = vmatpush1.msra.mxu0 %v161
  %192 = vmatprep.subr.mxu0 %v83
  %193 = vmatpush1.msra.mxu0 %v82
  %194 = vmatprep.subr.mxu0 %v81
  %195 = vmatpush1.msra.mxu0 %v80
  %196 = vmatprep.subr.mxu0 %v79
  %197 = vmatpush1.msra.mxu0 %v78
  %198 = vmatprep.subr.mxu0 0.0
  %199 = vmatpush2.msra.mxu0 0.0
  %200 = vmatprep.subr.mxu0 0.0
  %201 = vmatpush2.msra.mxu0 0.0
  %202 = vmatprep.subr.mxu0 0.0
  %203 = vmatpush2.msra.mxu0 0.0
  %204 = vmatprep.subr.mxu0 0.0
  %205 = vmatpush2.msra.mxu0 0.0
  %206 = vmatprep.subr.mxu0 0.0
  %207 = vmatpush2.msra.mxu0 0.0
  %208 = vmatprep.subr.mxu0 0.0
  %209 = vmatpush2.msra.mxu0 0.0
  %210 = vmatprep.subr.mxu0 0.0
  %211 = vmatpush2.msra.mxu0 0.0
  %212 = vmatprep.subr.mxu0 0.0
  %213 = vmatpush2.msra.mxu0 0.0
  %214 = vmatprep.subr.mxu0 0.0
  %215 = vmatpush2.msra.mxu0 0.0
  %216 = vmatprep.subr.mxu0 0.0
  %217 = vmatpush2.msra.mxu0 0.0
  %218 = vmatprep.subr.mxu0 0.0
  %219 = vmatpush2.msra.mxu0 0.0
  %220 = vmatprep.subr.mxu0 0.0
  %221 = vmatpush2.msra.mxu0 0.0
  %222 = vmatprep.subr.mxu0 0.0
  %223 = vmatpush2.msra.mxu0 0.0
  %224 = vmatprep.subr.mxu0 0.0
  %225 = vmatpush2.msra.mxu0 0.0
  %226 = vmatprep.subr.mxu0 0.0
  %227 = vmatpush2.msra.mxu0 0.0
  %228 = vmatprep.subr.mxu0 0.0
  %229 = vmatpush2.msra.mxu0 0.0
  %230 = vmatprep.mubr.f32.mxu0 0.0
  %231 = vmatmul.mubr.f32.gmra.mxu0 %v88
  %v232 = vpop.f32.mrf.mxu0
  %v233 = vadd.f32 0.0, %v232
  %v234 = vpop.f32.mrf.mxu0
  %v235 = vadd.f32 0.0, %v234
  %236 = vmatprep.mubr.f32.mxu0 0.0
  %237 = vmatmul.mubr.f32.gmra.mxu0 %v91
  %v238 = vpop.f32.mrf.mxu0
  %v239 = vadd.f32 0.0, %v238
  %v240 = vpop.f32.mrf.mxu0
  %v241 = vadd.f32 0.0, %v240
  %242 = vmatprep.mubr.f32.mxu0 0.0
  %243 = vmatmul.mubr.f32.gmra.mxu0 %v94
  %v244 = vpop.f32.mrf.mxu0
  %v245 = vadd.f32 0.0, %v244
  %v246 = vpop.f32.mrf.mxu0
  %v247 = vadd.f32 0.0, %v246
  %248 = vmatprep.mubr.f32.mxu0 0.0
  %249 = vmatmul.mubr.f32.gmra.mxu0 %v97
  %v250 = vpop.f32.mrf.mxu0
  %v251 = vadd.f32 0.0, %v250
  %v252 = vpop.f32.mrf.mxu0
  %v253 = vadd.f32 0.0, %v252
  %254 = vmatprep.mubr.f32.mxu0 0.0
  %255 = vmatmul.mubr.f32.gmra.mxu0 %v100
  %v256 = vpop.f32.mrf.mxu0
  %v257 = vadd.f32 0.0, %v256
  %v258 = vpop.f32.mrf.mxu0
  %v259 = vadd.f32 0.0, %v258
  %260 = vmatprep.mubr.f32.mxu0 0.0
  %261 = vmatmul.mubr.f32.gmra.mxu0 %v103
  %v262 = vpop.f32.mrf.mxu0
  %v263 = vadd.f32 0.0, %v262
  %v264 = vpop.f32.mrf.mxu0
  %v265 = vadd.f32 0.0, %v264
  %266 = vmatprep.mubr.f32.mxu0 0.0
  %267 = vmatmul.mubr.f32.gmra.mxu0 %v106
  %v268 = vpop.f32.mrf.mxu0
  %v269 = vadd.f32 0.0, %v268
  %v270 = vpop.f32.mrf.mxu0
  %v271 = vadd.f32 0.0, %v270
  %272 = vmatprep.mubr.f32.mxu0 0.0
  %273 = vmatmul.mubr.f32.gmra.mxu0 %v109
  %v274 = vpop.f32.mrf.mxu0
  %v275 = vadd.f32 0.0, %v274
  %v276 = vpop.f32.mrf.mxu0
  %v277 = vadd.f32 0.0, %v276
  %278 = vmatprep.mubr.f32.mxu0 0.0
  %279 = vmatmul.mubr.f32.gmra.mxu0 %v112
  %v280 = vpop.f32.mrf.mxu0
  %v281 = vadd.f32 0.0, %v280
  %v282 = vpop.f32.mrf.mxu0
  %v283 = vadd.f32 0.0, %v282
  %284 = vmatprep.mubr.f32.mxu0 0.0
  %285 = vmatmul.mubr.f32.gmra.mxu0 %v115
  %v286 = vpop.f32.mrf.mxu0
  %v287 = vadd.f32 0.0, %v286
  %v288 = vpop.f32.mrf.mxu0
  %v289 = vadd.f32 0.0, %v288
  %290 = vmatprep.mubr.f32.mxu0 0.0
  %291 = vmatmul.mubr.f32.gmra.mxu0 %v118
  %v292 = vpop.f32.mrf.mxu0
  %v293 = vadd.f32 0.0, %v292
  %v294 = vpop.f32.mrf.mxu0
  %v295 = vadd.f32 0.0, %v294
  %296 = vmatprep.mubr.f32.mxu0 0.0
  %297 = vmatmul.mubr.f32.gmra.mxu0 %v121
  %v298 = vpop.f32.mrf.mxu0
  %v299 = vadd.f32 0.0, %v298
  %v300 = vpop.f32.mrf.mxu0
  %v301 = vadd.f32 0.0, %v300
  %302 = vmatprep.mubr.f32.mxu0 0.0
  %303 = vmatmul.mubr.f32.gmra.mxu0 %v124
  %v304 = vpop.f32.mrf.mxu0
  %v305 = vadd.f32 0.0, %v304
  %v306 = vpop.f32.mrf.mxu0
  %v307 = vadd.f32 0.0, %v306
  %308 = vmatprep.mubr.f32.mxu0 0.0
  %309 = vmatmul.mubr.f32.gmra.mxu0 %v127
  %v310 = vpop.f32.mrf.mxu0
  %v311 = vadd.f32 0.0, %v310
  %v312 = vpop.f32.mrf.mxu0
  %v313 = vadd.f32 0.0, %v312
  %314 = vmatprep.mubr.f32.mxu0 0.0
  %315 = vmatmul.mubr.f32.gmra.mxu0 %v130
  %v316 = vpop.f32.mrf.mxu0
  %v317 = vadd.f32 0.0, %v316
  %v318 = vpop.f32.mrf.mxu0
  %v319 = vadd.f32 0.0, %v318
  %320 = vmatprep.mubr.f32.mxu0 0.0
  %321 = vmatmul.mubr.f32.gmra.mxu0 %v133
  %v322 = vpop.f32.mrf.mxu0
  %v323 = vadd.f32 0.0, %v322
  %v324 = vpop.f32.mrf.mxu0
  %v325 = vadd.f32 0.0, %v324
  %326 = vmatprep.mubr.f32.mxu0 0.0
  %327 = vmatmul.mubr.f32.gmra.mxu0 %v136
  %v328 = vpop.f32.mrf.mxu0
  %v329 = vadd.f32 0.0, %v328
  %v330 = vpop.f32.mrf.mxu0
  %v331 = vadd.f32 0.0, %v330
  %332 = vmatprep.mubr.f32.mxu0 0.0
  %333 = vmatmul.mubr.f32.gmra.mxu0 %v139
  %v334 = vpop.f32.mrf.mxu0
  %v335 = vadd.f32 0.0, %v334
  %v336 = vpop.f32.mrf.mxu0
  %v337 = vadd.f32 0.0, %v336
  %338 = vmatprep.mubr.f32.mxu0 0.0
  %339 = vmatmul.mubr.f32.gmra.mxu0 %v142
  %v340 = vpop.f32.mrf.mxu0
  %v341 = vadd.f32 0.0, %v340
  %v342 = vpop.f32.mrf.mxu0
  %v343 = vadd.f32 0.0, %v342
  %344 = vmatprep.mubr.f32.mxu0 0.0
  %345 = vmatmul.mubr.f32.gmra.mxu0 %v145
  %v346 = vpop.f32.mrf.mxu0
  %v347 = vadd.f32 0.0, %v346
  %v348 = vpop.f32.mrf.mxu0
  %v349 = vadd.f32 0.0, %v348
  %350 = vmatprep.mubr.f32.mxu0 0.0
  %351 = vmatmul.mubr.f32.gmra.mxu0 %v148
  %v352 = vpop.f32.mrf.mxu0
  %v353 = vadd.f32 0.0, %v352
  %v354 = vpop.f32.mrf.mxu0
  %v355 = vadd.f32 0.0, %v354
  %356 = vmatprep.mubr.f32.mxu0 0.0
  %357 = vmatmul.mubr.f32.gmra.mxu0 %v151
  %v358 = vpop.f32.mrf.mxu0
  %v359 = vadd.f32 0.0, %v358
  %v360 = vpop.f32.mrf.mxu0
  %v361 = vadd.f32 0.0, %v360
  %362 = vmatprep.mubr.f32.mxu0 0.0
  %363 = vmatmul.mubr.f32.gmra.mxu0 %v154
  %v364 = vpop.f32.mrf.mxu0
  %v365 = vadd.f32 0.0, %v364
  %v366 = vpop.f32.mrf.mxu0
  %v367 = vadd.f32 0.0, %v366
  %368 = vmatprep.mubr.f32.mxu0 0.0
  %369 = vmatmul.mubr.f32.gmra.mxu0 %v157
  %v370 = vpop.f32.mrf.mxu0
  %v371 = vadd.f32 0.0, %v370
  %v372 = vpop.f32.mrf.mxu0
  %v373 = vadd.f32 0.0, %v372
  %374 = vdwg.mxu0
  %v376 = vsel %vm86, %v44, 0
  %v379 = vsel %vm159, %v74, 0
  %v382 = vsel %vm159, %v75, 0
  %384 = vmatprep.subr.mxu0 0.0
  %385 = vmatpush1.msra.mxu0 0.0
  %386 = vmatprep.subr.mxu0 0.0
  %387 = vmatpush1.msra.mxu0 0.0
  %388 = vmatprep.subr.mxu0 0.0
  %389 = vmatpush1.msra.mxu0 0.0
  %390 = vmatprep.subr.mxu0 0.0
  %391 = vmatpush1.msra.mxu0 0.0
  %392 = vmatprep.subr.mxu0 0.0
  %393 = vmatpush1.msra.mxu0 0.0
  %394 = vmatprep.subr.mxu0 0.0
  %395 = vmatpush1.msra.mxu0 0.0
  %396 = vmatprep.subr.mxu0 0.0
  %397 = vmatpush1.msra.mxu0 0.0
  %398 = vmatprep.subr.mxu0 0.0
  %399 = vmatpush1.msra.mxu0 0.0
  %400 = vmatprep.subr.mxu0 0.0
  %401 = vmatpush1.msra.mxu0 0.0
  %402 = vmatprep.subr.mxu0 0.0
  %403 = vmatpush1.msra.mxu0 0.0
  %404 = vmatprep.subr.mxu0 0.0
  %405 = vmatpush1.msra.mxu0 0.0
  %406 = vmatprep.subr.mxu0 0.0
  %407 = vmatpush1.msra.mxu0 0.0
  %408 = vmatprep.subr.mxu0 %v382
  %409 = vmatpush1.msra.mxu0 %v379
  %410 = vmatprep.subr.mxu0 %v73
  %411 = vmatpush1.msra.mxu0 %v72
  %412 = vmatprep.subr.mxu0 %v71
  %413 = vmatpush1.msra.mxu0 %v70
  %414 = vmatprep.subr.mxu0 %v69
  %415 = vmatpush1.msra.mxu0 %v68
  %416 = vmatprep.subr.mxu0 0.0
  %417 = vmatpush2.msra.mxu0 0.0
  %418 = vmatprep.subr.mxu0 0.0
  %419 = vmatpush2.msra.mxu0 0.0
  %420 = vmatprep.subr.mxu0 0.0
  %421 = vmatpush2.msra.mxu0 0.0
  %422 = vmatprep.subr.mxu0 0.0
  %423 = vmatpush2.msra.mxu0 0.0
  %424 = vmatprep.subr.mxu0 0.0
  %425 = vmatpush2.msra.mxu0 0.0
  %426 = vmatprep.subr.mxu0 0.0
  %427 = vmatpush2.msra.mxu0 0.0
  %428 = vmatprep.subr.mxu0 0.0
  %429 = vmatpush2.msra.mxu0 0.0
  %430 = vmatprep.subr.mxu0 0.0
  %431 = vmatpush2.msra.mxu0 0.0
  %432 = vmatprep.subr.mxu0 0.0
  %433 = vmatpush2.msra.mxu0 0.0
  %434 = vmatprep.subr.mxu0 0.0
  %435 = vmatpush2.msra.mxu0 0.0
  %436 = vmatprep.subr.mxu0 0.0
  %437 = vmatpush2.msra.mxu0 0.0
  %438 = vmatprep.subr.mxu0 0.0
  %439 = vmatpush2.msra.mxu0 0.0
  %440 = vmatprep.subr.mxu0 0.0
  %441 = vmatpush2.msra.mxu0 0.0
  %442 = vmatprep.subr.mxu0 0.0
  %443 = vmatpush2.msra.mxu0 0.0
  %444 = vmatprep.subr.mxu0 0.0
  %445 = vmatpush2.msra.mxu0 0.0
  %446 = vmatprep.subr.mxu0 0.0
  %447 = vmatpush2.msra.mxu0 0.0
  %448 = vmatprep.mubr.f32.mxu0 0.0
  %449 = vmatmul.mubr.f32.gmra.mxu0 %v376
  %v450 = vpop.f32.mrf.mxu0
  %v451 = vadd.f32 %v233, %v450
  %v452 = vpop.f32.mrf.mxu0
  %v453 = vadd.f32 %v235, %v452
  %454 = vmatprep.mubr.f32.mxu0 0.0
  %455 = vmatmul.mubr.f32.gmra.mxu0 %v88
  %v456 = vpop.f32.mrf.mxu0
  %v457 = vadd.f32 %v239, %v456
  %v458 = vpop.f32.mrf.mxu0
  %v459 = vadd.f32 %v241, %v458
  %460 = vmatprep.mubr.f32.mxu0 0.0
  %461 = vmatmul.mubr.f32.gmra.mxu0 %v91
  %v462 = vpop.f32.mrf.mxu0
  %v463 = vadd.f32 %v245, %v462
  %v464 = vpop.f32.mrf.mxu0
  %v465 = vadd.f32 %v247, %v464
  %466 = vmatprep.mubr.f32.mxu0 0.0
  %467 = vmatmul.mubr.f32.gmra.mxu0 %v94
  %v468 = vpop.f32.mrf.mxu0
  %v469 = vadd.f32 %v251, %v468
  %v470 = vpop.f32.mrf.mxu0
  %v471 = vadd.f32 %v253, %v470
  %472 = vmatprep.mubr.f32.mxu0 0.0
  %473 = vmatmul.mubr.f32.gmra.mxu0 %v97
  %v474 = vpop.f32.mrf.mxu0
  %v475 = vadd.f32 %v257, %v474
  %v476 = vpop.f32.mrf.mxu0
  %v477 = vadd.f32 %v259, %v476
  %478 = vmatprep.mubr.f32.mxu0 0.0
  %479 = vmatmul.mubr.f32.gmra.mxu0 %v100
  %v480 = vpop.f32.mrf.mxu0
  %v481 = vadd.f32 %v263, %v480
  %v482 = vpop.f32.mrf.mxu0
  %v483 = vadd.f32 %v265, %v482
  %484 = vmatprep.mubr.f32.mxu0 0.0
  %485 = vmatmul.mubr.f32.gmra.mxu0 %v103
  %v486 = vpop.f32.mrf.mxu0
  %v487 = vadd.f32 %v269, %v486
  %v488 = vpop.f32.mrf.mxu0
  %v489 = vadd.f32 %v271, %v488
  %490 = vmatprep.mubr.f32.mxu0 0.0
  %491 = vmatmul.mubr.f32.gmra.mxu0 %v106
  %v492 = vpop.f32.mrf.mxu0
  %v493 = vadd.f32 %v275, %v492
  %v494 = vpop.f32.mrf.mxu0
  %v495 = vadd.f32 %v277, %v494
  %496 = vmatprep.mubr.f32.mxu0 0.0
  %497 = vmatmul.mubr.f32.gmra.mxu0 %v109
  %v498 = vpop.f32.mrf.mxu0
  %v499 = vadd.f32 %v281, %v498
  %v500 = vpop.f32.mrf.mxu0
  %v501 = vadd.f32 %v283, %v500
  %502 = vmatprep.mubr.f32.mxu0 0.0
  %503 = vmatmul.mubr.f32.gmra.mxu0 %v112
  %v504 = vpop.f32.mrf.mxu0
  %v505 = vadd.f32 %v287, %v504
  %v506 = vpop.f32.mrf.mxu0
  %v507 = vadd.f32 %v289, %v506
  %508 = vmatprep.mubr.f32.mxu0 0.0
  %509 = vmatmul.mubr.f32.gmra.mxu0 %v115
  %v510 = vpop.f32.mrf.mxu0
  %v511 = vadd.f32 %v293, %v510
  %v512 = vpop.f32.mrf.mxu0
  %v513 = vadd.f32 %v295, %v512
  %514 = vmatprep.mubr.f32.mxu0 0.0
  %515 = vmatmul.mubr.f32.gmra.mxu0 %v118
  %v516 = vpop.f32.mrf.mxu0
  %v517 = vadd.f32 %v299, %v516
  %v518 = vpop.f32.mrf.mxu0
  %v519 = vadd.f32 %v301, %v518
  %520 = vmatprep.mubr.f32.mxu0 0.0
  %521 = vmatmul.mubr.f32.gmra.mxu0 %v121
  %v522 = vpop.f32.mrf.mxu0
  %v523 = vadd.f32 %v305, %v522
  %v524 = vpop.f32.mrf.mxu0
  %v525 = vadd.f32 %v307, %v524
  %526 = vmatprep.mubr.f32.mxu0 0.0
  %527 = vmatmul.mubr.f32.gmra.mxu0 %v124
  %v528 = vpop.f32.mrf.mxu0
  %v529 = vadd.f32 %v311, %v528
  %v530 = vpop.f32.mrf.mxu0
  %v531 = vadd.f32 %v313, %v530
  %532 = vmatprep.mubr.f32.mxu0 0.0
  %533 = vmatmul.mubr.f32.gmra.mxu0 %v127
  %v534 = vpop.f32.mrf.mxu0
  %v535 = vadd.f32 %v317, %v534
  %v536 = vpop.f32.mrf.mxu0
  %v537 = vadd.f32 %v319, %v536
  %538 = vmatprep.mubr.f32.mxu0 0.0
  %539 = vmatmul.mubr.f32.gmra.mxu0 %v130
  %v540 = vpop.f32.mrf.mxu0
  %v541 = vadd.f32 %v323, %v540
  %v542 = vpop.f32.mrf.mxu0
  %v543 = vadd.f32 %v325, %v542
  %544 = vmatprep.mubr.f32.mxu0 0.0
  %545 = vmatmul.mubr.f32.gmra.mxu0 %v133
  %v546 = vpop.f32.mrf.mxu0
  %v547 = vadd.f32 %v329, %v546
  %v548 = vpop.f32.mrf.mxu0
  %v549 = vadd.f32 %v331, %v548
  %550 = vmatprep.mubr.f32.mxu0 0.0
  %551 = vmatmul.mubr.f32.gmra.mxu0 %v136
  %v552 = vpop.f32.mrf.mxu0
  %v553 = vadd.f32 %v335, %v552
  %v554 = vpop.f32.mrf.mxu0
  %v555 = vadd.f32 %v337, %v554
  %556 = vmatprep.mubr.f32.mxu0 0.0
  %557 = vmatmul.mubr.f32.gmra.mxu0 %v139
  %v558 = vpop.f32.mrf.mxu0
  %v559 = vadd.f32 %v341, %v558
  %v560 = vpop.f32.mrf.mxu0
  %v561 = vadd.f32 %v343, %v560
  %562 = vmatprep.mubr.f32.mxu0 0.0
  %563 = vmatmul.mubr.f32.gmra.mxu0 %v142
  %v564 = vpop.f32.mrf.mxu0
  %v565 = vadd.f32 %v347, %v564
  %v566 = vpop.f32.mrf.mxu0
  %v567 = vadd.f32 %v349, %v566
  %568 = vmatprep.mubr.f32.mxu0 0.0
  %569 = vmatmul.mubr.f32.gmra.mxu0 %v145
  %v570 = vpop.f32.mrf.mxu0
  %v571 = vadd.f32 %v353, %v570
  %v572 = vpop.f32.mrf.mxu0
  %v573 = vadd.f32 %v355, %v572
  %574 = vmatprep.mubr.f32.mxu0 0.0
  %575 = vmatmul.mubr.f32.gmra.mxu0 %v148
  %v576 = vpop.f32.mrf.mxu0
  %v577 = vadd.f32 %v359, %v576
  %v578 = vpop.f32.mrf.mxu0
  %v579 = vadd.f32 %v361, %v578
  %580 = vmatprep.mubr.f32.mxu0 0.0
  %581 = vmatmul.mubr.f32.gmra.mxu0 %v151
  %v582 = vpop.f32.mrf.mxu0
  %v583 = vadd.f32 %v365, %v582
  %v584 = vpop.f32.mrf.mxu0
  %v585 = vadd.f32 %v367, %v584
  %586 = vmatprep.mubr.f32.mxu0 0.0
  %587 = vmatmul.mubr.f32.gmra.mxu0 %v154
  %v588 = vpop.f32.mrf.mxu0
  %v589 = vadd.f32 %v371, %v588
  %v590 = vpop.f32.mrf.mxu0
  %v591 = vadd.f32 %v373, %v590
  %592 = vdwg.mxu0
  %v593 = vld [vmem:[%s0 + $0x10] sm:$0xff]
  %v594 = vld [vmem:[%s0 + $0x18] sm:$0xff]
  %v595 = vld [vmem:[%s0 + $0x20] sm:$0xff]
  %v596 = vld [vmem:[%s0 + $0x28] sm:$0xff]
  %v597 = vld [vmem:[%s0 + $0x30] sm:$0xff]
  %v598 = vld [vmem:[%s0 + $0x38] sm:$0xff]
  %v599 = vld [vmem:[%s0 + $0x40] sm:$0xff]
  %v600 = vld [vmem:[%s0 + $0x48] sm:$0xff]
  %v601 = vld [vmem:[%s0 + $0x50] sm:$0xff]
  %v602 = vld [vmem:[%s0 + $0x58] sm:$0xff]
  %v603 = vld [vmem:[%s0 + $0x60] sm:$0xff]
  %v604 = vld [vmem:[%s0 + $0x68] sm:$0xff]
  %v605 = vld [vmem:[%s0 + $0x70] sm:$0xff]
  %v606 = vld [vmem:[%s0 + $0x78] sm:$0xff]
  %v607 = vld [vmem:[%s0 + $0x80] sm:$0xff]
  %v608 = vld [vmem:[%s0 + $0x88] sm:$0xff]
  %v609 = vld [vmem:[%s0 + $0x90] sm:$0xff]
  %v610 = vld [vmem:[%s0 + $0x98] sm:$0xff]
  %v611 = vld [vmem:[%s0 + $0xa0] sm:$0xff]
  %v612 = vld [vmem:[%s0 + $0xa8] sm:$0xff]
  %v613 = vld [vmem:[%s0 + $0xb0] sm:$0xff]
  %v614 = vld [vmem:[%s0 + $0xb8] sm:$0xff]
  %v615 = vld [vmem:[%s0 + $0xc0] sm:$0xff]
  %v616 = vld [vmem:[%s0 + $0xc8] sm:$0xff]
  %s617 = scalar_lea.vmem %s1, 128
  %v618 = vld [vmem:[%s617] sm:$0xff]
  %v619 = vld [vmem:[%s617 + $0x8] sm:$0xff]
  %v620 = vld [vmem:[%s617 + $0x10] sm:$0xff]
  %v621 = vld [vmem:[%s617 + $0x18] sm:$0xff]
  %v622 = vld [vmem:[%s617 + $0x20] sm:$0xff]
  %v623 = vld [vmem:[%s617 + $0x28] sm:$0xff]
  %v624 = vld [vmem:[%s617 + $0x30] sm:$0xf]
  %v625 = vld [vmem:[%s617 + $0x38] sm:$0xf]
  %v627 = vsel %vm86, %v593, 0
  %v630 = vsel %vm86, %v594, 0
  %v633 = vsel %vm86, %v595, 0
  %v636 = vsel %vm86, %v596, 0
  %v639 = vsel %vm86, %v597, 0
  %v642 = vsel %vm86, %v598, 0
  %v645 = vsel %vm86, %v599, 0
  %v648 = vsel %vm86, %v600, 0
  %v651 = vsel %vm86, %v601, 0
  %v654 = vsel %vm86, %v602, 0
  %v657 = vsel %vm86, %v603, 0
  %v660 = vsel %vm86, %v604, 0
  %v663 = vsel %vm86, %v605, 0
  %v666 = vsel %vm86, %v606, 0
  %v669 = vsel %vm86, %v607, 0
  %v672 = vsel %vm86, %v608, 0
  %v675 = vsel %vm86, %v609, 0
  %v678 = vsel %vm86, %v610, 0
  %v681 = vsel %vm86, %v611, 0
  %v684 = vsel %vm86, %v612, 0
  %v687 = vsel %vm86, %v613, 0
  %v690 = vsel %vm86, %v614, 0
  %v693 = vsel %vm86, %v615, 0
  %v696 = vsel %vm86, %v616, 0
  %v699 = vsel %vm159, %v624, 0
  %v702 = vsel %vm159, %v625, 0
  %704 = vmatprep.subr.mxu0 0.0
  %705 = vmatpush1.msra.mxu0 0.0
  %706 = vmatprep.subr.mxu0 0.0
  %707 = vmatpush1.msra.mxu0 0.0
  %708 = vmatprep.subr.mxu0 0.0
  %709 = vmatpush1.msra.mxu0 0.0
  %710 = vmatprep.subr.mxu0 0.0
  %711 = vmatpush1.msra.mxu0 0.0
  %712 = vmatprep.subr.mxu0 0.0
  %713 = vmatpush1.msra.mxu0 0.0
  %714 = vmatprep.subr.mxu0 0.0
  %715 = vmatpush1.msra.mxu0 0.0
  %716 = vmatprep.subr.mxu0 0.0
  %717 = vmatpush1.msra.mxu0 0.0
  %718 = vmatprep.subr.mxu0 0.0
  %719 = vmatpush1.msra.mxu0 0.0
  %720 = vmatprep.subr.mxu0 0.0
  %721 = vmatpush1.msra.mxu0 0.0
  %722 = vmatprep.subr.mxu0 0.0
  %723 = vmatpush1.msra.mxu0 0.0
  %724 = vmatprep.subr.mxu0 0.0
  %725 = vmatpush1.msra.mxu0 0.0
  %726 = vmatprep.subr.mxu0 0.0
  %727 = vmatpush1.msra.mxu0 0.0
  %728 = vmatprep.subr.mxu0 %v702
  %729 = vmatpush1.msra.mxu0 %v699
  %730 = vmatprep.subr.mxu0 %v623
  %731 = vmatpush1.msra.mxu0 %v622
  %732 = vmatprep.subr.mxu0 %v621
  %733 = vmatpush1.msra.mxu0 %v620
  %734 = vmatprep.subr.mxu0 %v619
  %735 = vmatpush1.msra.mxu0 %v618
  %736 = vmatprep.subr.mxu0 0.0
  %737 = vmatpush2.msra.mxu0 0.0
  %738 = vmatprep.subr.mxu0 0.0
  %739 = vmatpush2.msra.mxu0 0.0
  %740 = vmatprep.subr.mxu0 0.0
  %741 = vmatpush2.msra.mxu0 0.0
  %742 = vmatprep.subr.mxu0 0.0
  %743 = vmatpush2.msra.mxu0 0.0
  %744 = vmatprep.subr.mxu0 0.0
  %745 = vmatpush2.msra.mxu0 0.0
  %746 = vmatprep.subr.mxu0 0.0
  %747 = vmatpush2.msra.mxu0 0.0
  %748 = vmatprep.subr.mxu0 0.0
  %749 = vmatpush2.msra.mxu0 0.0
  %750 = vmatprep.subr.mxu0 0.0
  %751 = vmatpush2.msra.mxu0 0.0
  %752 = vmatprep.subr.mxu0 0.0
  %753 = vmatpush2.msra.mxu0 0.0
  %754 = vmatprep.subr.mxu0 0.0
  %755 = vmatpush2.msra.mxu0 0.0
  %756 = vmatprep.subr.mxu0 0.0
  %757 = vmatpush2.msra.mxu0 0.0
  %758 = vmatprep.subr.mxu0 0.0
  %759 = vmatpush2.msra.mxu0 0.0
  %760 = vmatprep.subr.mxu0 0.0
  %761 = vmatpush2.msra.mxu0 0.0
  %762 = vmatprep.subr.mxu0 0.0
  %763 = vmatpush2.msra.mxu0 0.0
  %764 = vmatprep.subr.mxu0 0.0
  %765 = vmatpush2.msra.mxu0 0.0
  %766 = vmatprep.subr.mxu0 0.0
  %767 = vmatpush2.msra.mxu0 0.0
  %768 = vmatprep.mubr.f32.mxu0 0.0
  %769 = vmatmul.mubr.f32.gmra.mxu0 %v627
  %v770 = vpop.f32.mrf.mxu0
  %v771 = vadd.f32 0.0, %v770
  %v772 = vpop.f32.mrf.mxu0
  %v773 = vadd.f32 0.0, %v772
  %774 = vmatprep.mubr.f32.mxu0 0.0
  %775 = vmatmul.mubr.f32.gmra.mxu0 %v630
  %v776 = vpop.f32.mrf.mxu0
  %v777 = vadd.f32 0.0, %v776
  %v778 = vpop.f32.mrf.mxu0
  %v779 = vadd.f32 0.0, %v778
  %780 = vmatprep.mubr.f32.mxu0 0.0
  %781 = vmatmul.mubr.f32.gmra.mxu0 %v633
  %v782 = vpop.f32.mrf.mxu0
  %v783 = vadd.f32 0.0, %v782
  %v784 = vpop.f32.mrf.mxu0
  %v785 = vadd.f32 0.0, %v784
  %786 = vmatprep.mubr.f32.mxu0 0.0
  %787 = vmatmul.mubr.f32.gmra.mxu0 %v636
  %v788 = vpop.f32.mrf.mxu0
  %v789 = vadd.f32 0.0, %v788
  %v790 = vpop.f32.mrf.mxu0
  %v791 = vadd.f32 0.0, %v790
  %792 = vmatprep.mubr.f32.mxu0 0.0
  %793 = vmatmul.mubr.f32.gmra.mxu0 %v639
  %v794 = vpop.f32.mrf.mxu0
  %v795 = vadd.f32 0.0, %v794
  %v796 = vpop.f32.mrf.mxu0
  %v797 = vadd.f32 0.0, %v796
  %798 = vmatprep.mubr.f32.mxu0 0.0
  %799 = vmatmul.mubr.f32.gmra.mxu0 %v642
  %v800 = vpop.f32.mrf.mxu0
  %v801 = vadd.f32 0.0, %v800
  %v802 = vpop.f32.mrf.mxu0
  %v803 = vadd.f32 0.0, %v802
  %804 = vmatprep.mubr.f32.mxu0 0.0
  %805 = vmatmul.mubr.f32.gmra.mxu0 %v645
  %v806 = vpop.f32.mrf.mxu0
  %v807 = vadd.f32 0.0, %v806
  %v808 = vpop.f32.mrf.mxu0
  %v809 = vadd.f32 0.0, %v808
  %810 = vmatprep.mubr.f32.mxu0 0.0
  %811 = vmatmul.mubr.f32.gmra.mxu0 %v648
  %v812 = vpop.f32.mrf.mxu0
  %v813 = vadd.f32 0.0, %v812
  %v814 = vpop.f32.mrf.mxu0
  %v815 = vadd.f32 0.0, %v814
  %816 = vmatprep.mubr.f32.mxu0 0.0
  %817 = vmatmul.mubr.f32.gmra.mxu0 %v651
  %v818 = vpop.f32.mrf.mxu0
  %v819 = vadd.f32 0.0, %v818
  %v820 = vpop.f32.mrf.mxu0
  %v821 = vadd.f32 0.0, %v820
  %822 = vmatprep.mubr.f32.mxu0 0.0
  %823 = vmatmul.mubr.f32.gmra.mxu0 %v654
  %v824 = vpop.f32.mrf.mxu0
  %v825 = vadd.f32 0.0, %v824
  %v826 = vpop.f32.mrf.mxu0
  %v827 = vadd.f32 0.0, %v826
  %828 = vmatprep.mubr.f32.mxu0 0.0
  %829 = vmatmul.mubr.f32.gmra.mxu0 %v657
  %v830 = vpop.f32.mrf.mxu0
  %v831 = vadd.f32 0.0, %v830
  %v832 = vpop.f32.mrf.mxu0
  %v833 = vadd.f32 0.0, %v832
  %834 = vmatprep.mubr.f32.mxu0 0.0
  %835 = vmatmul.mubr.f32.gmra.mxu0 %v660
  %v836 = vpop.f32.mrf.mxu0
  %v837 = vadd.f32 0.0, %v836
  %v838 = vpop.f32.mrf.mxu0
  %v839 = vadd.f32 0.0, %v838
  %840 = vmatprep.mubr.f32.mxu0 0.0
  %841 = vmatmul.mubr.f32.gmra.mxu0 %v663
  %v842 = vpop.f32.mrf.mxu0
  %v843 = vadd.f32 0.0, %v842
  %v844 = vpop.f32.mrf.mxu0
  %v845 = vadd.f32 0.0, %v844
  %846 = vmatprep.mubr.f32.mxu0 0.0
  %847 = vmatmul.mubr.f32.gmra.mxu0 %v666
  %v848 = vpop.f32.mrf.mxu0
  %v849 = vadd.f32 0.0, %v848
  %v850 = vpop.f32.mrf.mxu0
  %v851 = vadd.f32 0.0, %v850
  %852 = vmatprep.mubr.f32.mxu0 0.0
  %853 = vmatmul.mubr.f32.gmra.mxu0 %v669
  %v854 = vpop.f32.mrf.mxu0
  %v855 = vadd.f32 0.0, %v854
  %v856 = vpop.f32.mrf.mxu0
  %v857 = vadd.f32 0.0, %v856
  %858 = vmatprep.mubr.f32.mxu0 0.0
  %859 = vmatmul.mubr.f32.gmra.mxu0 %v672
  %v860 = vpop.f32.mrf.mxu0
  %v861 = vadd.f32 0.0, %v860
  %v862 = vpop.f32.mrf.mxu0
  %v863 = vadd.f32 0.0, %v862
  %864 = vmatprep.mubr.f32.mxu0 0.0
  %865 = vmatmul.mubr.f32.gmra.mxu0 %v675
  %v866 = vpop.f32.mrf.mxu0
  %v867 = vadd.f32 0.0, %v866
  %v868 = vpop.f32.mrf.mxu0
  %v869 = vadd.f32 0.0, %v868
  %870 = vmatprep.mubr.f32.mxu0 0.0
  %871 = vmatmul.mubr.f32.gmra.mxu0 %v678
  %v872 = vpop.f32.mrf.mxu0
  %v873 = vadd.f32 0.0, %v872
  %v874 = vpop.f32.mrf.mxu0
  %v875 = vadd.f32 0.0, %v874
  %876 = vmatprep.mubr.f32.mxu0 0.0
  %877 = vmatmul.mubr.f32.gmra.mxu0 %v681
  %v878 = vpop.f32.mrf.mxu0
  %v879 = vadd.f32 0.0, %v878
  %v880 = vpop.f32.mrf.mxu0
  %v881 = vadd.f32 0.0, %v880
  %882 = vmatprep.mubr.f32.mxu0 0.0
  %883 = vmatmul.mubr.f32.gmra.mxu0 %v684
  %v884 = vpop.f32.mrf.mxu0
  %v885 = vadd.f32 0.0, %v884
  %v886 = vpop.f32.mrf.mxu0
  %v887 = vadd.f32 0.0, %v886
  %888 = vmatprep.mubr.f32.mxu0 0.0
  %889 = vmatmul.mubr.f32.gmra.mxu0 %v687
  %v890 = vpop.f32.mrf.mxu0
  %v891 = vadd.f32 0.0, %v890
  %v892 = vpop.f32.mrf.mxu0
  %v893 = vadd.f32 0.0, %v892
  %894 = vmatprep.mubr.f32.mxu0 0.0
  %895 = vmatmul.mubr.f32.gmra.mxu0 %v690
  %v896 = vpop.f32.mrf.mxu0
  %v897 = vadd.f32 0.0, %v896
  %v898 = vpop.f32.mrf.mxu0
  %v899 = vadd.f32 0.0, %v898
  %900 = vmatprep.mubr.f32.mxu0 0.0
  %901 = vmatmul.mubr.f32.gmra.mxu0 %v693
  %v902 = vpop.f32.mrf.mxu0
  %v903 = vadd.f32 0.0, %v902
  %v904 = vpop.f32.mrf.mxu0
  %v905 = vadd.f32 0.0, %v904
  %906 = vmatprep.mubr.f32.mxu0 0.0
  %907 = vmatmul.mubr.f32.gmra.mxu0 %v696
  %v908 = vpop.f32.mrf.mxu0
  %v909 = vadd.f32 0.0, %v908
  %v910 = vpop.f32.mrf.mxu0
  %v911 = vadd.f32 0.0, %v910
  %912 = vdwg.mxu0
  %v913 = vadd.f32 %v451, %v771
  %v914 = vadd.f32 %v453, %v773
  %v915 = vadd.f32 %v457, %v777
  %v916 = vadd.f32 %v459, %v779
  %v917 = vadd.f32 %v463, %v783
  %v918 = vadd.f32 %v465, %v785
  %v919 = vadd.f32 %v469, %v789
  %v920 = vadd.f32 %v471, %v791
  %v921 = vadd.f32 %v475, %v795
  %v922 = vadd.f32 %v477, %v797
  %v923 = vadd.f32 %v481, %v801
  %v924 = vadd.f32 %v483, %v803
  %v925 = vadd.f32 %v487, %v807
  %v926 = vadd.f32 %v489, %v809
  %v927 = vadd.f32 %v493, %v813
  %v928 = vadd.f32 %v495, %v815
  %v929 = vadd.f32 %v499, %v819
  %v930 = vadd.f32 %v501, %v821
  %v931 = vadd.f32 %v505, %v825
  %v932 = vadd.f32 %v507, %v827
  %v933 = vadd.f32 %v511, %v831
  %v934 = vadd.f32 %v513, %v833
  %v935 = vadd.f32 %v517, %v837
  %v936 = vadd.f32 %v519, %v839
  %v937 = vadd.f32 %v523, %v843
  %v938 = vadd.f32 %v525, %v845
  %v939 = vadd.f32 %v529, %v849
  %v940 = vadd.f32 %v531, %v851
  %v941 = vadd.f32 %v535, %v855
  %v942 = vadd.f32 %v537, %v857
  %v943 = vadd.f32 %v541, %v861
  %v944 = vadd.f32 %v543, %v863
  %v945 = vadd.f32 %v547, %v867
  %v946 = vadd.f32 %v549, %v869
  %v947 = vadd.f32 %v553, %v873
  %v948 = vadd.f32 %v555, %v875
  %v949 = vadd.f32 %v559, %v879
  %v950 = vadd.f32 %v561, %v881
  %v951 = vadd.f32 %v565, %v885
  %v952 = vadd.f32 %v567, %v887
  %v953 = vadd.f32 %v571, %v891
  %v954 = vadd.f32 %v573, %v893
  %v955 = vadd.f32 %v577, %v897
  %v956 = vadd.f32 %v579, %v899
  %v957 = vadd.f32 %v583, %v903
  %v958 = vadd.f32 %v585, %v905
  %v959 = vadd.f32 %v589, %v909
  %v960 = vadd.f32 %v591, %v911
  %v961 = vld [vmem:[%s0 + $0x18] sm:$0xff]
  %v962 = vld [vmem:[%s0 + $0x20] sm:$0xff]
  %v963 = vld [vmem:[%s0 + $0x28] sm:$0xff]
  %v964 = vld [vmem:[%s0 + $0x30] sm:$0xff]
  %v965 = vld [vmem:[%s0 + $0x38] sm:$0xff]
  %v966 = vld [vmem:[%s0 + $0x40] sm:$0xff]
  %v967 = vld [vmem:[%s0 + $0x48] sm:$0xff]
  %v968 = vld [vmem:[%s0 + $0x50] sm:$0xff]
  %v969 = vld [vmem:[%s0 + $0x58] sm:$0xff]
  %v970 = vld [vmem:[%s0 + $0x60] sm:$0xff]
  %v971 = vld [vmem:[%s0 + $0x68] sm:$0xff]
  %v972 = vld [vmem:[%s0 + $0x70] sm:$0xff]
  %v973 = vld [vmem:[%s0 + $0x78] sm:$0xff]
  %v974 = vld [vmem:[%s0 + $0x80] sm:$0xff]
  %v975 = vld [vmem:[%s0 + $0x88] sm:$0xff]
  %v976 = vld [vmem:[%s0 + $0x90] sm:$0xff]
  %v977 = vld [vmem:[%s0 + $0x98] sm:$0xff]
  %v978 = vld [vmem:[%s0 + $0xa0] sm:$0xff]
  %v979 = vld [vmem:[%s0 + $0xa8] sm:$0xff]
  %v980 = vld [vmem:[%s0 + $0xb0] sm:$0xff]
  %v981 = vld [vmem:[%s0 + $0xb8] sm:$0xff]
  %v982 = vld [vmem:[%s0 + $0xc0] sm:$0xff]
  %v983 = vld [vmem:[%s0 + $0xc8] sm:$0xff]
  %v984 = vld [vmem:[%s0 + $0xd0] sm:$0xff]
  %s985 = scalar_lea.vmem %s1, 192
  %v986 = vld [vmem:[%s985] sm:$0xff]
  %v987 = vld [vmem:[%s985 + $0x8] sm:$0xff]
  %v988 = vld [vmem:[%s985 + $0x10] sm:$0xff]
  %v989 = vld [vmem:[%s985 + $0x18] sm:$0xff]
  %v990 = vld [vmem:[%s985 + $0x20] sm:$0xff]
  %v991 = vld [vmem:[%s985 + $0x28] sm:$0xff]
  %v992 = vld [vmem:[%s985 + $0x30] sm:$0xf]
  %v993 = vld [vmem:[%s985 + $0x38] sm:$0xf]
  %v995 = vsel %vm86, %v961, 0
  %v998 = vsel %vm86, %v962, 0
  %v1001 = vsel %vm86, %v963, 0
  %v1004 = vsel %vm86, %v964, 0
  %v1007 = vsel %vm86, %v965, 0
  %v1010 = vsel %vm86, %v966, 0
  %v1013 = vsel %vm86, %v967, 0
  %v1016 = vsel %vm86, %v968, 0
  %v1019 = vsel %vm86, %v969, 0
  %v1022 = vsel %vm86, %v970, 0
  %v1025 = vsel %vm86, %v971, 0
  %v1028 = vsel %vm86, %v972, 0
  %v1031 = vsel %vm86, %v973, 0
  %v1034 = vsel %vm86, %v974, 0
  %v1037 = vsel %vm86, %v975, 0
  %v1040 = vsel %vm86, %v976, 0
  %v1043 = vsel %vm86, %v977, 0
  %v1046 = vsel %vm86, %v978, 0
  %v1049 = vsel %vm86, %v979, 0
  %v1052 = vsel %vm86, %v980, 0
  %v1055 = vsel %vm86, %v981, 0
  %v1058 = vsel %vm86, %v982, 0
  %v1061 = vsel %vm86, %v983, 0
  %v1064 = vsel %vm86, %v984, 0
  %v1067 = vsel %vm159, %v992, 0
  %v1070 = vsel %vm159, %v993, 0
  %1072 = vmatprep.subr.mxu0 0.0
  %1073 = vmatpush1.msra.mxu0 0.0
  %1074 = vmatprep.subr.mxu0 0.0
  %1075 = vmatpush1.msra.mxu0 0.0
  %1076 = vmatprep.subr.mxu0 0.0
  %1077 = vmatpush1.msra.mxu0 0.0
  %1078 = vmatprep.subr.mxu0 0.0
  %1079 = vmatpush1.msra.mxu0 0.0
  %1080 = vmatprep.subr.mxu0 0.0
  %1081 = vmatpush1.msra.mxu0 0.0
  %1082 = vmatprep.subr.mxu0 0.0
  %1083 = vmatpush1.msra.mxu0 0.0
  %1084 = vmatprep.subr.mxu0 0.0
  %1085 = vmatpush1.msra.mxu0 0.0
  %1086 = vmatprep.subr.mxu0 0.0
  %1087 = vmatpush1.msra.mxu0 0.0
  %1088 = vmatprep.subr.mxu0 0.0
  %1089 = vmatpush1.msra.mxu0 0.0
  %1090 = vmatprep.subr.mxu0 0.0
  %1091 = vmatpush1.msra.mxu0 0.0
  %1092 = vmatprep.subr.mxu0 0.0
  %1093 = vmatpush1.msra.mxu0 0.0
  %1094 = vmatprep.subr.mxu0 0.0
  %1095 = vmatpush1.msra.mxu0 0.0
  %1096 = vmatprep.subr.mxu0 %v1070
  %1097 = vmatpush1.msra.mxu0 %v1067
  %1098 = vmatprep.subr.mxu0 %v991
  %1099 = vmatpush1.msra.mxu0 %v990
  %1100 = vmatprep.subr.mxu0 %v989
  %1101 = vmatpush1.msra.mxu0 %v988
  %1102 = vmatprep.subr.mxu0 %v987
  %1103 = vmatpush1.msra.mxu0 %v986
  %1104 = vmatprep.subr.mxu0 0.0
  %1105 = vmatpush2.msra.mxu0 0.0
  %1106 = vmatprep.subr.mxu0 0.0
  %1107 = vmatpush2.msra.mxu0 0.0
  %1108 = vmatprep.subr.mxu0 0.0
  %1109 = vmatpush2.msra.mxu0 0.0
  %1110 = vmatprep.subr.mxu0 0.0
  %1111 = vmatpush2.msra.mxu0 0.0
  %1112 = vmatprep.subr.mxu0 0.0
  %1113 = vmatpush2.msra.mxu0 0.0
  %1114 = vmatprep.subr.mxu0 0.0
  %1115 = vmatpush2.msra.mxu0 0.0
  %1116 = vmatprep.subr.mxu0 0.0
  %1117 = vmatpush2.msra.mxu0 0.0
  %1118 = vmatprep.subr.mxu0 0.0
  %1119 = vmatpush2.msra.mxu0 0.0
  %1120 = vmatprep.subr.mxu0 0.0
  %1121 = vmatpush2.msra.mxu0 0.0
  %1122 = vmatprep.subr.mxu0 0.0
  %1123 = vmatpush2.msra.mxu0 0.0
  %1124 = vmatprep.subr.mxu0 0.0
  %1125 = vmatpush2.msra.mxu0 0.0
  %1126 = vmatprep.subr.mxu0 0.0
  %1127 = vmatpush2.msra.mxu0 0.0
  %1128 = vmatprep.subr.mxu0 0.0
  %1129 = vmatpush2.msra.mxu0 0.0
  %1130 = vmatprep.subr.mxu0 0.0
  %1131 = vmatpush2.msra.mxu0 0.0
  %1132 = vmatprep.subr.mxu0 0.0
  %1133 = vmatpush2.msra.mxu0 0.0
  %1134 = vmatprep.subr.mxu0 0.0
  %1135 = vmatpush2.msra.mxu0 0.0
  %1136 = vmatprep.mubr.f32.mxu0 0.0
  %1137 = vmatmul.mubr.f32.gmra.mxu0 %v995
  %v1138 = vpop.f32.mrf.mxu0
  %v1139 = vadd.f32 0.0, %v1138
  %v1140 = vpop.f32.mrf.mxu0
  %v1141 = vadd.f32 0.0, %v1140
  %1142 = vmatprep.mubr.f32.mxu0 0.0
  %1143 = vmatmul.mubr.f32.gmra.mxu0 %v998
  %v1144 = vpop.f32.mrf.mxu0
  %v1145 = vadd.f32 0.0, %v1144
  %v1146 = vpop.f32.mrf.mxu0
  %v1147 = vadd.f32 0.0, %v1146
  %1148 = vmatprep.mubr.f32.mxu0 0.0
  %1149 = vmatmul.mubr.f32.gmra.mxu0 %v1001
  %v1150 = vpop.f32.mrf.mxu0
  %v1151 = vadd.f32 0.0, %v1150
  %v1152 = vpop.f32.mrf.mxu0
  %v1153 = vadd.f32 0.0, %v1152
  %1154 = vmatprep.mubr.f32.mxu0 0.0
  %1155 = vmatmul.mubr.f32.gmra.mxu0 %v1004
  %v1156 = vpop.f32.mrf.mxu0
  %v1157 = vadd.f32 0.0, %v1156
  %v1158 = vpop.f32.mrf.mxu0
  %v1159 = vadd.f32 0.0, %v1158
  %1160 = vmatprep.mubr.f32.mxu0 0.0
  %1161 = vmatmul.mubr.f32.gmra.mxu0 %v1007
  %v1162 = vpop.f32.mrf.mxu0
  %v1163 = vadd.f32 0.0, %v1162
  %v1164 = vpop.f32.mrf.mxu0
  %v1165 = vadd.f32 0.0, %v1164
  %1166 = vmatprep.mubr.f32.mxu0 0.0
  %1167 = vmatmul.mubr.f32.gmra.mxu0 %v1010
  %v1168 = vpop.f32.mrf.mxu0
  %v1169 = vadd.f32 0.0, %v1168
  %v1170 = vpop.f32.mrf.mxu0
  %v1171 = vadd.f32 0.0, %v1170
  %1172 = vmatprep.mubr.f32.mxu0 0.0
  %1173 = vmatmul.mubr.f32.gmra.mxu0 %v1013
  %v1174 = vpop.f32.mrf.mxu0
  %v1175 = vadd.f32 0.0, %v1174
  %v1176 = vpop.f32.mrf.mxu0
  %v1177 = vadd.f32 0.0, %v1176
  %1178 = vmatprep.mubr.f32.mxu0 0.0
  %1179 = vmatmul.mubr.f32.gmra.mxu0 %v1016
  %v1180 = vpop.f32.mrf.mxu0
  %v1181 = vadd.f32 0.0, %v1180
  %v1182 = vpop.f32.mrf.mxu0
  %v1183 = vadd.f32 0.0, %v1182
  %1184 = vmatprep.mubr.f32.mxu0 0.0
  %1185 = vmatmul.mubr.f32.gmra.mxu0 %v1019
  %v1186 = vpop.f32.mrf.mxu0
  %v1187 = vadd.f32 0.0, %v1186
  %v1188 = vpop.f32.mrf.mxu0
  %v1189 = vadd.f32 0.0, %v1188
  %1190 = vmatprep.mubr.f32.mxu0 0.0
  %1191 = vmatmul.mubr.f32.gmra.mxu0 %v1022
  %v1192 = vpop.f32.mrf.mxu0
  %v1193 = vadd.f32 0.0, %v1192
  %v1194 = vpop.f32.mrf.mxu0
  %v1195 = vadd.f32 0.0, %v1194
  %1196 = vmatprep.mubr.f32.mxu0 0.0
  %1197 = vmatmul.mubr.f32.gmra.mxu0 %v1025
  %v1198 = vpop.f32.mrf.mxu0
  %v1199 = vadd.f32 0.0, %v1198
  %v1200 = vpop.f32.mrf.mxu0
  %v1201 = vadd.f32 0.0, %v1200
  %1202 = vmatprep.mubr.f32.mxu0 0.0
  %1203 = vmatmul.mubr.f32.gmra.mxu0 %v1028
  %v1204 = vpop.f32.mrf.mxu0
  %v1205 = vadd.f32 0.0, %v1204
  %v1206 = vpop.f32.mrf.mxu0
  %v1207 = vadd.f32 0.0, %v1206
  %1208 = vmatprep.mubr.f32.mxu0 0.0
  %1209 = vmatmul.mubr.f32.gmra.mxu0 %v1031
  %v1210 = vpop.f32.mrf.mxu0
  %v1211 = vadd.f32 0.0, %v1210
  %v1212 = vpop.f32.mrf.mxu0
  %v1213 = vadd.f32 0.0, %v1212
  %1214 = vmatprep.mubr.f32.mxu0 0.0
  %1215 = vmatmul.mubr.f32.gmra.mxu0 %v1034
  %v1216 = vpop.f32.mrf.mxu0
  %v1217 = vadd.f32 0.0, %v1216
  %v1218 = vpop.f32.mrf.mxu0
  %v1219 = vadd.f32 0.0, %v1218
  %1220 = vmatprep.mubr.f32.mxu0 0.0
  %1221 = vmatmul.mubr.f32.gmra.mxu0 %v1037
  %v1222 = vpop.f32.mrf.mxu0
  %v1223 = vadd.f32 0.0, %v1222
  %v1224 = vpop.f32.mrf.mxu0
  %v1225 = vadd.f32 0.0, %v1224
  %1226 = vmatprep.mubr.f32.mxu0 0.0
  %1227 = vmatmul.mubr.f32.gmra.mxu0 %v1040
  %v1228 = vpop.f32.mrf.mxu0
  %v1229 = vadd.f32 0.0, %v1228
  %v1230 = vpop.f32.mrf.mxu0
  %v1231 = vadd.f32 0.0, %v1230
  %1232 = vmatprep.mubr.f32.mxu0 0.0
  %1233 = vmatmul.mubr.f32.gmra.mxu0 %v1043
  %v1234 = vpop.f32.mrf.mxu0
  %v1235 = vadd.f32 0.0, %v1234
  %v1236 = vpop.f32.mrf.mxu0
  %v1237 = vadd.f32 0.0, %v1236
  %1238 = vmatprep.mubr.f32.mxu0 0.0
  %1239 = vmatmul.mubr.f32.gmra.mxu0 %v1046
  %v1240 = vpop.f32.mrf.mxu0
  %v1241 = vadd.f32 0.0, %v1240
  %v1242 = vpop.f32.mrf.mxu0
  %v1243 = vadd.f32 0.0, %v1242
  %1244 = vmatprep.mubr.f32.mxu0 0.0
  %1245 = vmatmul.mubr.f32.gmra.mxu0 %v1049
  %v1246 = vpop.f32.mrf.mxu0
  %v1247 = vadd.f32 0.0, %v1246
  %v1248 = vpop.f32.mrf.mxu0
  %v1249 = vadd.f32 0.0, %v1248
  %1250 = vmatprep.mubr.f32.mxu0 0.0
  %1251 = vmatmul.mubr.f32.gmra.mxu0 %v1052
  %v1252 = vpop.f32.mrf.mxu0
  %v1253 = vadd.f32 0.0, %v1252
  %v1254 = vpop.f32.mrf.mxu0
  %v1255 = vadd.f32 0.0, %v1254
  %1256 = vmatprep.mubr.f32.mxu0 0.0
  %1257 = vmatmul.mubr.f32.gmra.mxu0 %v1055
  %v1258 = vpop.f32.mrf.mxu0
  %v1259 = vadd.f32 0.0, %v1258
  %v1260 = vpop.f32.mrf.mxu0
  %v1261 = vadd.f32 0.0, %v1260
  %1262 = vmatprep.mubr.f32.mxu0 0.0
  %1263 = vmatmul.mubr.f32.gmra.mxu0 %v1058
  %v1264 = vpop.f32.mrf.mxu0
  %v1265 = vadd.f32 0.0, %v1264
  %v1266 = vpop.f32.mrf.mxu0
  %v1267 = vadd.f32 0.0, %v1266
  %1268 = vmatprep.mubr.f32.mxu0 0.0
  %1269 = vmatmul.mubr.f32.gmra.mxu0 %v1061
  %v1270 = vpop.f32.mrf.mxu0
  %v1271 = vadd.f32 0.0, %v1270
  %v1272 = vpop.f32.mrf.mxu0
  %v1273 = vadd.f32 0.0, %v1272
  %1274 = vmatprep.mubr.f32.mxu0 0.0
  %1275 = vmatmul.mubr.f32.gmra.mxu0 %v1064
  %v1276 = vpop.f32.mrf.mxu0
  %v1277 = vadd.f32 0.0, %v1276
  %v1278 = vpop.f32.mrf.mxu0
  %v1279 = vadd.f32 0.0, %v1278
  %1280 = vdwg.mxu0
  %v1281 = vadd.f32 %v913, %v1139
  %v1282 = vadd.f32 %v914, %v1141
  %v1283 = vadd.f32 %v915, %v1145
  %v1284 = vadd.f32 %v916, %v1147
  %v1285 = vadd.f32 %v917, %v1151
  %v1286 = vadd.f32 %v918, %v1153
  %v1287 = vadd.f32 %v919, %v1157
  %v1288 = vadd.f32 %v920, %v1159
  %v1289 = vadd.f32 %v921, %v1163
  %v1290 = vadd.f32 %v922, %v1165
  %v1291 = vadd.f32 %v923, %v1169
  %v1292 = vadd.f32 %v924, %v1171
  %v1293 = vadd.f32 %v925, %v1175
  %v1294 = vadd.f32 %v926, %v1177
  %v1295 = vadd.f32 %v927, %v1181
  %v1296 = vadd.f32 %v928, %v1183
  %v1297 = vadd.f32 %v929, %v1187
  %v1298 = vadd.f32 %v930, %v1189
  %v1299 = vadd.f32 %v931, %v1193
  %v1300 = vadd.f32 %v932, %v1195
  %v1301 = vadd.f32 %v933, %v1199
  %v1302 = vadd.f32 %v934, %v1201
  %v1303 = vadd.f32 %v935, %v1205
  %v1304 = vadd.f32 %v936, %v1207
  %v1305 = vadd.f32 %v937, %v1211
  %v1306 = vadd.f32 %v938, %v1213
  %v1307 = vadd.f32 %v939, %v1217
  %v1308 = vadd.f32 %v940, %v1219
  %v1309 = vadd.f32 %v941, %v1223
  %v1310 = vadd.f32 %v942, %v1225
  %v1311 = vadd.f32 %v943, %v1229
  %v1312 = vadd.f32 %v944, %v1231
  %v1313 = vadd.f32 %v945, %v1235
  %v1314 = vadd.f32 %v946, %v1237
  %v1315 = vadd.f32 %v947, %v1241
  %v1316 = vadd.f32 %v948, %v1243
  %v1317 = vadd.f32 %v949, %v1247
  %v1318 = vadd.f32 %v950, %v1249
  %v1319 = vadd.f32 %v951, %v1253
  %v1320 = vadd.f32 %v952, %v1255
  %v1321 = vadd.f32 %v953, %v1259
  %v1322 = vadd.f32 %v954, %v1261
  %v1323 = vadd.f32 %v955, %v1265
  %v1324 = vadd.f32 %v956, %v1267
  %v1325 = vadd.f32 %v957, %v1271
  %v1326 = vadd.f32 %v958, %v1273
  %v1327 = vadd.f32 %v959, %v1277
  %v1328 = vadd.f32 %v960, %v1279
  %v1329 = vld [vmem:[%s0 + $0x20] sm:$0xff]
  %v1330 = vld [vmem:[%s0 + $0x28] sm:$0xff]
  %v1331 = vld [vmem:[%s0 + $0x30] sm:$0xff]
  %v1332 = vld [vmem:[%s0 + $0x38] sm:$0xff]
  %v1333 = vld [vmem:[%s0 + $0x40] sm:$0xff]
  %v1334 = vld [vmem:[%s0 + $0x48] sm:$0xff]
  %v1335 = vld [vmem:[%s0 + $0x50] sm:$0xff]
  %v1336 = vld [vmem:[%s0 + $0x58] sm:$0xff]
  %v1337 = vld [vmem:[%s0 + $0x60] sm:$0xff]
  %v1338 = vld [vmem:[%s0 + $0x68] sm:$0xff]
  %v1339 = vld [vmem:[%s0 + $0x70] sm:$0xff]
  %v1340 = vld [vmem:[%s0 + $0x78] sm:$0xff]
  %v1341 = vld [vmem:[%s0 + $0x80] sm:$0xff]
  %v1342 = vld [vmem:[%s0 + $0x88] sm:$0xff]
  %v1343 = vld [vmem:[%s0 + $0x90] sm:$0xff]
  %v1344 = vld [vmem:[%s0 + $0x98] sm:$0xff]
  %v1345 = vld [vmem:[%s0 + $0xa0] sm:$0xff]
  %v1346 = vld [vmem:[%s0 + $0xa8] sm:$0xff]
  %v1347 = vld [vmem:[%s0 + $0xb0] sm:$0xff]
  %v1348 = vld [vmem:[%s0 + $0xb8] sm:$0xff]
  %v1349 = vld [vmem:[%s0 + $0xc0] sm:$0xff]
  %v1350 = vld [vmem:[%s0 + $0xc8] sm:$0xff]
  %v1351 = vld [vmem:[%s0 + $0xd0] sm:$0xff]
  %v1352 = vld [vmem:[%s0 + $0xd8] sm:$0xff]
  %s1353 = scalar_lea.vmem %s1, 256
  %v1354 = vld [vmem:[%s1353] sm:$0xff]
  %v1355 = vld [vmem:[%s1353 + $0x8] sm:$0xff]
  %v1356 = vld [vmem:[%s1353 + $0x10] sm:$0xff]
  %v1357 = vld [vmem:[%s1353 + $0x18] sm:$0xff]
  %v1358 = vld [vmem:[%s1353 + $0x20] sm:$0xff]
  %v1359 = vld [vmem:[%s1353 + $0x28] sm:$0xff]
  %v1360 = vld [vmem:[%s1353 + $0x30] sm:$0xf]
  %v1361 = vld [vmem:[%s1353 + $0x38] sm:$0xf]
  %v1363 = vsel %vm86, %v1329, 0
  %v1366 = vsel %vm86, %v1330, 0
  %v1369 = vsel %vm86, %v1331, 0
  %v1372 = vsel %vm86, %v1332, 0
  %v1375 = vsel %vm86, %v1333, 0
  %v1378 = vsel %vm86, %v1334, 0
  %v1381 = vsel %vm86, %v1335, 0
  %v1384 = vsel %vm86, %v1336, 0
  %v1387 = vsel %vm86, %v1337, 0
  %v1390 = vsel %vm86, %v1338, 0
  %v1393 = vsel %vm86, %v1339, 0
  %v1396 = vsel %vm86, %v1340, 0
  %v1399 = vsel %vm86, %v1341, 0
  %v1402 = vsel %vm86, %v1342, 0
  %v1405 = vsel %vm86, %v1343, 0
  %v1408 = vsel %vm86, %v1344, 0
  %v1411 = vsel %vm86, %v1345, 0
  %v1414 = vsel %vm86, %v1346, 0
  %v1417 = vsel %vm86, %v1347, 0
  %v1420 = vsel %vm86, %v1348, 0
  %v1423 = vsel %vm86, %v1349, 0
  %v1426 = vsel %vm86, %v1350, 0
  %v1429 = vsel %vm86, %v1351, 0
  %v1432 = vsel %vm86, %v1352, 0
  %v1435 = vsel %vm159, %v1360, 0
  %v1438 = vsel %vm159, %v1361, 0
  %1440 = vmatprep.subr.mxu0 0.0
  %1441 = vmatpush1.msra.mxu0 0.0
  %1442 = vmatprep.subr.mxu0 0.0
  %1443 = vmatpush1.msra.mxu0 0.0
  %1444 = vmatprep.subr.mxu0 0.0
  %1445 = vmatpush1.msra.mxu0 0.0
  %1446 = vmatprep.subr.mxu0 0.0
  %1447 = vmatpush1.msra.mxu0 0.0
  %1448 = vmatprep.subr.mxu0 0.0
  %1449 = vmatpush1.msra.mxu0 0.0
  %1450 = vmatprep.subr.mxu0 0.0
  %1451 = vmatpush1.msra.mxu0 0.0
  %1452 = vmatprep.subr.mxu0 0.0
  %1453 = vmatpush1.msra.mxu0 0.0
  %1454 = vmatprep.subr.mxu0 0.0
  %1455 = vmatpush1.msra.mxu0 0.0
  %1456 = vmatprep.subr.mxu0 0.0
  %1457 = vmatpush1.msra.mxu0 0.0
  %1458 = vmatprep.subr.mxu0 0.0
  %1459 = vmatpush1.msra.mxu0 0.0
  %1460 = vmatprep.subr.mxu0 0.0
  %1461 = vmatpush1.msra.mxu0 0.0
  %1462 = vmatprep.subr.mxu0 0.0
  %1463 = vmatpush1.msra.mxu0 0.0
  %1464 = vmatprep.subr.mxu0 %v1438
  %1465 = vmatpush1.msra.mxu0 %v1435
  %1466 = vmatprep.subr.mxu0 %v1359
  %1467 = vmatpush1.msra.mxu0 %v1358
  %1468 = vmatprep.subr.mxu0 %v1357
  %1469 = vmatpush1.msra.mxu0 %v1356
  %1470 = vmatprep.subr.mxu0 %v1355
  %1471 = vmatpush1.msra.mxu0 %v1354
  %1472 = vmatprep.subr.mxu0 0.0
  %1473 = vmatpush2.msra.mxu0 0.0
  %1474 = vmatprep.subr.mxu0 0.0
  %1475 = vmatpush2.msra.mxu0 0.0
  %1476 = vmatprep.subr.mxu0 0.0
  %1477 = vmatpush2.msra.mxu0 0.0
  %1478 = vmatprep.subr.mxu0 0.0
  %1479 = vmatpush2.msra.mxu0 0.0
  %1480 = vmatprep.subr.mxu0 0.0
  %1481 = vmatpush2.msra.mxu0 0.0
  %1482 = vmatprep.subr.mxu0 0.0
  %1483 = vmatpush2.msra.mxu0 0.0
  %1484 = vmatprep.subr.mxu0 0.0
  %1485 = vmatpush2.msra.mxu0 0.0
  %1486 = vmatprep.subr.mxu0 0.0
  %1487 = vmatpush2.msra.mxu0 0.0
  %1488 = vmatprep.subr.mxu0 0.0
  %1489 = vmatpush2.msra.mxu0 0.0
  %1490 = vmatprep.subr.mxu0 0.0
  %1491 = vmatpush2.msra.mxu0 0.0
  %1492 = vmatprep.subr.mxu0 0.0
  %1493 = vmatpush2.msra.mxu0 0.0
  %1494 = vmatprep.subr.mxu0 0.0
  %1495 = vmatpush2.msra.mxu0 0.0
  %1496 = vmatprep.subr.mxu0 0.0
  %1497 = vmatpush2.msra.mxu0 0.0
  %1498 = vmatprep.subr.mxu0 0.0
  %1499 = vmatpush2.msra.mxu0 0.0
  %1500 = vmatprep.subr.mxu0 0.0
  %1501 = vmatpush2.msra.mxu0 0.0
  %1502 = vmatprep.subr.mxu0 0.0
  %1503 = vmatpush2.msra.mxu0 0.0
  %1504 = vmatprep.mubr.f32.mxu0 0.0
  %1505 = vmatmul.mubr.f32.gmra.mxu0 %v1363
  %v1506 = vpop.f32.mrf.mxu0
  %v1507 = vadd.f32 0.0, %v1506
  %v1508 = vpop.f32.mrf.mxu0
  %v1509 = vadd.f32 0.0, %v1508
  %1510 = vmatprep.mubr.f32.mxu0 0.0
  %1511 = vmatmul.mubr.f32.gmra.mxu0 %v1366
  %v1512 = vpop.f32.mrf.mxu0
  %v1513 = vadd.f32 0.0, %v1512
  %v1514 = vpop.f32.mrf.mxu0
  %v1515 = vadd.f32 0.0, %v1514
  %1516 = vmatprep.mubr.f32.mxu0 0.0
  %1517 = vmatmul.mubr.f32.gmra.mxu0 %v1369
  %v1518 = vpop.f32.mrf.mxu0
  %v1519 = vadd.f32 0.0, %v1518
  %v1520 = vpop.f32.mrf.mxu0
  %v1521 = vadd.f32 0.0, %v1520
  %1522 = vmatprep.mubr.f32.mxu0 0.0
  %1523 = vmatmul.mubr.f32.gmra.mxu0 %v1372
  %v1524 = vpop.f32.mrf.mxu0
  %v1525 = vadd.f32 0.0, %v1524
  %v1526 = vpop.f32.mrf.mxu0
  %v1527 = vadd.f32 0.0, %v1526
  %1528 = vmatprep.mubr.f32.mxu0 0.0
  %1529 = vmatmul.mubr.f32.gmra.mxu0 %v1375
  %v1530 = vpop.f32.mrf.mxu0
  %v1531 = vadd.f32 0.0, %v1530
  %v1532 = vpop.f32.mrf.mxu0
  %v1533 = vadd.f32 0.0, %v1532
  %1534 = vmatprep.mubr.f32.mxu0 0.0
  %1535 = vmatmul.mubr.f32.gmra.mxu0 %v1378
  %v1536 = vpop.f32.mrf.mxu0
  %v1537 = vadd.f32 0.0, %v1536
  %v1538 = vpop.f32.mrf.mxu0
  %v1539 = vadd.f32 0.0, %v1538
  %1540 = vmatprep.mubr.f32.mxu0 0.0
  %1541 = vmatmul.mubr.f32.gmra.mxu0 %v1381
  %v1542 = vpop.f32.mrf.mxu0
  %v1543 = vadd.f32 0.0, %v1542
  %v1544 = vpop.f32.mrf.mxu0
  %v1545 = vadd.f32 0.0, %v1544
  %1546 = vmatprep.mubr.f32.mxu0 0.0
  %1547 = vmatmul.mubr.f32.gmra.mxu0 %v1384
  %v1548 = vpop.f32.mrf.mxu0
  %v1549 = vadd.f32 0.0, %v1548
  %v1550 = vpop.f32.mrf.mxu0
  %v1551 = vadd.f32 0.0, %v1550
  %1552 = vmatprep.mubr.f32.mxu0 0.0
  %1553 = vmatmul.mubr.f32.gmra.mxu0 %v1387
  %v1554 = vpop.f32.mrf.mxu0
  %v1555 = vadd.f32 0.0, %v1554
  %v1556 = vpop.f32.mrf.mxu0
  %v1557 = vadd.f32 0.0, %v1556
  %1558 = vmatprep.mubr.f32.mxu0 0.0
  %1559 = vmatmul.mubr.f32.gmra.mxu0 %v1390
  %v1560 = vpop.f32.mrf.mxu0
  %v1561 = vadd.f32 0.0, %v1560
  %v1562 = vpop.f32.mrf.mxu0
  %v1563 = vadd.f32 0.0, %v1562
  %1564 = vmatprep.mubr.f32.mxu0 0.0
  %1565 = vmatmul.mubr.f32.gmra.mxu0 %v1393
  %v1566 = vpop.f32.mrf.mxu0
  %v1567 = vadd.f32 0.0, %v1566
  %v1568 = vpop.f32.mrf.mxu0
  %v1569 = vadd.f32 0.0, %v1568
  %1570 = vmatprep.mubr.f32.mxu0 0.0
  %1571 = vmatmul.mubr.f32.gmra.mxu0 %v1396
  %v1572 = vpop.f32.mrf.mxu0
  %v1573 = vadd.f32 0.0, %v1572
  %v1574 = vpop.f32.mrf.mxu0
  %v1575 = vadd.f32 0.0, %v1574
  %1576 = vmatprep.mubr.f32.mxu0 0.0
  %1577 = vmatmul.mubr.f32.gmra.mxu0 %v1399
  %v1578 = vpop.f32.mrf.mxu0
  %v1579 = vadd.f32 0.0, %v1578
  %v1580 = vpop.f32.mrf.mxu0
  %v1581 = vadd.f32 0.0, %v1580
  %1582 = vmatprep.mubr.f32.mxu0 0.0
  %1583 = vmatmul.mubr.f32.gmra.mxu0 %v1402
  %v1584 = vpop.f32.mrf.mxu0
  %v1585 = vadd.f32 0.0, %v1584
  %v1586 = vpop.f32.mrf.mxu0
  %v1587 = vadd.f32 0.0, %v1586
  %1588 = vmatprep.mubr.f32.mxu0 0.0
  %1589 = vmatmul.mubr.f32.gmra.mxu0 %v1405
  %v1590 = vpop.f32.mrf.mxu0
  %v1591 = vadd.f32 0.0, %v1590
  %v1592 = vpop.f32.mrf.mxu0
  %v1593 = vadd.f32 0.0, %v1592
  %1594 = vmatprep.mubr.f32.mxu0 0.0
  %1595 = vmatmul.mubr.f32.gmra.mxu0 %v1408
  %v1596 = vpop.f32.mrf.mxu0
  %v1597 = vadd.f32 0.0, %v1596
  %v1598 = vpop.f32.mrf.mxu0
  %v1599 = vadd.f32 0.0, %v1598
  %1600 = vmatprep.mubr.f32.mxu0 0.0
  %1601 = vmatmul.mubr.f32.gmra.mxu0 %v1411
  %v1602 = vpop.f32.mrf.mxu0
  %v1603 = vadd.f32 0.0, %v1602
  %v1604 = vpop.f32.mrf.mxu0
  %v1605 = vadd.f32 0.0, %v1604
  %1606 = vmatprep.mubr.f32.mxu0 0.0
  %1607 = vmatmul.mubr.f32.gmra.mxu0 %v1414
  %v1608 = vpop.f32.mrf.mxu0
  %v1609 = vadd.f32 0.0, %v1608
  %v1610 = vpop.f32.mrf.mxu0
  %v1611 = vadd.f32 0.0, %v1610
  %1612 = vmatprep.mubr.f32.mxu0 0.0
  %1613 = vmatmul.mubr.f32.gmra.mxu0 %v1417
  %v1614 = vpop.f32.mrf.mxu0
  %v1615 = vadd.f32 0.0, %v1614
  %v1616 = vpop.f32.mrf.mxu0
  %v1617 = vadd.f32 0.0, %v1616
  %1618 = vmatprep.mubr.f32.mxu0 0.0
  %1619 = vmatmul.mubr.f32.gmra.mxu0 %v1420
  %v1620 = vpop.f32.mrf.mxu0
  %v1621 = vadd.f32 0.0, %v1620
  %v1622 = vpop.f32.mrf.mxu0
  %v1623 = vadd.f32 0.0, %v1622
  %1624 = vmatprep.mubr.f32.mxu0 0.0
  %1625 = vmatmul.mubr.f32.gmra.mxu0 %v1423
  %v1626 = vpop.f32.mrf.mxu0
  %v1627 = vadd.f32 0.0, %v1626
  %v1628 = vpop.f32.mrf.mxu0
  %v1629 = vadd.f32 0.0, %v1628
  %1630 = vmatprep.mubr.f32.mxu0 0.0
  %1631 = vmatmul.mubr.f32.gmra.mxu0 %v1426
  %v1632 = vpop.f32.mrf.mxu0
  %v1633 = vadd.f32 0.0, %v1632
  %v1634 = vpop.f32.mrf.mxu0
  %v1635 = vadd.f32 0.0, %v1634
  %1636 = vmatprep.mubr.f32.mxu0 0.0
  %1637 = vmatmul.mubr.f32.gmra.mxu0 %v1429
  %v1638 = vpop.f32.mrf.mxu0
  %v1639 = vadd.f32 0.0, %v1638
  %v1640 = vpop.f32.mrf.mxu0
  %v1641 = vadd.f32 0.0, %v1640
  %1642 = vmatprep.mubr.f32.mxu0 0.0
  %1643 = vmatmul.mubr.f32.gmra.mxu0 %v1432
  %v1644 = vpop.f32.mrf.mxu0
  %v1645 = vadd.f32 0.0, %v1644
  %v1646 = vpop.f32.mrf.mxu0
  %v1647 = vadd.f32 0.0, %v1646
  %1648 = vdwg.mxu0
  %v1649 = vadd.f32 %v1281, %v1507
  %v1650 = vadd.f32 %v1282, %v1509
  %v1651 = vadd.f32 %v1283, %v1513
  %v1652 = vadd.f32 %v1284, %v1515
  %v1653 = vadd.f32 %v1285, %v1519
  %v1654 = vadd.f32 %v1286, %v1521
  %v1655 = vadd.f32 %v1287, %v1525
  %v1656 = vadd.f32 %v1288, %v1527
  %v1657 = vadd.f32 %v1289, %v1531
  %v1658 = vadd.f32 %v1290, %v1533
  %v1659 = vadd.f32 %v1291, %v1537
  %v1660 = vadd.f32 %v1292, %v1539
  %v1661 = vadd.f32 %v1293, %v1543
  %v1662 = vadd.f32 %v1294, %v1545
  %v1663 = vadd.f32 %v1295, %v1549
  %v1664 = vadd.f32 %v1296, %v1551
  %v1665 = vadd.f32 %v1297, %v1555
  %v1666 = vadd.f32 %v1298, %v1557
  %v1667 = vadd.f32 %v1299, %v1561
  %v1668 = vadd.f32 %v1300, %v1563
  %v1669 = vadd.f32 %v1301, %v1567
  %v1670 = vadd.f32 %v1302, %v1569
  %v1671 = vadd.f32 %v1303, %v1573
  %v1672 = vadd.f32 %v1304, %v1575
  %v1673 = vadd.f32 %v1305, %v1579
  %v1674 = vadd.f32 %v1306, %v1581
  %v1675 = vadd.f32 %v1307, %v1585
  %v1676 = vadd.f32 %v1308, %v1587
  %v1677 = vadd.f32 %v1309, %v1591
  %v1678 = vadd.f32 %v1310, %v1593
  %v1679 = vadd.f32 %v1311, %v1597
  %v1680 = vadd.f32 %v1312, %v1599
  %v1681 = vadd.f32 %v1313, %v1603
  %v1682 = vadd.f32 %v1314, %v1605
  %v1683 = vadd.f32 %v1315, %v1609
  %v1684 = vadd.f32 %v1316, %v1611
  %v1685 = vadd.f32 %v1317, %v1615
  %v1686 = vadd.f32 %v1318, %v1617
  %v1687 = vadd.f32 %v1319, %v1621
  %v1688 = vadd.f32 %v1320, %v1623
  %v1689 = vadd.f32 %v1321, %v1627
  %v1690 = vadd.f32 %v1322, %v1629
  %v1691 = vadd.f32 %v1323, %v1633
  %v1692 = vadd.f32 %v1324, %v1635
  %v1693 = vadd.f32 %v1325, %v1639
  %v1694 = vadd.f32 %v1326, %v1641
  %v1695 = vadd.f32 %v1327, %v1645
  %v1696 = vadd.f32 %v1328, %v1647
  %v1697 = vld [vmem:[%s2] sm:$0x3]
  %v1699 = vlaneseq
  %v1700 = vshrl.u32 %v1699, 7
  %v1701 = vsub.s32 0, %v1700
  %v1702 = vrot.slane %v1697, %v1701
  %v1703 = vlaneseq
  %v1704 = vshrl.u32 %v1703, 7
  %v1705 = vsub.s32 1, %v1704
  %v1706 = vrot.slane %v1697, %v1705
  %v1709 = vadd.f32 %v1649, %v1702
  %v1710 = vadd.f32 %v1650, %v1706
  %v1711 = vadd.f32 %v1651, %v1702
  %v1712 = vadd.f32 %v1652, %v1706
  %v1713 = vadd.f32 %v1653, %v1702
  %v1714 = vadd.f32 %v1654, %v1706
  %v1715 = vadd.f32 %v1655, %v1702
  %v1716 = vadd.f32 %v1656, %v1706
  %v1717 = vadd.f32 %v1657, %v1702
  %v1718 = vadd.f32 %v1658, %v1706
  %v1719 = vadd.f32 %v1659, %v1702
  %v1720 = vadd.f32 %v1660, %v1706
  %v1721 = vadd.f32 %v1661, %v1702
  %v1722 = vadd.f32 %v1662, %v1706
  %v1723 = vadd.f32 %v1663, %v1702
  %v1724 = vadd.f32 %v1664, %v1706
  %v1725 = vadd.f32 %v1665, %v1702
  %v1726 = vadd.f32 %v1666, %v1706
  %v1727 = vadd.f32 %v1667, %v1702
  %v1728 = vadd.f32 %v1668, %v1706
  %v1729 = vadd.f32 %v1669, %v1702
  %v1730 = vadd.f32 %v1670, %v1706
  %v1731 = vadd.f32 %v1671, %v1702
  %v1732 = vadd.f32 %v1672, %v1706
  %v1733 = vadd.f32 %v1673, %v1702
  %v1734 = vadd.f32 %v1674, %v1706
  %v1735 = vadd.f32 %v1675, %v1702
  %v1736 = vadd.f32 %v1676, %v1706
  %v1737 = vadd.f32 %v1677, %v1702
  %v1738 = vadd.f32 %v1678, %v1706
  %v1739 = vadd.f32 %v1679, %v1702
  %v1740 = vadd.f32 %v1680, %v1706
  %v1741 = vadd.f32 %v1681, %v1702
  %v1742 = vadd.f32 %v1682, %v1706
  %v1743 = vadd.f32 %v1683, %v1702
  %v1744 = vadd.f32 %v1684, %v1706
  %v1745 = vadd.f32 %v1685, %v1702
  %v1746 = vadd.f32 %v1686, %v1706
  %v1747 = vadd.f32 %v1687, %v1702
  %v1748 = vadd.f32 %v1688, %v1706
  %v1749 = vadd.f32 %v1689, %v1702
  %v1750 = vadd.f32 %v1690, %v1706
  %v1751 = vadd.f32 %v1691, %v1702
  %v1752 = vadd.f32 %v1692, %v1706
  %v1753 = vadd.f32 %v1693, %v1702
  %v1754 = vadd.f32 %v1694, %v1706
  %v1755 = vadd.f32 %v1695, %v1702
  %v1756 = vadd.f32 %v1696, %v1706
  %v1757 = vmax.f32 %v1709, %v1711
  %v1758 = vmax.f32 %v1710, %v1712
  %1759 = vst [vmem:[#allocation2] sm:$0xff] %v1757
  %vm1760 = vcmask 916480
  %1761 = vst.msk [vmem:[#allocation2 + $0x8] sm:$0xff] %vm1760, %v1758
  %v1762 = vmax.f32 %v1713, %v1715
  %v1763 = vmax.f32 %v1714, %v1716
  %1764 = vst [vmem:[#allocation2 + $0x10] sm:$0xff] %v1762
  %1765 = vst.msk [vmem:[#allocation2 + $0x18] sm:$0xff] %vm1760, %v1763
  %v1766 = vmax.f32 %v1717, %v1719
  %v1767 = vmax.f32 %v1718, %v1720
  %1768 = vst [vmem:[#allocation2 + $0x20] sm:$0xff] %v1766
  %1769 = vst.msk [vmem:[#allocation2 + $0x28] sm:$0xff] %vm1760, %v1767
  %v1770 = vmax.f32 %v1721, %v1723
  %v1771 = vmax.f32 %v1722, %v1724
  %1772 = vst [vmem:[#allocation2 + $0x30] sm:$0xff] %v1770
  %1773 = vst.msk [vmem:[#allocation2 + $0x38] sm:$0xff] %vm1760, %v1771
  %v1774 = vmax.f32 %v1725, %v1727
  %v1775 = vmax.f32 %v1726, %v1728
  %1776 = vst [vmem:[#allocation2 + $0x40] sm:$0xff] %v1774
  %1777 = vst.msk [vmem:[#allocation2 + $0x48] sm:$0xff] %vm1760, %v1775
  %v1778 = vmax.f32 %v1729, %v1731
  %v1779 = vmax.f32 %v1730, %v1732
  %1780 = vst [vmem:[#allocation2 + $0x50] sm:$0xff] %v1778
  %1781 = vst.msk [vmem:[#allocation2 + $0x58] sm:$0xff] %vm1760, %v1779
  %v1782 = vmax.f32 %v1733, %v1735
  %v1783 = vmax.f32 %v1734, %v1736
  %1784 = vst [vmem:[#allocation2 + $0x60] sm:$0xff] %v1782
  %1785 = vst.msk [vmem:[#allocation2 + $0x68] sm:$0xff] %vm1760, %v1783
  %v1786 = vmax.f32 %v1737, %v1739
  %v1787 = vmax.f32 %v1738, %v1740
  %1788 = vst [vmem:[#allocation2 + $0x70] sm:$0xff] %v1786
  %1789 = vst.msk [vmem:[#allocation2 + $0x78] sm:$0xff] %vm1760, %v1787
  %v1790 = vmax.f32 %v1741, %v1743
  %v1791 = vmax.f32 %v1742, %v1744
  %1792 = vst [vmem:[#allocation2 + $0x80] sm:$0xff] %v1790
  %1793 = vst.msk [vmem:[#allocation2 + $0x88] sm:$0xff] %vm1760, %v1791
  %v1794 = vmax.f32 %v1745, %v1747
  %v1795 = vmax.f32 %v1746, %v1748
  %1796 = vst [vmem:[#allocation2 + $0x90] sm:$0xff] %v1794
  %1797 = vst.msk [vmem:[#allocation2 + $0x98] sm:$0xff] %vm1760, %v1795
  %v1798 = vmax.f32 %v1749, %v1751
  %v1799 = vmax.f32 %v1750, %v1752
  %1800 = vst [vmem:[#allocation2 + $0xa0] sm:$0xff] %v1798
  %1801 = vst.msk [vmem:[#allocation2 + $0xa8] sm:$0xff] %vm1760, %v1799
  %v1802 = vmax.f32 %v1753, %v1755
  %v1803 = vmax.f32 %v1754, %v1756
  %1804 = vst [vmem:[#allocation2 + $0xb0] sm:$0xff] %v1802
  %1805 = vst.msk [vmem:[#allocation2 + $0xb8] sm:$0xff] %vm1760, %v1803
  %v1806 = vld [vmem:[#allocation2] sm:$0xff]
  %v1807 = vld [vmem:[#allocation2 + $0x8] sm:$0xff]
  %v1808 = vld [vmem:[#allocation2 + $0x10] sm:$0xff]
  %v1809 = vld [vmem:[#allocation2 + $0x18] sm:$0xff]
  %v1810 = vld [vmem:[#allocation2 + $0x20] sm:$0xff]
  %v1811 = vld [vmem:[#allocation2 + $0x28] sm:$0xff]
  %v1812 = vld [vmem:[#allocation2 + $0x30] sm:$0xff]
  %v1813 = vld [vmem:[#allocation2 + $0x38] sm:$0xff]
  %v1814 = vld [vmem:[#allocation2 + $0x40] sm:$0xff]
  %v1815 = vld [vmem:[#allocation2 + $0x48] sm:$0xff]
  %v1816 = vld [vmem:[#allocation2 + $0x50] sm:$0xff]
  %v1817 = vld [vmem:[#allocation2 + $0x58] sm:$0xff]
  %v1818 = vld [vmem:[#allocation2 + $0x60] sm:$0xff]
  %v1819 = vld [vmem:[#allocation2 + $0x68] sm:$0xff]
  %v1820 = vld [vmem:[#allocation2 + $0x70] sm:$0xff]
  %v1821 = vld [vmem:[#allocation2 + $0x78] sm:$0xff]
  %v1822 = vld [vmem:[#allocation2 + $0x80] sm:$0xff]
  %v1823 = vld [vmem:[#allocation2 + $0x88] sm:$0xff]
  %v1824 = vld [vmem:[#allocation2 + $0x90] sm:$0xff]
  %v1825 = vld [vmem:[#allocation2 + $0x98] sm:$0xff]
  %v1826 = vld [vmem:[#allocation2 + $0xa0] sm:$0xff]
  %v1827 = vld [vmem:[#allocation2 + $0xa8] sm:$0xff]
  %v1828 = vld [vmem:[#allocation2 + $0xb0] sm:$0xff]
  %v1829 = vld [vmem:[#allocation2 + $0xb8] sm:$0xff]
  %v1830 = vld [vmem:[%s5] sm:$0xff]
  %v1831 = vld [vmem:[%s5 + $0x8] sm:$0xff]
  %v1832 = vld [vmem:[%s5 + $0x10] sm:$0xff]
  %v1833 = vld [vmem:[%s5 + $0x18] sm:$0xff]
  %v1834 = vld [vmem:[%s5 + $0x20] sm:$0xff]
  %v1835 = vld [vmem:[%s5 + $0x28] sm:$0xff]
  %v1836 = vld [vmem:[%s5 + $0x30] sm:$0xff]
  %v1837 = vld [vmem:[%s5 + $0x38] sm:$0xff]
  %v1838 = vld [vmem:[%s5 + $0x40] sm:$0xff]
  %v1839 = vld [vmem:[%s5 + $0x48] sm:$0xff]
  %v1840 = vld [vmem:[%s5 + $0x50] sm:$0xff]
  %v1841 = vld [vmem:[%s5 + $0x58] sm:$0xff]
  %v1842 = vld [vmem:[%s5 + $0x60] sm:$0xff]
  %v1843 = vld [vmem:[%s5 + $0x68] sm:$0xff]
  %v1844 = vld [vmem:[%s5 + $0x70] sm:$0xff]
  %v1845 = vld [vmem:[%s5 + $0x78] sm:$0xff]
  %v1846 = vld [vmem:[%s5 + $0x80] sm:$0xff]
  %v1847 = vld [vmem:[%s5 + $0x88] sm:$0xff]
  %v1848 = vld [vmem:[%s5 + $0x90] sm:$0xff]
  %v1849 = vld [vmem:[%s5 + $0x98] sm:$0xff]
  %v1850 = vld [vmem:[%s5 + $0xa0] sm:$0xff]
  %v1851 = vld [vmem:[%s5 + $0xa8] sm:$0xff]
  %v1852 = vld [vmem:[%s5 + $0xb0] sm:$0xff]
  %v1853 = vld [vmem:[%s5 + $0xb8] sm:$0xff]
  %v1854 = vld [vmem:[%s5 + $0xc0] sm:$0xff]
  %v1855 = vld [vmem:[%s5 + $0xc8] sm:$0xff]
  %v1856 = vld [vmem:[%s5 + $0xd0] sm:$0xff]
  %v1857 = vld [vmem:[%s5 + $0xd8] sm:$0xff]
  %v1858 = vld [vmem:[%s5 + $0xe0] sm:$0xff]
  %v1859 = vld [vmem:[%s5 + $0xe8] sm:$0xff]
  %v1861 = vsel %vm1760, %v1807, 0
  %v1864 = vsel %vm1760, %v1809, 0
  %v1867 = vsel %vm1760, %v1811, 0
  %v1870 = vsel %vm1760, %v1813, 0
  %v1873 = vsel %vm1760, %v1815, 0
  %v1876 = vsel %vm1760, %v1817, 0
  %v1879 = vsel %vm1760, %v1819, 0
  %v1882 = vsel %vm1760, %v1821, 0
  %v1885 = vsel %vm1760, %v1823, 0
  %v1888 = vsel %vm1760, %v1825, 0
  %v1891 = vsel %vm1760, %v1827, 0
  %v1894 = vsel %vm1760, %v1829, 0
  %1896 = vmatprep.subr.mxu0 0.0
  %1897 = vmatpush1.msra.mxu0 %v1845
  %1898 = vmatprep.subr.mxu0 0.0
  %1899 = vmatpush1.msra.mxu0 %v1844
  %1900 = vmatprep.subr.mxu0 0.0
  %1901 = vmatpush1.msra.mxu0 %v1843
  %1902 = vmatprep.subr.mxu0 0.0
  %1903 = vmatpush1.msra.mxu0 %v1842
  %1904 = vmatprep.subr.mxu0 0.0
  %1905 = vmatpush1.msra.mxu0 %v1841
  %1906 = vmatprep.subr.mxu0 0.0
  %1907 = vmatpush1.msra.mxu0 %v1840
  %1908 = vmatprep.subr.mxu0 0.0
  %1909 = vmatpush1.msra.mxu0 %v1839
  %1910 = vmatprep.subr.mxu0 0.0
  %1911 = vmatpush1.msra.mxu0 %v1838
  %1912 = vmatprep.subr.mxu0 0.0
  %1913 = vmatpush1.msra.mxu0 %v1837
  %1914 = vmatprep.subr.mxu0 0.0
  %1915 = vmatpush1.msra.mxu0 %v1836
  %1916 = vmatprep.subr.mxu0 0.0
  %1917 = vmatpush1.msra.mxu0 %v1835
  %1918 = vmatprep.subr.mxu0 0.0
  %1919 = vmatpush1.msra.mxu0 %v1834
  %1920 = vmatprep.subr.mxu0 0.0
  %1921 = vmatpush1.msra.mxu0 %v1833
  %1922 = vmatprep.subr.mxu0 0.0
  %1923 = vmatpush1.msra.mxu0 %v1832
  %1924 = vmatprep.subr.mxu0 0.0
  %1925 = vmatpush1.msra.mxu0 %v1831
  %1926 = vmatprep.subr.mxu0 0.0
  %1927 = vmatpush1.msra.mxu0 %v1830
  %1928 = vmatprep.subr.mxu0 0.0
  %1929 = vmatpush2.msra.mxu0 0.0
  %1930 = vmatprep.subr.mxu0 0.0
  %1931 = vmatpush2.msra.mxu0 0.0
  %1932 = vmatprep.subr.mxu0 0.0
  %1933 = vmatpush2.msra.mxu0 %v1859
  %1934 = vmatprep.subr.mxu0 0.0
  %1935 = vmatpush2.msra.mxu0 %v1858
  %1936 = vmatprep.subr.mxu0 0.0
  %1937 = vmatpush2.msra.mxu0 %v1857
  %1938 = vmatprep.subr.mxu0 0.0
  %1939 = vmatpush2.msra.mxu0 %v1856
  %1940 = vmatprep.subr.mxu0 0.0
  %1941 = vmatpush2.msra.mxu0 %v1855
  %1942 = vmatprep.subr.mxu0 0.0
  %1943 = vmatpush2.msra.mxu0 %v1854
  %1944 = vmatprep.subr.mxu0 0.0
  %1945 = vmatpush2.msra.mxu0 %v1853
  %1946 = vmatprep.subr.mxu0 0.0
  %1947 = vmatpush2.msra.mxu0 %v1852
  %1948 = vmatprep.subr.mxu0 0.0
  %1949 = vmatpush2.msra.mxu0 %v1851
  %1950 = vmatprep.subr.mxu0 0.0
  %1951 = vmatpush2.msra.mxu0 %v1850
  %1952 = vmatprep.subr.mxu0 0.0
  %1953 = vmatpush2.msra.mxu0 %v1849
  %1954 = vmatprep.subr.mxu0 0.0
  %1955 = vmatpush2.msra.mxu0 %v1848
  %1956 = vmatprep.subr.mxu0 0.0
  %1957 = vmatpush2.msra.mxu0 %v1847
  %1958 = vmatprep.subr.mxu0 0.0
  %1959 = vmatpush2.msra.mxu0 %v1846
  %1960 = vmatprep.mubr.f32.mxu0 %v1861
  %1961 = vmatmul.mubr.f32.gmra.mxu0 %v1806
  %v1962 = vpop.f32.mrf.mxu0
  %v1963 = vadd.f32 0.0, %v1962
  %v1964 = vpop.f32.mrf.mxu0
  %1965 = vmatprep.mubr.f32.mxu0 %v1864
  %1966 = vmatmul.mubr.f32.gmra.mxu0 %v1808
  %v1967 = vpop.f32.mrf.mxu0
  %v1968 = vadd.f32 0.0, %v1967
  %v1969 = vpop.f32.mrf.mxu0
  %1970 = vmatprep.mubr.f32.mxu0 %v1867
  %1971 = vmatmul.mubr.f32.gmra.mxu0 %v1810
  %v1972 = vpop.f32.mrf.mxu0
  %v1973 = vadd.f32 0.0, %v1972
  %v1974 = vpop.f32.mrf.mxu0
  %1975 = vmatprep.mubr.f32.mxu0 %v1870
  %1976 = vmatmul.mubr.f32.gmra.mxu0 %v1812
  %v1977 = vpop.f32.mrf.mxu0
  %v1978 = vadd.f32 0.0, %v1977
  %v1979 = vpop.f32.mrf.mxu0
  %1980 = vmatprep.mubr.f32.mxu0 %v1873
  %1981 = vmatmul.mubr.f32.gmra.mxu0 %v1814
  %v1982 = vpop.f32.mrf.mxu0
  %v1983 = vadd.f32 0.0, %v1982
  %v1984 = vpop.f32.mrf.mxu0
  %1985 = vmatprep.mubr.f32.mxu0 %v1876
  %1986 = vmatmul.mubr.f32.gmra.mxu0 %v1816
  %v1987 = vpop.f32.mrf.mxu0
  %v1988 = vadd.f32 0.0, %v1987
  %v1989 = vpop.f32.mrf.mxu0
  %1990 = vmatprep.mubr.f32.mxu0 %v1879
  %1991 = vmatmul.mubr.f32.gmra.mxu0 %v1818
  %v1992 = vpop.f32.mrf.mxu0
  %v1993 = vadd.f32 0.0, %v1992
  %v1994 = vpop.f32.mrf.mxu0
  %1995 = vmatprep.mubr.f32.mxu0 %v1882
  %1996 = vmatmul.mubr.f32.gmra.mxu0 %v1820
  %v1997 = vpop.f32.mrf.mxu0
  %v1998 = vadd.f32 0.0, %v1997
  %v1999 = vpop.f32.mrf.mxu0
  %2000 = vmatprep.mubr.f32.mxu0 %v1885
  %2001 = vmatmul.mubr.f32.gmra.mxu0 %v1822
  %v2002 = vpop.f32.mrf.mxu0
  %v2003 = vadd.f32 0.0, %v2002
  %v2004 = vpop.f32.mrf.mxu0
  %2005 = vmatprep.mubr.f32.mxu0 %v1888
  %2006 = vmatmul.mubr.f32.gmra.mxu0 %v1824
  %v2007 = vpop.f32.mrf.mxu0
  %v2008 = vadd.f32 0.0, %v2007
  %v2009 = vpop.f32.mrf.mxu0
  %2010 = vmatprep.mubr.f32.mxu0 %v1891
  %2011 = vmatmul.mubr.f32.gmra.mxu0 %v1826
  %v2012 = vpop.f32.mrf.mxu0
  %v2013 = vadd.f32 0.0, %v2012
  %v2014 = vpop.f32.mrf.mxu0
  %2015 = vmatprep.mubr.f32.mxu0 %v1894
  %2016 = vmatmul.mubr.f32.gmra.mxu0 %v1828
  %v2017 = vpop.f32.mrf.mxu0
  %v2018 = vadd.f32 0.0, %v2017
  %v2019 = vpop.f32.mrf.mxu0
  %2020 = vdwg.mxu0
  %v2021 = vld [vmem:[%s6] sm:$0xff]
  %v2022 = vld [vmem:[%s6 + $0x8] sm:$0xff]
  %v2023 = vld [vmem:[%s6 + $0x10] sm:$0xff]
  %v2024 = vld [vmem:[%s6 + $0x18] sm:$0xff]
  %v2025 = vld [vmem:[%s6 + $0x20] sm:$0xff]
  %v2026 = vld [vmem:[%s6 + $0x28] sm:$0xff]
  %v2027 = vld [vmem:[%s6 + $0x30] sm:$0xff]
  %v2028 = vld [vmem:[%s6 + $0x38] sm:$0xff]
  %v2029 = vld [vmem:[%s6 + $0x40] sm:$0xff]
  %v2030 = vld [vmem:[%s6 + $0x48] sm:$0xff]
  %v2031 = vld [vmem:[%s6 + $0x50] sm:$0xff]
  %v2032 = vld [vmem:[%s6 + $0x58] sm:$0xff]
  %v2033 = vld [vmem:[%s6 + $0x60] sm:$0xff]
  %v2034 = vld [vmem:[%s6 + $0x68] sm:$0xff]
  %v2035 = vld [vmem:[%s6 + $0x70] sm:$0xff]
  %v2036 = vld [vmem:[%s6 + $0x78] sm:$0xff]
  %v2037 = vld [vmem:[%s6 + $0x80] sm:$0xff]
  %v2038 = vld [vmem:[%s6 + $0x88] sm:$0xff]
  %v2039 = vld [vmem:[%s6 + $0x90] sm:$0xff]
  %v2040 = vld [vmem:[%s6 + $0x98] sm:$0xff]
  %v2041 = vld [vmem:[%s6 + $0xa0] sm:$0xff]
  %v2042 = vld [vmem:[%s6 + $0xa8] sm:$0xff]
  %v2043 = vld [vmem:[%s6 + $0xb0] sm:$0xff]
  %v2044 = vld [vmem:[%s6 + $0xb8] sm:$0xff]
  %v2045 = vld [vmem:[%s6 + $0xc0] sm:$0xff]
  %v2046 = vld [vmem:[%s6 + $0xc8] sm:$0xff]
  %v2047 = vld [vmem:[%s6 + $0xd0] sm:$0xff]
  %v2048 = vld [vmem:[%s6 + $0xd8] sm:$0xff]
  %v2049 = vld [vmem:[%s6 + $0xe0] sm:$0xff]
  %v2050 = vld [vmem:[%s6 + $0xe8] sm:$0xff]
  %2051 = vmatprep.subr.mxu0 0.0
  %2052 = vmatpush1.msra.mxu0 %v2036
  %2053 = vmatprep.subr.mxu0 0.0
  %2054 = vmatpush1.msra.mxu0 %v2035
  %2055 = vmatprep.subr.mxu0 0.0
  %2056 = vmatpush1.msra.mxu0 %v2034
  %2057 = vmatprep.subr.mxu0 0.0
  %2058 = vmatpush1.msra.mxu0 %v2033
  %2059 = vmatprep.subr.mxu0 0.0
  %2060 = vmatpush1.msra.mxu0 %v2032
  %2061 = vmatprep.subr.mxu0 0.0
  %2062 = vmatpush1.msra.mxu0 %v2031
  %2063 = vmatprep.subr.mxu0 0.0
  %2064 = vmatpush1.msra.mxu0 %v2030
  %2065 = vmatprep.subr.mxu0 0.0
  %2066 = vmatpush1.msra.mxu0 %v2029
  %2067 = vmatprep.subr.mxu0 0.0
  %2068 = vmatpush1.msra.mxu0 %v2028
  %2069 = vmatprep.subr.mxu0 0.0
  %2070 = vmatpush1.msra.mxu0 %v2027
  %2071 = vmatprep.subr.mxu0 0.0
  %2072 = vmatpush1.msra.mxu0 %v2026
  %2073 = vmatprep.subr.mxu0 0.0
  %2074 = vmatpush1.msra.mxu0 %v2025
  %2075 = vmatprep.subr.mxu0 0.0
  %2076 = vmatpush1.msra.mxu0 %v2024
  %2077 = vmatprep.subr.mxu0 0.0
  %2078 = vmatpush1.msra.mxu0 %v2023
  %2079 = vmatprep.subr.mxu0 0.0
  %2080 = vmatpush1.msra.mxu0 %v2022
  %2081 = vmatprep.subr.mxu0 0.0
  %2082 = vmatpush1.msra.mxu0 %v2021
  %2083 = vmatprep.subr.mxu0 0.0
  %2084 = vmatpush2.msra.mxu0 0.0
  %2085 = vmatprep.subr.mxu0 0.0
  %2086 = vmatpush2.msra.mxu0 0.0
  %2087 = vmatprep.subr.mxu0 0.0
  %2088 = vmatpush2.msra.mxu0 %v2050
  %2089 = vmatprep.subr.mxu0 0.0
  %2090 = vmatpush2.msra.mxu0 %v2049
  %2091 = vmatprep.subr.mxu0 0.0
  %2092 = vmatpush2.msra.mxu0 %v2048
  %2093 = vmatprep.subr.mxu0 0.0
  %2094 = vmatpush2.msra.mxu0 %v2047
  %2095 = vmatprep.subr.mxu0 0.0
  %2096 = vmatpush2.msra.mxu0 %v2046
  %2097 = vmatprep.subr.mxu0 0.0
  %2098 = vmatpush2.msra.mxu0 %v2045
  %2099 = vmatprep.subr.mxu0 0.0
  %2100 = vmatpush2.msra.mxu0 %v2044
  %2101 = vmatprep.subr.mxu0 0.0
  %2102 = vmatpush2.msra.mxu0 %v2043
  %2103 = vmatprep.subr.mxu0 0.0
  %2104 = vmatpush2.msra.mxu0 %v2042
  %2105 = vmatprep.subr.mxu0 0.0
  %2106 = vmatpush2.msra.mxu0 %v2041
  %2107 = vmatprep.subr.mxu0 0.0
  %2108 = vmatpush2.msra.mxu0 %v2040
  %2109 = vmatprep.subr.mxu0 0.0
  %2110 = vmatpush2.msra.mxu0 %v2039
  %2111 = vmatprep.subr.mxu0 0.0
  %2112 = vmatpush2.msra.mxu0 %v2038
  %2113 = vmatprep.subr.mxu0 0.0
  %2114 = vmatpush2.msra.mxu0 %v2037
  %2115 = vmatprep.mubr.f32.mxu0 %v1861
  %2116 = vmatmul.mubr.f32.gmra.mxu0 %v1806
  %v2117 = vpop.f32.mrf.mxu0
  %v2118 = vadd.f32 0.0, %v2117
  %v2119 = vpop.f32.mrf.mxu0
  %2120 = vmatprep.mubr.f32.mxu0 %v1864
  %2121 = vmatmul.mubr.f32.gmra.mxu0 %v1808
  %v2122 = vpop.f32.mrf.mxu0
  %v2123 = vadd.f32 0.0, %v2122
  %v2124 = vpop.f32.mrf.mxu0
  %2125 = vmatprep.mubr.f32.mxu0 %v1867
  %2126 = vmatmul.mubr.f32.gmra.mxu0 %v1810
  %v2127 = vpop.f32.mrf.mxu0
  %v2128 = vadd.f32 0.0, %v2127
  %v2129 = vpop.f32.mrf.mxu0
  %2130 = vmatprep.mubr.f32.mxu0 %v1870
  %2131 = vmatmul.mubr.f32.gmra.mxu0 %v1812
  %v2132 = vpop.f32.mrf.mxu0
  %v2133 = vadd.f32 0.0, %v2132
  %v2134 = vpop.f32.mrf.mxu0
  %2135 = vmatprep.mubr.f32.mxu0 %v1873
  %2136 = vmatmul.mubr.f32.gmra.mxu0 %v1814
  %v2137 = vpop.f32.mrf.mxu0
  %v2138 = vadd.f32 0.0, %v2137
  %v2139 = vpop.f32.mrf.mxu0
  %2140 = vmatprep.mubr.f32.mxu0 %v1876
  %2141 = vmatmul.mubr.f32.gmra.mxu0 %v1816
  %v2142 = vpop.f32.mrf.mxu0
  %v2143 = vadd.f32 0.0, %v2142
  %v2144 = vpop.f32.mrf.mxu0
  %2145 = vmatprep.mubr.f32.mxu0 %v1879
  %2146 = vmatmul.mubr.f32.gmra.mxu0 %v1818
  %v2147 = vpop.f32.mrf.mxu0
  %v2148 = vadd.f32 0.0, %v2147
  %v2149 = vpop.f32.mrf.mxu0
  %2150 = vmatprep.mubr.f32.mxu0 %v1882
  %2151 = vmatmul.mubr.f32.gmra.mxu0 %v1820
  %v2152 = vpop.f32.mrf.mxu0
  %v2153 = vadd.f32 0.0, %v2152
  %v2154 = vpop.f32.mrf.mxu0
  %2155 = vmatprep.mubr.f32.mxu0 %v1885
  %2156 = vmatmul.mubr.f32.gmra.mxu0 %v1822
  %v2157 = vpop.f32.mrf.mxu0
  %v2158 = vadd.f32 0.0, %v2157
  %v2159 = vpop.f32.mrf.mxu0
  %2160 = vmatprep.mubr.f32.mxu0 %v1888
  %2161 = vmatmul.mubr.f32.gmra.mxu0 %v1824
  %v2162 = vpop.f32.mrf.mxu0
  %v2163 = vadd.f32 0.0, %v2162
  %v2164 = vpop.f32.mrf.mxu0
  %2165 = vmatprep.mubr.f32.mxu0 %v1891
  %2166 = vmatmul.mubr.f32.gmra.mxu0 %v1826
  %v2167 = vpop.f32.mrf.mxu0
  %v2168 = vadd.f32 0.0, %v2167
  %v2169 = vpop.f32.mrf.mxu0
  %2170 = vmatprep.mubr.f32.mxu0 %v1894
  %2171 = vmatmul.mubr.f32.gmra.mxu0 %v1828
  %v2172 = vpop.f32.mrf.mxu0
  %v2173 = vadd.f32 0.0, %v2172
  %v2174 = vpop.f32.mrf.mxu0
  %2175 = vdwg.mxu0
  %v2176 = vmax.f32 %v1963, %v2118
  %v2177 = vmax.f32 %v1968, %v2123
  %v2178 = vmax.f32 %v1973, %v2128
  %v2179 = vmax.f32 %v1978, %v2133
  %v2180 = vmax.f32 %v1983, %v2138
  %v2181 = vmax.f32 %v1988, %v2143
  %v2182 = vmax.f32 %v1993, %v2148
  %v2183 = vmax.f32 %v1998, %v2153
  %v2184 = vmax.f32 %v2003, %v2158
  %v2185 = vmax.f32 %v2008, %v2163
  %v2186 = vmax.f32 %v2013, %v2168
  %v2187 = vmax.f32 %v2018, %v2173
  %v2188 = vmax.f32 %v2176, 0.0
  %v2189 = vmax.f32 %v2177, 0.0
  %v2190 = vmax.f32 %v2178, 0.0
  %v2191 = vmax.f32 %v2179, 0.0
  %v2192 = vmax.f32 %v2180, 0.0
  %v2193 = vmax.f32 %v2181, 0.0
  %v2194 = vmax.f32 %v2182, 0.0
  %v2195 = vmax.f32 %v2183, 0.0
  %v2196 = vmax.f32 %v2184, 0.0
  %v2197 = vmax.f32 %v2185, 0.0
  %v2198 = vmax.f32 %v2186, 0.0
  %v2199 = vmax.f32 %v2187, 0.0
  %v2200 = vld [vmem:[%s3] sm:$0xff]
  %v2201 = vld [vmem:[%s3 + $0x8] sm:$0xff]
  %v2202 = vld [vmem:[%s3 + $0x10] sm:$0xff]
  %v2203 = vld [vmem:[%s3 + $0x18] sm:$0xff]
  %v2204 = vld [vmem:[%s3 + $0x20] sm:$0xff]
  %v2205 = vld [vmem:[%s3 + $0x28] sm:$0xff]
  %v2206 = vld [vmem:[%s3 + $0x30] sm:$0xff]
  %v2207 = vld [vmem:[%s3 + $0x38] sm:$0xff]
  %v2208 = vld [vmem:[%s3 + $0x40] sm:$0xff]
  %v2209 = vld [vmem:[%s3 + $0x48] sm:$0xff]
  %v2210 = vld [vmem:[%s3 + $0x50] sm:$0xff]
  %v2211 = vld [vmem:[%s3 + $0x58] sm:$0xff]
  %v2212 = vld [vmem:[%s3 + $0x60] sm:$0xff]
  %v2213 = vld [vmem:[%s3 + $0x68] sm:$0xff]
  %v2214 = vld [vmem:[%s3 + $0x70] sm:$0xff]
  %v2215 = vld [vmem:[%s3 + $0x78] sm:$0xff]
  %v2216 = vld [vmem:[%s3 + $0x80] sm:$0xff]
  %v2217 = vld [vmem:[%s3 + $0x88] sm:$0xff]
  %v2218 = vld [vmem:[%s3 + $0x90] sm:$0xff]
  %v2219 = vld [vmem:[%s3 + $0x98] sm:$0xff]
  %v2220 = vld [vmem:[%s3 + $0xa0] sm:$0xff]
  %v2221 = vld [vmem:[%s3 + $0xa8] sm:$0xff]
  %v2222 = vld [vmem:[%s3 + $0xb0] sm:$0xff]
  %v2223 = vld [vmem:[%s3 + $0xb8] sm:$0xff]
  %v2224 = vld [vmem:[%s3 + $0xc0] sm:$0xff]
  %v2225 = vld [vmem:[%s3 + $0xc8] sm:$0xff]
  %v2226 = vld [vmem:[%s3 + $0xd0] sm:$0xff]
  %v2227 = vld [vmem:[%s3 + $0xd8] sm:$0xff]
  %v2228 = vld [vmem:[%s3 + $0xe0] sm:$0xff]
  %v2229 = vld [vmem:[%s3 + $0xe8] sm:$0xff]
  %s2230 = scalar_lea.vmem %s3, 240
  %v2231 = vld [vmem:[%s2230] sm:$0xff]
  %v2232 = vld [vmem:[%s2230 + $0x8] sm:$0xff]
  %v2233 = vld [vmem:[%s2230 + $0x10] sm:$0xff]
  %v2234 = vld [vmem:[%s2230 + $0x18] sm:$0xff]
  %v2235 = vld [vmem:[%s2230 + $0x20] sm:$0xff]
  %v2236 = vld [vmem:[%s2230 + $0x28] sm:$0xff]
  %v2237 = vld [vmem:[%s2230 + $0x30] sm:$0xff]
  %v2238 = vld [vmem:[%s2230 + $0x38] sm:$0xff]
  %v2239 = vld [vmem:[%s2230 + $0x40] sm:$0xff]
  %v2240 = vld [vmem:[%s2230 + $0x48] sm:$0xff]
  %v2241 = vld [vmem:[%s2230 + $0x50] sm:$0xff]
  %v2242 = vld [vmem:[%s2230 + $0x58] sm:$0xff]
  %v2243 = vld [vmem:[%s2230 + $0x60] sm:$0xff]
  %v2244 = vld [vmem:[%s2230 + $0x68] sm:$0xff]
  %v2245 = vld [vmem:[%s2230 + $0x70] sm:$0xff]
  %v2246 = vld [vmem:[%s2230 + $0x78] sm:$0xff]
  %v2247 = vld [vmem:[%s2230 + $0x80] sm:$0xff]
  %v2248 = vld [vmem:[%s2230 + $0x88] sm:$0xff]
  %v2249 = vld [vmem:[%s2230 + $0x90] sm:$0xff]
  %v2250 = vld [vmem:[%s2230 + $0x98] sm:$0xff]
  %v2251 = vld [vmem:[%s2230 + $0xa0] sm:$0xff]
  %v2252 = vld [vmem:[%s2230 + $0xa8] sm:$0xff]
  %v2253 = vld [vmem:[%s2230 + $0xb0] sm:$0xff]
  %v2254 = vld [vmem:[%s2230 + $0xb8] sm:$0xff]
  %v2255 = vld [vmem:[%s2230 + $0xc0] sm:$0xff]
  %v2256 = vld [vmem:[%s2230 + $0xc8] sm:$0xff]
  %v2257 = vld [vmem:[%s2230 + $0xd0] sm:$0xff]
  %v2258 = vld [vmem:[%s2230 + $0xd8] sm:$0xff]
  %v2259 = vld [vmem:[%s2230 + $0xe0] sm:$0xff]
  %v2260 = vld [vmem:[%s2230 + $0xe8] sm:$0xff]
  %vm2261 = vcmask 982016
  %v2263 = vsel %vm2261, %v2189, 0
  %v2266 = vsel %vm2261, %v2190, 0
  %v2269 = vsel %vm2261, %v2191, 0
  %v2272 = vsel %vm2261, %v2192, 0
  %v2275 = vsel %vm2261, %v2193, 0
  %v2278 = vsel %vm2261, %v2194, 0
  %v2281 = vsel %vm2261, %v2195, 0
  %v2284 = vsel %vm2261, %v2196, 0
  %2286 = vmatprep.subr.mxu0 0.0
  %2287 = vmatpush1.msra.mxu0 0.0
  %2288 = vmatprep.subr.mxu0 %v2260
  %2289 = vmatpush1.msra.mxu0 %v2259
  %2290 = vmatprep.subr.mxu0 %v2258
  %2291 = vmatpush1.msra.mxu0 %v2257
  %2292 = vmatprep.subr.mxu0 %v2256
  %2293 = vmatpush1.msra.mxu0 %v2255
  %2294 = vmatprep.subr.mxu0 %v2254
  %2295 = vmatpush1.msra.mxu0 %v2253
  %2296 = vmatprep.subr.mxu0 %v2252
  %2297 = vmatpush1.msra.mxu0 %v2251
  %2298 = vmatprep.subr.mxu0 %v2250
  %2299 = vmatpush1.msra.mxu0 %v2249
  %2300 = vmatprep.subr.mxu0 %v2248
  %2301 = vmatpush1.msra.mxu0 %v2247
  %2302 = vmatprep.subr.mxu0 %v2246
  %2303 = vmatpush1.msra.mxu0 %v2245
  %2304 = vmatprep.subr.mxu0 %v2244
  %2305 = vmatpush1.msra.mxu0 %v2243
  %2306 = vmatprep.subr.mxu0 %v2242
  %2307 = vmatpush1.msra.mxu0 %v2241
  %2308 = vmatprep.subr.mxu0 %v2240
  %2309 = vmatpush1.msra.mxu0 %v2239
  %2310 = vmatprep.subr.mxu0 %v2238
  %2311 = vmatpush1.msra.mxu0 %v2237
  %2312 = vmatprep.subr.mxu0 %v2236
  %2313 = vmatpush1.msra.mxu0 %v2235
  %2314 = vmatprep.subr.mxu0 %v2234
  %2315 = vmatpush1.msra.mxu0 %v2233
  %2316 = vmatprep.subr.mxu0 %v2232
  %2317 = vmatpush1.msra.mxu0 %v2231
  %2318 = vmatprep.subr.mxu0 0.0
  %2319 = vmatpush2.msra.mxu0 0.0
  %2320 = vmatprep.subr.mxu0 0.0
  %2321 = vmatpush2.msra.mxu0 0.0
  %2322 = vmatprep.subr.mxu0 0.0
  %2323 = vmatpush2.msra.mxu0 0.0
  %2324 = vmatprep.subr.mxu0 0.0
  %2325 = vmatpush2.msra.mxu0 0.0
  %2326 = vmatprep.subr.mxu0 0.0
  %2327 = vmatpush2.msra.mxu0 0.0
  %2328 = vmatprep.subr.mxu0 0.0
  %2329 = vmatpush2.msra.mxu0 0.0
  %2330 = vmatprep.subr.mxu0 0.0
  %2331 = vmatpush2.msra.mxu0 0.0
  %2332 = vmatprep.subr.mxu0 0.0
  %2333 = vmatpush2.msra.mxu0 0.0
  %2334 = vmatprep.subr.mxu0 0.0
  %2335 = vmatpush2.msra.mxu0 0.0
  %2336 = vmatprep.subr.mxu0 0.0
  %2337 = vmatpush2.msra.mxu0 0.0
  %2338 = vmatprep.subr.mxu0 0.0
  %2339 = vmatpush2.msra.mxu0 0.0
  %2340 = vmatprep.subr.mxu0 0.0
  %2341 = vmatpush2.msra.mxu0 0.0
  %2342 = vmatprep.subr.mxu0 0.0
  %2343 = vmatpush2.msra.mxu0 0.0
  %2344 = vmatprep.subr.mxu0 0.0
  %2345 = vmatpush2.msra.mxu0 0.0
  %2346 = vmatprep.subr.mxu0 0.0
  %2347 = vmatpush2.msra.mxu0 0.0
  %2348 = vmatprep.subr.mxu0 0.0
  %2349 = vmatpush2.msra.mxu0 0.0
  %2350 = vmatprep.mubr.f32.mxu0 0.0
  %2351 = vmatmul.mubr.f32.gmra.mxu0 %v2263
  %v2352 = vpop.f32.mrf.mxu0
  %v2353 = vadd.f32 0.0, %v2352
  %v2354 = vpop.f32.mrf.mxu0
  %v2355 = vadd.f32 0.0, %v2354
  %2356 = vmatprep.mubr.f32.mxu0 0.0
  %2357 = vmatmul.mubr.f32.gmra.mxu0 %v2266
  %v2358 = vpop.f32.mrf.mxu0
  %v2359 = vadd.f32 0.0, %v2358
  %v2360 = vpop.f32.mrf.mxu0
  %v2361 = vadd.f32 0.0, %v2360
  %2362 = vmatprep.mubr.f32.mxu0 0.0
  %2363 = vmatmul.mubr.f32.gmra.mxu0 %v2269
  %v2364 = vpop.f32.mrf.mxu0
  %v2365 = vadd.f32 0.0, %v2364
  %v2366 = vpop.f32.mrf.mxu0
  %v2367 = vadd.f32 0.0, %v2366
  %2368 = vmatprep.mubr.f32.mxu0 0.0
  %2369 = vmatmul.mubr.f32.gmra.mxu0 %v2272
  %v2370 = vpop.f32.mrf.mxu0
  %v2371 = vadd.f32 0.0, %v2370
  %v2372 = vpop.f32.mrf.mxu0
  %v2373 = vadd.f32 0.0, %v2372
  %2374 = vmatprep.mubr.f32.mxu0 0.0
  %2375 = vmatmul.mubr.f32.gmra.mxu0 %v2275
  %v2376 = vpop.f32.mrf.mxu0
  %v2377 = vadd.f32 0.0, %v2376
  %v2378 = vpop.f32.mrf.mxu0
  %v2379 = vadd.f32 0.0, %v2378
  %2380 = vmatprep.mubr.f32.mxu0 0.0
  %2381 = vmatmul.mubr.f32.gmra.mxu0 %v2278
  %v2382 = vpop.f32.mrf.mxu0
  %v2383 = vadd.f32 0.0, %v2382
  %v2384 = vpop.f32.mrf.mxu0
  %v2385 = vadd.f32 0.0, %v2384
  %2386 = vmatprep.mubr.f32.mxu0 0.0
  %2387 = vmatmul.mubr.f32.gmra.mxu0 %v2281
  %v2388 = vpop.f32.mrf.mxu0
  %v2389 = vadd.f32 0.0, %v2388
  %v2390 = vpop.f32.mrf.mxu0
  %v2391 = vadd.f32 0.0, %v2390
  %2392 = vmatprep.mubr.f32.mxu0 0.0
  %2393 = vmatmul.mubr.f32.gmra.mxu0 %v2284
  %v2394 = vpop.f32.mrf.mxu0
  %v2395 = vadd.f32 0.0, %v2394
  %v2396 = vpop.f32.mrf.mxu0
  %v2397 = vadd.f32 0.0, %v2396
  %2398 = vdwg.mxu0
  %v2400 = vsel %vm2261, %v2188, 0
  %2402 = vmatprep.subr.mxu0 0.0
  %2403 = vmatpush1.msra.mxu0 0.0
  %2404 = vmatprep.subr.mxu0 %v2229
  %2405 = vmatpush1.msra.mxu0 %v2228
  %2406 = vmatprep.subr.mxu0 %v2227
  %2407 = vmatpush1.msra.mxu0 %v2226
  %2408 = vmatprep.subr.mxu0 %v2225
  %2409 = vmatpush1.msra.mxu0 %v2224
  %2410 = vmatprep.subr.mxu0 %v2223
  %2411 = vmatpush1.msra.mxu0 %v2222
  %2412 = vmatprep.subr.mxu0 %v2221
  %2413 = vmatpush1.msra.mxu0 %v2220
  %2414 = vmatprep.subr.mxu0 %v2219
  %2415 = vmatpush1.msra.mxu0 %v2218
  %2416 = vmatprep.subr.mxu0 %v2217
  %2417 = vmatpush1.msra.mxu0 %v2216
  %2418 = vmatprep.subr.mxu0 %v2215
  %2419 = vmatpush1.msra.mxu0 %v2214
  %2420 = vmatprep.subr.mxu0 %v2213
  %2421 = vmatpush1.msra.mxu0 %v2212
  %2422 = vmatprep.subr.mxu0 %v2211
  %2423 = vmatpush1.msra.mxu0 %v2210
  %2424 = vmatprep.subr.mxu0 %v2209
  %2425 = vmatpush1.msra.mxu0 %v2208
  %2426 = vmatprep.subr.mxu0 %v2207
  %2427 = vmatpush1.msra.mxu0 %v2206
  %2428 = vmatprep.subr.mxu0 %v2205
  %2429 = vmatpush1.msra.mxu0 %v2204
  %2430 = vmatprep.subr.mxu0 %v2203
  %2431 = vmatpush1.msra.mxu0 %v2202
  %2432 = vmatprep.subr.mxu0 %v2201
  %2433 = vmatpush1.msra.mxu0 %v2200
  %2434 = vmatprep.subr.mxu0 0.0
  %2435 = vmatpush2.msra.mxu0 0.0
  %2436 = vmatprep.subr.mxu0 0.0
  %2437 = vmatpush2.msra.mxu0 0.0
  %2438 = vmatprep.subr.mxu0 0.0
  %2439 = vmatpush2.msra.mxu0 0.0
  %2440 = vmatprep.subr.mxu0 0.0
  %2441 = vmatpush2.msra.mxu0 0.0
  %2442 = vmatprep.subr.mxu0 0.0
  %2443 = vmatpush2.msra.mxu0 0.0
  %2444 = vmatprep.subr.mxu0 0.0
  %2445 = vmatpush2.msra.mxu0 0.0
  %2446 = vmatprep.subr.mxu0 0.0
  %2447 = vmatpush2.msra.mxu0 0.0
  %2448 = vmatprep.subr.mxu0 0.0
  %2449 = vmatpush2.msra.mxu0 0.0
  %2450 = vmatprep.subr.mxu0 0.0
  %2451 = vmatpush2.msra.mxu0 0.0
  %2452 = vmatprep.subr.mxu0 0.0
  %2453 = vmatpush2.msra.mxu0 0.0
  %2454 = vmatprep.subr.mxu0 0.0
  %2455 = vmatpush2.msra.mxu0 0.0
  %2456 = vmatprep.subr.mxu0 0.0
  %2457 = vmatpush2.msra.mxu0 0.0
  %2458 = vmatprep.subr.mxu0 0.0
  %2459 = vmatpush2.msra.mxu0 0.0
  %2460 = vmatprep.subr.mxu0 0.0
  %2461 = vmatpush2.msra.mxu0 0.0
  %2462 = vmatprep.subr.mxu0 0.0
  %2463 = vmatpush2.msra.mxu0 0.0
  %2464 = vmatprep.subr.mxu0 0.0
  %2465 = vmatpush2.msra.mxu0 0.0
  %2466 = vmatprep.mubr.f32.mxu0 0.0
  %2467 = vmatmul.mubr.f32.gmra.mxu0 %v2400
  %v2468 = vpop.f32.mrf.mxu0
  %v2469 = vadd.f32 %v2353, %v2468
  %v2470 = vpop.f32.mrf.mxu0
  %v2471 = vadd.f32 %v2355, %v2470
  %2472 = vmatprep.mubr.f32.mxu0 0.0
  %2473 = vmatmul.mubr.f32.gmra.mxu0 %v2263
  %v2474 = vpop.f32.mrf.mxu0
  %v2475 = vadd.f32 %v2359, %v2474
  %v2476 = vpop.f32.mrf.mxu0
  %v2477 = vadd.f32 %v2361, %v2476
  %2478 = vmatprep.mubr.f32.mxu0 0.0
  %2479 = vmatmul.mubr.f32.gmra.mxu0 %v2266
  %v2480 = vpop.f32.mrf.mxu0
  %v2481 = vadd.f32 %v2365, %v2480
  %v2482 = vpop.f32.mrf.mxu0
  %v2483 = vadd.f32 %v2367, %v2482
  %2484 = vmatprep.mubr.f32.mxu0 0.0
  %2485 = vmatmul.mubr.f32.gmra.mxu0 %v2269
  %v2486 = vpop.f32.mrf.mxu0
  %v2487 = vadd.f32 %v2371, %v2486
  %v2488 = vpop.f32.mrf.mxu0
  %v2489 = vadd.f32 %v2373, %v2488
  %2490 = vmatprep.mubr.f32.mxu0 0.0
  %2491 = vmatmul.mubr.f32.gmra.mxu0 %v2272
  %v2492 = vpop.f32.mrf.mxu0
  %v2493 = vadd.f32 %v2377, %v2492
  %v2494 = vpop.f32.mrf.mxu0
  %v2495 = vadd.f32 %v2379, %v2494
  %2496 = vmatprep.mubr.f32.mxu0 0.0
  %2497 = vmatmul.mubr.f32.gmra.mxu0 %v2275
  %v2498 = vpop.f32.mrf.mxu0
  %v2499 = vadd.f32 %v2383, %v2498
  %v2500 = vpop.f32.mrf.mxu0
  %v2501 = vadd.f32 %v2385, %v2500
  %2502 = vmatprep.mubr.f32.mxu0 0.0
  %2503 = vmatmul.mubr.f32.gmra.mxu0 %v2278
  %v2504 = vpop.f32.mrf.mxu0
  %v2505 = vadd.f32 %v2389, %v2504
  %v2506 = vpop.f32.mrf.mxu0
  %v2507 = vadd.f32 %v2391, %v2506
  %2508 = vmatprep.mubr.f32.mxu0 0.0
  %2509 = vmatmul.mubr.f32.gmra.mxu0 %v2281
  %v2510 = vpop.f32.mrf.mxu0
  %v2511 = vadd.f32 %v2395, %v2510
  %v2512 = vpop.f32.mrf.mxu0
  %v2513 = vadd.f32 %v2397, %v2512
  %2514 = vdwg.mxu0
  %s2515 = scalar_lea.vmem %s3, 480
  %v2516 = vld [vmem:[%s2515] sm:$0xff]
  %v2517 = vld [vmem:[%s2515 + $0x8] sm:$0xff]
  %v2518 = vld [vmem:[%s2515 + $0x10] sm:$0xff]
  %v2519 = vld [vmem:[%s2515 + $0x18] sm:$0xff]
  %v2520 = vld [vmem:[%s2515 + $0x20] sm:$0xff]
  %v2521 = vld [vmem:[%s2515 + $0x28] sm:$0xff]
  %v2522 = vld [vmem:[%s2515 + $0x30] sm:$0xff]
  %v2523 = vld [vmem:[%s2515 + $0x38] sm:$0xff]
  %v2524 = vld [vmem:[%s2515 + $0x40] sm:$0xff]
  %v2525 = vld [vmem:[%s2515 + $0x48] sm:$0xff]
  %v2526 = vld [vmem:[%s2515 + $0x50] sm:$0xff]
  %v2527 = vld [vmem:[%s2515 + $0x58] sm:$0xff]
  %v2528 = vld [vmem:[%s2515 + $0x60] sm:$0xff]
  %v2529 = vld [vmem:[%s2515 + $0x68] sm:$0xff]
  %v2530 = vld [vmem:[%s2515 + $0x70] sm:$0xff]
  %v2531 = vld [vmem:[%s2515 + $0x78] sm:$0xff]
  %v2532 = vld [vmem:[%s2515 + $0x80] sm:$0xff]
  %v2533 = vld [vmem:[%s2515 + $0x88] sm:$0xff]
  %v2534 = vld [vmem:[%s2515 + $0x90] sm:$0xff]
  %v2535 = vld [vmem:[%s2515 + $0x98] sm:$0xff]
  %v2536 = vld [vmem:[%s2515 + $0xa0] sm:$0xff]
  %v2537 = vld [vmem:[%s2515 + $0xa8] sm:$0xff]
  %v2538 = vld [vmem:[%s2515 + $0xb0] sm:$0xff]
  %v2539 = vld [vmem:[%s2515 + $0xb8] sm:$0xff]
  %v2540 = vld [vmem:[%s2515 + $0xc0] sm:$0xff]
  %v2541 = vld [vmem:[%s2515 + $0xc8] sm:$0xff]
  %v2542 = vld [vmem:[%s2515 + $0xd0] sm:$0xff]
  %v2543 = vld [vmem:[%s2515 + $0xd8] sm:$0xff]
  %v2544 = vld [vmem:[%s2515 + $0xe0] sm:$0xff]
  %v2545 = vld [vmem:[%s2515 + $0xe8] sm:$0xff]
  %v2547 = vsel %vm2261, %v2197, 0
  %2549 = vmatprep.subr.mxu0 0.0
  %2550 = vmatpush1.msra.mxu0 0.0
  %2551 = vmatprep.subr.mxu0 %v2545
  %2552 = vmatpush1.msra.mxu0 %v2544
  %2553 = vmatprep.subr.mxu0 %v2543
  %2554 = vmatpush1.msra.mxu0 %v2542
  %2555 = vmatprep.subr.mxu0 %v2541
  %2556 = vmatpush1.msra.mxu0 %v2540
  %2557 = vmatprep.subr.mxu0 %v2539
  %2558 = vmatpush1.msra.mxu0 %v2538
  %2559 = vmatprep.subr.mxu0 %v2537
  %2560 = vmatpush1.msra.mxu0 %v2536
  %2561 = vmatprep.subr.mxu0 %v2535
  %2562 = vmatpush1.msra.mxu0 %v2534
  %2563 = vmatprep.subr.mxu0 %v2533
  %2564 = vmatpush1.msra.mxu0 %v2532
  %2565 = vmatprep.subr.mxu0 %v2531
  %2566 = vmatpush1.msra.mxu0 %v2530
  %2567 = vmatprep.subr.mxu0 %v2529
  %2568 = vmatpush1.msra.mxu0 %v2528
  %2569 = vmatprep.subr.mxu0 %v2527
  %2570 = vmatpush1.msra.mxu0 %v2526
  %2571 = vmatprep.subr.mxu0 %v2525
  %2572 = vmatpush1.msra.mxu0 %v2524
  %2573 = vmatprep.subr.mxu0 %v2523
  %2574 = vmatpush1.msra.mxu0 %v2522
  %2575 = vmatprep.subr.mxu0 %v2521
  %2576 = vmatpush1.msra.mxu0 %v2520
  %2577 = vmatprep.subr.mxu0 %v2519
  %2578 = vmatpush1.msra.mxu0 %v2518
  %2579 = vmatprep.subr.mxu0 %v2517
  %2580 = vmatpush1.msra.mxu0 %v2516
  %2581 = vmatprep.subr.mxu0 0.0
  %2582 = vmatpush2.msra.mxu0 0.0
  %2583 = vmatprep.subr.mxu0 0.0
  %2584 = vmatpush2.msra.mxu0 0.0
  %2585 = vmatprep.subr.mxu0 0.0
  %2586 = vmatpush2.msra.mxu0 0.0
  %2587 = vmatprep.subr.mxu0 0.0
  %2588 = vmatpush2.msra.mxu0 0.0
  %2589 = vmatprep.subr.mxu0 0.0
  %2590 = vmatpush2.msra.mxu0 0.0
  %2591 = vmatprep.subr.mxu0 0.0
  %2592 = vmatpush2.msra.mxu0 0.0
  %2593 = vmatprep.subr.mxu0 0.0
  %2594 = vmatpush2.msra.mxu0 0.0
  %2595 = vmatprep.subr.mxu0 0.0
  %2596 = vmatpush2.msra.mxu0 0.0
  %2597 = vmatprep.subr.mxu0 0.0
  %2598 = vmatpush2.msra.mxu0 0.0
  %2599 = vmatprep.subr.mxu0 0.0
  %2600 = vmatpush2.msra.mxu0 0.0
  %2601 = vmatprep.subr.mxu0 0.0
  %2602 = vmatpush2.msra.mxu0 0.0
  %2603 = vmatprep.subr.mxu0 0.0
  %2604 = vmatpush2.msra.mxu0 0.0
  %2605 = vmatprep.subr.mxu0 0.0
  %2606 = vmatpush2.msra.mxu0 0.0
  %2607 = vmatprep.subr.mxu0 0.0
  %2608 = vmatpush2.msra.mxu0 0.0
  %2609 = vmatprep.subr.mxu0 0.0
  %2610 = vmatpush2.msra.mxu0 0.0
  %2611 = vmatprep.subr.mxu0 0.0
  %2612 = vmatpush2.msra.mxu0 0.0
  %2613 = vmatprep.mubr.f32.mxu0 0.0
  %2614 = vmatmul.mubr.f32.gmra.mxu0 %v2266
  %v2615 = vpop.f32.mrf.mxu0
  %v2616 = vadd.f32 0.0, %v2615
  %v2617 = vpop.f32.mrf.mxu0
  %v2618 = vadd.f32 0.0, %v2617
  %2619 = vmatprep.mubr.f32.mxu0 0.0
  %2620 = vmatmul.mubr.f32.gmra.mxu0 %v2269
  %v2621 = vpop.f32.mrf.mxu0
  %v2622 = vadd.f32 0.0, %v2621
  %v2623 = vpop.f32.mrf.mxu0
  %v2624 = vadd.f32 0.0, %v2623
  %2625 = vmatprep.mubr.f32.mxu0 0.0
  %2626 = vmatmul.mubr.f32.gmra.mxu0 %v2272
  %v2627 = vpop.f32.mrf.mxu0
  %v2628 = vadd.f32 0.0, %v2627
  %v2629 = vpop.f32.mrf.mxu0
  %v2630 = vadd.f32 0.0, %v2629
  %2631 = vmatprep.mubr.f32.mxu0 0.0
  %2632 = vmatmul.mubr.f32.gmra.mxu0 %v2275
  %v2633 = vpop.f32.mrf.mxu0
  %v2634 = vadd.f32 0.0, %v2633
  %v2635 = vpop.f32.mrf.mxu0
  %v2636 = vadd.f32 0.0, %v2635
  %2637 = vmatprep.mubr.f32.mxu0 0.0
  %2638 = vmatmul.mubr.f32.gmra.mxu0 %v2278
  %v2639 = vpop.f32.mrf.mxu0
  %v2640 = vadd.f32 0.0, %v2639
  %v2641 = vpop.f32.mrf.mxu0
  %v2642 = vadd.f32 0.0, %v2641
  %2643 = vmatprep.mubr.f32.mxu0 0.0
  %2644 = vmatmul.mubr.f32.gmra.mxu0 %v2281
  %v2645 = vpop.f32.mrf.mxu0
  %v2646 = vadd.f32 0.0, %v2645
  %v2647 = vpop.f32.mrf.mxu0
  %v2648 = vadd.f32 0.0, %v2647
  %2649 = vmatprep.mubr.f32.mxu0 0.0
  %2650 = vmatmul.mubr.f32.gmra.mxu0 %v2284
  %v2651 = vpop.f32.mrf.mxu0
  %v2652 = vadd.f32 0.0, %v2651
  %v2653 = vpop.f32.mrf.mxu0
  %v2654 = vadd.f32 0.0, %v2653
  %2655 = vmatprep.mubr.f32.mxu0 0.0
  %2656 = vmatmul.mubr.f32.gmra.mxu0 %v2547
  %v2657 = vpop.f32.mrf.mxu0
  %v2658 = vadd.f32 0.0, %v2657
  %v2659 = vpop.f32.mrf.mxu0
  %v2660 = vadd.f32 0.0, %v2659
  %2661 = vdwg.mxu0
  %v2662 = vadd.f32 %v2469, %v2616
  %v2663 = vadd.f32 %v2471, %v2618
  %v2664 = vadd.f32 %v2475, %v2622
  %v2665 = vadd.f32 %v2477, %v2624
  %v2666 = vadd.f32 %v2481, %v2628
  %v2667 = vadd.f32 %v2483, %v2630
  %v2668 = vadd.f32 %v2487, %v2634
  %v2669 = vadd.f32 %v2489, %v2636
  %v2670 = vadd.f32 %v2493, %v2640
  %v2671 = vadd.f32 %v2495, %v2642
  %v2672 = vadd.f32 %v2499, %v2646
  %v2673 = vadd.f32 %v2501, %v2648
  %v2674 = vadd.f32 %v2505, %v2652
  %v2675 = vadd.f32 %v2507, %v2654
  %v2676 = vadd.f32 %v2511, %v2658
  %v2677 = vadd.f32 %v2513, %v2660
  %s2678 = scalar_lea.vmem %s3, 720
  %v2679 = vld [vmem:[%s2678] sm:$0xff]
  %v2680 = vld [vmem:[%s2678 + $0x8] sm:$0xff]
  %v2681 = vld [vmem:[%s2678 + $0x10] sm:$0xff]
  %v2682 = vld [vmem:[%s2678 + $0x18] sm:$0xff]
  %v2683 = vld [vmem:[%s2678 + $0x20] sm:$0xff]
  %v2684 = vld [vmem:[%s2678 + $0x28] sm:$0xff]
  %v2685 = vld [vmem:[%s2678 + $0x30] sm:$0xff]
  %v2686 = vld [vmem:[%s2678 + $0x38] sm:$0xff]
  %v2687 = vld [vmem:[%s2678 + $0x40] sm:$0xff]
  %v2688 = vld [vmem:[%s2678 + $0x48] sm:$0xff]
  %v2689 = vld [vmem:[%s2678 + $0x50] sm:$0xff]
  %v2690 = vld [vmem:[%s2678 + $0x58] sm:$0xff]
  %v2691 = vld [vmem:[%s2678 + $0x60] sm:$0xff]
  %v2692 = vld [vmem:[%s2678 + $0x68] sm:$0xff]
  %v2693 = vld [vmem:[%s2678 + $0x70] sm:$0xff]
  %v2694 = vld [vmem:[%s2678 + $0x78] sm:$0xff]
  %v2695 = vld [vmem:[%s2678 + $0x80] sm:$0xff]
  %v2696 = vld [vmem:[%s2678 + $0x88] sm:$0xff]
  %v2697 = vld [vmem:[%s2678 + $0x90] sm:$0xff]
  %v2698 = vld [vmem:[%s2678 + $0x98] sm:$0xff]
  %v2699 = vld [vmem:[%s2678 + $0xa0] sm:$0xff]
  %v2700 = vld [vmem:[%s2678 + $0xa8] sm:$0xff]
  %v2701 = vld [vmem:[%s2678 + $0xb0] sm:$0xff]
  %v2702 = vld [vmem:[%s2678 + $0xb8] sm:$0xff]
  %v2703 = vld [vmem:[%s2678 + $0xc0] sm:$0xff]
  %v2704 = vld [vmem:[%s2678 + $0xc8] sm:$0xff]
  %v2705 = vld [vmem:[%s2678 + $0xd0] sm:$0xff]
  %v2706 = vld [vmem:[%s2678 + $0xd8] sm:$0xff]
  %v2707 = vld [vmem:[%s2678 + $0xe0] sm:$0xff]
  %v2708 = vld [vmem:[%s2678 + $0xe8] sm:$0xff]
  %v2710 = vsel %vm2261, %v2198, 0
  %2712 = vmatprep.subr.mxu0 0.0
  %2713 = vmatpush1.msra.mxu0 0.0
  %2714 = vmatprep.subr.mxu0 %v2708
  %2715 = vmatpush1.msra.mxu0 %v2707
  %2716 = vmatprep.subr.mxu0 %v2706
  %2717 = vmatpush1.msra.mxu0 %v2705
  %2718 = vmatprep.subr.mxu0 %v2704
  %2719 = vmatpush1.msra.mxu0 %v2703
  %2720 = vmatprep.subr.mxu0 %v2702
  %2721 = vmatpush1.msra.mxu0 %v2701
  %2722 = vmatprep.subr.mxu0 %v2700
  %2723 = vmatpush1.msra.mxu0 %v2699
  %2724 = vmatprep.subr.mxu0 %v2698
  %2725 = vmatpush1.msra.mxu0 %v2697
  %2726 = vmatprep.subr.mxu0 %v2696
  %2727 = vmatpush1.msra.mxu0 %v2695
  %2728 = vmatprep.subr.mxu0 %v2694
  %2729 = vmatpush1.msra.mxu0 %v2693
  %2730 = vmatprep.subr.mxu0 %v2692
  %2731 = vmatpush1.msra.mxu0 %v2691
  %2732 = vmatprep.subr.mxu0 %v2690
  %2733 = vmatpush1.msra.mxu0 %v2689
  %2734 = vmatprep.subr.mxu0 %v2688
  %2735 = vmatpush1.msra.mxu0 %v2687
  %2736 = vmatprep.subr.mxu0 %v2686
  %2737 = vmatpush1.msra.mxu0 %v2685
  %2738 = vmatprep.subr.mxu0 %v2684
  %2739 = vmatpush1.msra.mxu0 %v2683
  %2740 = vmatprep.subr.mxu0 %v2682
  %2741 = vmatpush1.msra.mxu0 %v2681
  %2742 = vmatprep.subr.mxu0 %v2680
  %2743 = vmatpush1.msra.mxu0 %v2679
  %2744 = vmatprep.subr.mxu0 0.0
  %2745 = vmatpush2.msra.mxu0 0.0
  %2746 = vmatprep.subr.mxu0 0.0
  %2747 = vmatpush2.msra.mxu0 0.0
  %2748 = vmatprep.subr.mxu0 0.0
  %2749 = vmatpush2.msra.mxu0 0.0
  %2750 = vmatprep.subr.mxu0 0.0
  %2751 = vmatpush2.msra.mxu0 0.0
  %2752 = vmatprep.subr.mxu0 0.0
  %2753 = vmatpush2.msra.mxu0 0.0
  %2754 = vmatprep.subr.mxu0 0.0
  %2755 = vmatpush2.msra.mxu0 0.0
  %2756 = vmatprep.subr.mxu0 0.0
  %2757 = vmatpush2.msra.mxu0 0.0
  %2758 = vmatprep.subr.mxu0 0.0
  %2759 = vmatpush2.msra.mxu0 0.0
  %2760 = vmatprep.subr.mxu0 0.0
  %2761 = vmatpush2.msra.mxu0 0.0
  %2762 = vmatprep.subr.mxu0 0.0
  %2763 = vmatpush2.msra.mxu0 0.0
  %2764 = vmatprep.subr.mxu0 0.0
  %2765 = vmatpush2.msra.mxu0 0.0
  %2766 = vmatprep.subr.mxu0 0.0
  %2767 = vmatpush2.msra.mxu0 0.0
  %2768 = vmatprep.subr.mxu0 0.0
  %2769 = vmatpush2.msra.mxu0 0.0
  %2770 = vmatprep.subr.mxu0 0.0
  %2771 = vmatpush2.msra.mxu0 0.0
  %2772 = vmatprep.subr.mxu0 0.0
  %2773 = vmatpush2.msra.mxu0 0.0
  %2774 = vmatprep.subr.mxu0 0.0
  %2775 = vmatpush2.msra.mxu0 0.0
  %2776 = vmatprep.mubr.f32.mxu0 0.0
  %2777 = vmatmul.mubr.f32.gmra.mxu0 %v2269
  %v2778 = vpop.f32.mrf.mxu0
  %v2779 = vadd.f32 0.0, %v2778
  %v2780 = vpop.f32.mrf.mxu0
  %v2781 = vadd.f32 0.0, %v2780
  %2782 = vmatprep.mubr.f32.mxu0 0.0
  %2783 = vmatmul.mubr.f32.gmra.mxu0 %v2272
  %v2784 = vpop.f32.mrf.mxu0
  %v2785 = vadd.f32 0.0, %v2784
  %v2786 = vpop.f32.mrf.mxu0
  %v2787 = vadd.f32 0.0, %v2786
  %2788 = vmatprep.mubr.f32.mxu0 0.0
  %2789 = vmatmul.mubr.f32.gmra.mxu0 %v2275
  %v2790 = vpop.f32.mrf.mxu0
  %v2791 = vadd.f32 0.0, %v2790
  %v2792 = vpop.f32.mrf.mxu0
  %v2793 = vadd.f32 0.0, %v2792
  %2794 = vmatprep.mubr.f32.mxu0 0.0
  %2795 = vmatmul.mubr.f32.gmra.mxu0 %v2278
  %v2796 = vpop.f32.mrf.mxu0
  %v2797 = vadd.f32 0.0, %v2796
  %v2798 = vpop.f32.mrf.mxu0
  %v2799 = vadd.f32 0.0, %v2798
  %2800 = vmatprep.mubr.f32.mxu0 0.0
  %2801 = vmatmul.mubr.f32.gmra.mxu0 %v2281
  %v2802 = vpop.f32.mrf.mxu0
  %v2803 = vadd.f32 0.0, %v2802
  %v2804 = vpop.f32.mrf.mxu0
  %v2805 = vadd.f32 0.0, %v2804
  %2806 = vmatprep.mubr.f32.mxu0 0.0
  %2807 = vmatmul.mubr.f32.gmra.mxu0 %v2284
  %v2808 = vpop.f32.mrf.mxu0
  %v2809 = vadd.f32 0.0, %v2808
  %v2810 = vpop.f32.mrf.mxu0
  %v2811 = vadd.f32 0.0, %v2810
  %2812 = vmatprep.mubr.f32.mxu0 0.0
  %2813 = vmatmul.mubr.f32.gmra.mxu0 %v2547
  %v2814 = vpop.f32.mrf.mxu0
  %v2815 = vadd.f32 0.0, %v2814
  %v2816 = vpop.f32.mrf.mxu0
  %v2817 = vadd.f32 0.0, %v2816
  %2818 = vmatprep.mubr.f32.mxu0 0.0
  %2819 = vmatmul.mubr.f32.gmra.mxu0 %v2710
  %v2820 = vpop.f32.mrf.mxu0
  %v2821 = vadd.f32 0.0, %v2820
  %v2822 = vpop.f32.mrf.mxu0
  %v2823 = vadd.f32 0.0, %v2822
  %2824 = vdwg.mxu0
  %v2825 = vadd.f32 %v2662, %v2779
  %v2826 = vadd.f32 %v2663, %v2781
  %v2827 = vadd.f32 %v2664, %v2785
  %v2828 = vadd.f32 %v2665, %v2787
  %v2829 = vadd.f32 %v2666, %v2791
  %v2830 = vadd.f32 %v2667, %v2793
  %v2831 = vadd.f32 %v2668, %v2797
  %v2832 = vadd.f32 %v2669, %v2799
  %v2833 = vadd.f32 %v2670, %v2803
  %v2834 = vadd.f32 %v2671, %v2805
  %v2835 = vadd.f32 %v2672, %v2809
  %v2836 = vadd.f32 %v2673, %v2811
  %v2837 = vadd.f32 %v2674, %v2815
  %v2838 = vadd.f32 %v2675, %v2817
  %v2839 = vadd.f32 %v2676, %v2821
  %v2840 = vadd.f32 %v2677, %v2823
  %s2841 = scalar_lea.vmem %s3, 960
  %v2842 = vld [vmem:[%s2841] sm:$0xff]
  %v2843 = vld [vmem:[%s2841 + $0x8] sm:$0xff]
  %v2844 = vld [vmem:[%s2841 + $0x10] sm:$0xff]
  %v2845 = vld [vmem:[%s2841 + $0x18] sm:$0xff]
  %v2846 = vld [vmem:[%s2841 + $0x20] sm:$0xff]
  %v2847 = vld [vmem:[%s2841 + $0x28] sm:$0xff]
  %v2848 = vld [vmem:[%s2841 + $0x30] sm:$0xff]
  %v2849 = vld [vmem:[%s2841 + $0x38] sm:$0xff]
  %v2850 = vld [vmem:[%s2841 + $0x40] sm:$0xff]
  %v2851 = vld [vmem:[%s2841 + $0x48] sm:$0xff]
  %v2852 = vld [vmem:[%s2841 + $0x50] sm:$0xff]
  %v2853 = vld [vmem:[%s2841 + $0x58] sm:$0xff]
  %v2854 = vld [vmem:[%s2841 + $0x60] sm:$0xff]
  %v2855 = vld [vmem:[%s2841 + $0x68] sm:$0xff]
  %v2856 = vld [vmem:[%s2841 + $0x70] sm:$0xff]
  %v2857 = vld [vmem:[%s2841 + $0x78] sm:$0xff]
  %v2858 = vld [vmem:[%s2841 + $0x80] sm:$0xff]
  %v2859 = vld [vmem:[%s2841 + $0x88] sm:$0xff]
  %v2860 = vld [vmem:[%s2841 + $0x90] sm:$0xff]
  %v2861 = vld [vmem:[%s2841 + $0x98] sm:$0xff]
  %v2862 = vld [vmem:[%s2841 + $0xa0] sm:$0xff]
  %v2863 = vld [vmem:[%s2841 + $0xa8] sm:$0xff]
  %v2864 = vld [vmem:[%s2841 + $0xb0] sm:$0xff]
  %v2865 = vld [vmem:[%s2841 + $0xb8] sm:$0xff]
  %v2866 = vld [vmem:[%s2841 + $0xc0] sm:$0xff]
  %v2867 = vld [vmem:[%s2841 + $0xc8] sm:$0xff]
  %v2868 = vld [vmem:[%s2841 + $0xd0] sm:$0xff]
  %v2869 = vld [vmem:[%s2841 + $0xd8] sm:$0xff]
  %v2870 = vld [vmem:[%s2841 + $0xe0] sm:$0xff]
  %v2871 = vld [vmem:[%s2841 + $0xe8] sm:$0xff]
  %v2873 = vsel %vm2261, %v2199, 0
  %2875 = vmatprep.subr.mxu0 0.0
  %2876 = vmatpush1.msra.mxu0 0.0
  %2877 = vmatprep.subr.mxu0 %v2871
  %2878 = vmatpush1.msra.mxu0 %v2870
  %2879 = vmatprep.subr.mxu0 %v2869
  %2880 = vmatpush1.msra.mxu0 %v2868
  %2881 = vmatprep.subr.mxu0 %v2867
  %2882 = vmatpush1.msra.mxu0 %v2866
  %2883 = vmatprep.subr.mxu0 %v2865
  %2884 = vmatpush1.msra.mxu0 %v2864
  %2885 = vmatprep.subr.mxu0 %v2863
  %2886 = vmatpush1.msra.mxu0 %v2862
  %2887 = vmatprep.subr.mxu0 %v2861
  %2888 = vmatpush1.msra.mxu0 %v2860
  %2889 = vmatprep.subr.mxu0 %v2859
  %2890 = vmatpush1.msra.mxu0 %v2858
  %2891 = vmatprep.subr.mxu0 %v2857
  %2892 = vmatpush1.msra.mxu0 %v2856
  %2893 = vmatprep.subr.mxu0 %v2855
  %2894 = vmatpush1.msra.mxu0 %v2854
  %2895 = vmatprep.subr.mxu0 %v2853
  %2896 = vmatpush1.msra.mxu0 %v2852
  %2897 = vmatprep.subr.mxu0 %v2851
  %2898 = vmatpush1.msra.mxu0 %v2850
  %2899 = vmatprep.subr.mxu0 %v2849
  %2900 = vmatpush1.msra.mxu0 %v2848
  %2901 = vmatprep.subr.mxu0 %v2847
  %2902 = vmatpush1.msra.mxu0 %v2846
  %2903 = vmatprep.subr.mxu0 %v2845
  %2904 = vmatpush1.msra.mxu0 %v2844
  %2905 = vmatprep.subr.mxu0 %v2843
  %2906 = vmatpush1.msra.mxu0 %v2842
  %2907 = vmatprep.subr.mxu0 0.0
  %2908 = vmatpush2.msra.mxu0 0.0
  %2909 = vmatprep.subr.mxu0 0.0
  %2910 = vmatpush2.msra.mxu0 0.0
  %2911 = vmatprep.subr.mxu0 0.0
  %2912 = vmatpush2.msra.mxu0 0.0
  %2913 = vmatprep.subr.mxu0 0.0
  %2914 = vmatpush2.msra.mxu0 0.0
  %2915 = vmatprep.subr.mxu0 0.0
  %2916 = vmatpush2.msra.mxu0 0.0
  %2917 = vmatprep.subr.mxu0 0.0
  %2918 = vmatpush2.msra.mxu0 0.0
  %2919 = vmatprep.subr.mxu0 0.0
  %2920 = vmatpush2.msra.mxu0 0.0
  %2921 = vmatprep.subr.mxu0 0.0
  %2922 = vmatpush2.msra.mxu0 0.0
  %2923 = vmatprep.subr.mxu0 0.0
  %2924 = vmatpush2.msra.mxu0 0.0
  %2925 = vmatprep.subr.mxu0 0.0
  %2926 = vmatpush2.msra.mxu0 0.0
  %2927 = vmatprep.subr.mxu0 0.0
  %2928 = vmatpush2.msra.mxu0 0.0
  %2929 = vmatprep.subr.mxu0 0.0
  %2930 = vmatpush2.msra.mxu0 0.0
  %2931 = vmatprep.subr.mxu0 0.0
  %2932 = vmatpush2.msra.mxu0 0.0
  %2933 = vmatprep.subr.mxu0 0.0
  %2934 = vmatpush2.msra.mxu0 0.0
  %2935 = vmatprep.subr.mxu0 0.0
  %2936 = vmatpush2.msra.mxu0 0.0
  %2937 = vmatprep.subr.mxu0 0.0
  %2938 = vmatpush2.msra.mxu0 0.0
  %2939 = vmatprep.mubr.f32.mxu0 0.0
  %2940 = vmatmul.mubr.f32.gmra.mxu0 %v2272
  %v2941 = vpop.f32.mrf.mxu0
  %v2942 = vadd.f32 0.0, %v2941
  %v2943 = vpop.f32.mrf.mxu0
  %v2944 = vadd.f32 0.0, %v2943
  %2945 = vmatprep.mubr.f32.mxu0 0.0
  %2946 = vmatmul.mubr.f32.gmra.mxu0 %v2275
  %v2947 = vpop.f32.mrf.mxu0
  %v2948 = vadd.f32 0.0, %v2947
  %v2949 = vpop.f32.mrf.mxu0
  %v2950 = vadd.f32 0.0, %v2949
  %2951 = vmatprep.mubr.f32.mxu0 0.0
  %2952 = vmatmul.mubr.f32.gmra.mxu0 %v2278
  %v2953 = vpop.f32.mrf.mxu0
  %v2954 = vadd.f32 0.0, %v2953
  %v2955 = vpop.f32.mrf.mxu0
  %v2956 = vadd.f32 0.0, %v2955
  %2957 = vmatprep.mubr.f32.mxu0 0.0
  %2958 = vmatmul.mubr.f32.gmra.mxu0 %v2281
  %v2959 = vpop.f32.mrf.mxu0
  %v2960 = vadd.f32 0.0, %v2959
  %v2961 = vpop.f32.mrf.mxu0
  %v2962 = vadd.f32 0.0, %v2961
  %2963 = vmatprep.mubr.f32.mxu0 0.0
  %2964 = vmatmul.mubr.f32.gmra.mxu0 %v2284
  %v2965 = vpop.f32.mrf.mxu0
  %v2966 = vadd.f32 0.0, %v2965
  %v2967 = vpop.f32.mrf.mxu0
  %v2968 = vadd.f32 0.0, %v2967
  %2969 = vmatprep.mubr.f32.mxu0 0.0
  %2970 = vmatmul.mubr.f32.gmra.mxu0 %v2547
  %v2971 = vpop.f32.mrf.mxu0
  %v2972 = vadd.f32 0.0, %v2971
  %v2973 = vpop.f32.mrf.mxu0
  %v2974 = vadd.f32 0.0, %v2973
  %2975 = vmatprep.mubr.f32.mxu0 0.0
  %2976 = vmatmul.mubr.f32.gmra.mxu0 %v2710
  %v2977 = vpop.f32.mrf.mxu0
  %v2978 = vadd.f32 0.0, %v2977
  %v2979 = vpop.f32.mrf.mxu0
  %v2980 = vadd.f32 0.0, %v2979
  %2981 = vmatprep.mubr.f32.mxu0 0.0
  %2982 = vmatmul.mubr.f32.gmra.mxu0 %v2873
  %v2983 = vpop.f32.mrf.mxu0
  %v2984 = vadd.f32 0.0, %v2983
  %v2985 = vpop.f32.mrf.mxu0
  %v2986 = vadd.f32 0.0, %v2985
  %2987 = vdwg.mxu0
  %v2988 = vadd.f32 %v2825, %v2942
  %v2989 = vadd.f32 %v2826, %v2944
  %v2990 = vadd.f32 %v2827, %v2948
  %v2991 = vadd.f32 %v2828, %v2950
  %v2992 = vadd.f32 %v2829, %v2954
  %v2993 = vadd.f32 %v2830, %v2956
  %v2994 = vadd.f32 %v2831, %v2960
  %v2995 = vadd.f32 %v2832, %v2962
  %v2996 = vadd.f32 %v2833, %v2966
  %v2997 = vadd.f32 %v2834, %v2968
  %v2998 = vadd.f32 %v2835, %v2972
  %v2999 = vadd.f32 %v2836, %v2974
  %v3000 = vadd.f32 %v2837, %v2978
  %v3001 = vadd.f32 %v2838, %v2980
  %v3002 = vadd.f32 %v2839, %v2984
  %v3003 = vadd.f32 %v2840, %v2986
  %v3004 = vld [vmem:[%s4] sm:$0x3]
  %v3006 = vlaneseq
  %v3007 = vshrl.u32 %v3006, 7
  %v3008 = vsub.s32 0, %v3007
  %v3009 = vrot.slane %v3004, %v3008
  %v3010 = vlaneseq
  %v3011 = vshrl.u32 %v3010, 7
  %v3012 = vsub.s32 1, %v3011
  %v3013 = vrot.slane %v3004, %v3012
  %v3016 = vadd.f32 %v2988, %v3009
  %v3017 = vadd.f32 %v2989, %v3013
  %v3018 = vadd.f32 %v2990, %v3009
  %v3019 = vadd.f32 %v2991, %v3013
  %v3020 = vadd.f32 %v2992, %v3009
  %v3021 = vadd.f32 %v2993, %v3013
  %v3022 = vadd.f32 %v2994, %v3009
  %v3023 = vadd.f32 %v2995, %v3013
  %v3024 = vadd.f32 %v2996, %v3009
  %v3025 = vadd.f32 %v2997, %v3013
  %v3026 = vadd.f32 %v2998, %v3009
  %v3027 = vadd.f32 %v2999, %v3013
  %v3028 = vadd.f32 %v3000, %v3009
  %v3029 = vadd.f32 %v3001, %v3013
  %v3030 = vadd.f32 %v3002, %v3009
  %v3031 = vadd.f32 %v3003, %v3013
  %v3032 = vmax.f32 %v3016, %v3018
  %v3033 = vmax.f32 %v3017, %v3019
  %3034 = vst [vmem:[#allocation3] sm:$0xff] %v3032
  %vm3035 = vcmask 261120
  %3036 = vst.msk [vmem:[#allocation3 + $0x8] sm:$0xff] %vm3035, %v3033
  %v3037 = vmax.f32 %v3020, %v3022
  %v3038 = vmax.f32 %v3021, %v3023
  %3039 = vst [vmem:[#allocation3 + $0x10] sm:$0xff] %v3037
  %3040 = vst.msk [vmem:[#allocation3 + $0x18] sm:$0xff] %vm3035, %v3038
  %v3041 = vmax.f32 %v3024, %v3026
  %v3042 = vmax.f32 %v3025, %v3027
  %3043 = vst [vmem:[#allocation3 + $0x20] sm:$0xff] %v3041
  %3044 = vst.msk [vmem:[#allocation3 + $0x28] sm:$0xff] %vm3035, %v3042
  %v3045 = vmax.f32 %v3028, %v3030
  %v3046 = vmax.f32 %v3029, %v3031
  %3047 = vst [vmem:[#allocation3 + $0x30] sm:$0xff] %v3045
  %3048 = vst.msk [vmem:[#allocation3 + $0x38] sm:$0xff] %vm3035, %v3046
  %v3049 = vld [vmem:[#allocation3] sm:$0xff]
  %v3050 = vld [vmem:[#allocation3 + $0x8] sm:$0xff]
  %v3051 = vld [vmem:[#allocation3 + $0x10] sm:$0xff]
  %v3052 = vld [vmem:[#allocation3 + $0x18] sm:$0xff]
  %v3053 = vld [vmem:[#allocation3 + $0x20] sm:$0xff]
  %v3054 = vld [vmem:[#allocation3 + $0x28] sm:$0xff]
  %v3055 = vld [vmem:[#allocation3 + $0x30] sm:$0xff]
  %v3056 = vld [vmem:[#allocation3 + $0x38] sm:$0xff]
  %v3057 = vld [vmem:[%s7] sm:$0xff]
  %v3058 = vld [vmem:[%s7 + $0x8] sm:$0xff]
  %v3059 = vld [vmem:[%s7 + $0x10] sm:$0xff]
  %v3060 = vld [vmem:[%s7 + $0x18] sm:$0xff]
  %v3061 = vld [vmem:[%s7 + $0x20] sm:$0xff]
  %v3062 = vld [vmem:[%s7 + $0x28] sm:$0xff]
  %v3063 = vld [vmem:[%s7 + $0x30] sm:$0xff]
  %v3064 = vld [vmem:[%s7 + $0x38] sm:$0xff]
  %v3065 = vld [vmem:[%s7 + $0x40] sm:$0xff]
  %v3066 = vld [vmem:[%s7 + $0x48] sm:$0xff]
  %v3067 = vld [vmem:[%s7 + $0x50] sm:$0xff]
  %v3068 = vld [vmem:[%s7 + $0x58] sm:$0xff]
  %v3069 = vld [vmem:[%s7 + $0x60] sm:$0xff]
  %v3070 = vld [vmem:[%s7 + $0x68] sm:$0xff]
  %v3071 = vld [vmem:[%s7 + $0x70] sm:$0xff]
  %v3072 = vld [vmem:[%s7 + $0x78] sm:$0xff]
  %v3073 = vld [vmem:[%s7 + $0x80] sm:$0xff]
  %v3074 = vld [vmem:[%s7 + $0x88] sm:$0xff]
  %v3075 = vld [vmem:[%s7 + $0x90] sm:$0xff]
  %v3076 = vld [vmem:[%s7 + $0x98] sm:$0xff]
  %v3078 = vsel %vm3035, %v3050, 0
  %v3081 = vsel %vm3035, %v3052, 0
  %v3084 = vsel %vm3035, %v3054, 0
  %v3087 = vsel %vm3035, %v3056, 0
  %3089 = vmatprep.subr.mxu0 0.0
  %3090 = vmatpush1.msra.mxu0 %v3072
  %3091 = vmatprep.subr.mxu0 0.0
  %3092 = vmatpush1.msra.mxu0 %v3071
  %3093 = vmatprep.subr.mxu0 0.0
  %3094 = vmatpush1.msra.mxu0 %v3070
  %3095 = vmatprep.subr.mxu0 0.0
  %3096 = vmatpush1.msra.mxu0 %v3069
  %3097 = vmatprep.subr.mxu0 0.0
  %3098 = vmatpush1.msra.mxu0 %v3068
  %3099 = vmatprep.subr.mxu0 0.0
  %3100 = vmatpush1.msra.mxu0 %v3067
  %3101 = vmatprep.subr.mxu0 0.0
  %3102 = vmatpush1.msra.mxu0 %v3066
  %3103 = vmatprep.subr.mxu0 0.0
  %3104 = vmatpush1.msra.mxu0 %v3065
  %3105 = vmatprep.subr.mxu0 0.0
  %3106 = vmatpush1.msra.mxu0 %v3064
  %3107 = vmatprep.subr.mxu0 0.0
  %3108 = vmatpush1.msra.mxu0 %v3063
  %3109 = vmatprep.subr.mxu0 0.0
  %3110 = vmatpush1.msra.mxu0 %v3062
  %3111 = vmatprep.subr.mxu0 0.0
  %3112 = vmatpush1.msra.mxu0 %v3061
  %3113 = vmatprep.subr.mxu0 0.0
  %3114 = vmatpush1.msra.mxu0 %v3060
  %3115 = vmatprep.subr.mxu0 0.0
  %3116 = vmatpush1.msra.mxu0 %v3059
  %3117 = vmatprep.subr.mxu0 0.0
  %3118 = vmatpush1.msra.mxu0 %v3058
  %3119 = vmatprep.subr.mxu0 0.0
  %3120 = vmatpush1.msra.mxu0 %v3057
  %3121 = vmatprep.subr.mxu0 0.0
  %3122 = vmatpush2.msra.mxu0 0.0
  %3123 = vmatprep.subr.mxu0 0.0
  %3124 = vmatpush2.msra.mxu0 0.0
  %3125 = vmatprep.subr.mxu0 0.0
  %3126 = vmatpush2.msra.mxu0 0.0
  %3127 = vmatprep.subr.mxu0 0.0
  %3128 = vmatpush2.msra.mxu0 0.0
  %3129 = vmatprep.subr.mxu0 0.0
  %3130 = vmatpush2.msra.mxu0 0.0
  %3131 = vmatprep.subr.mxu0 0.0
  %3132 = vmatpush2.msra.mxu0 0.0
  %3133 = vmatprep.subr.mxu0 0.0
  %3134 = vmatpush2.msra.mxu0 0.0
  %3135 = vmatprep.subr.mxu0 0.0
  %3136 = vmatpush2.msra.mxu0 0.0
  %3137 = vmatprep.subr.mxu0 0.0
  %3138 = vmatpush2.msra.mxu0 0.0
  %3139 = vmatprep.subr.mxu0 0.0
  %3140 = vmatpush2.msra.mxu0 0.0
  %3141 = vmatprep.subr.mxu0 0.0
  %3142 = vmatpush2.msra.mxu0 0.0
  %3143 = vmatprep.subr.mxu0 0.0
  %3144 = vmatpush2.msra.mxu0 0.0
  %3145 = vmatprep.subr.mxu0 0.0
  %3146 = vmatpush2.msra.mxu0 %v3076
  %3147 = vmatprep.subr.mxu0 0.0
  %3148 = vmatpush2.msra.mxu0 %v3075
  %3149 = vmatprep.subr.mxu0 0.0
  %3150 = vmatpush2.msra.mxu0 %v3074
  %3151 = vmatprep.subr.mxu0 0.0
  %3152 = vmatpush2.msra.mxu0 %v3073
  %3153 = vmatprep.mubr.f32.mxu0 %v3078
  %3154 = vmatmul.mubr.f32.gmra.mxu0 %v3049
  %v3155 = vpop.f32.mrf.mxu0
  %v3156 = vadd.f32 0.0, %v3155
  %v3157 = vpop.f32.mrf.mxu0
  %3158 = vmatprep.mubr.f32.mxu0 %v3081
  %3159 = vmatmul.mubr.f32.gmra.mxu0 %v3051
  %v3160 = vpop.f32.mrf.mxu0
  %v3161 = vadd.f32 0.0, %v3160
  %v3162 = vpop.f32.mrf.mxu0
  %3163 = vmatprep.mubr.f32.mxu0 %v3084
  %3164 = vmatmul.mubr.f32.gmra.mxu0 %v3053
  %v3165 = vpop.f32.mrf.mxu0
  %v3166 = vadd.f32 0.0, %v3165
  %v3167 = vpop.f32.mrf.mxu0
  %3168 = vmatprep.mubr.f32.mxu0 %v3087
  %3169 = vmatmul.mubr.f32.gmra.mxu0 %v3055
  %v3170 = vpop.f32.mrf.mxu0
  %v3171 = vadd.f32 0.0, %v3170
  %v3172 = vpop.f32.mrf.mxu0
  %3173 = vdwg.mxu0
  %v3174 = vld [vmem:[%s8] sm:$0xff]
  %v3175 = vld [vmem:[%s8 + $0x8] sm:$0xff]
  %v3176 = vld [vmem:[%s8 + $0x10] sm:$0xff]
  %v3177 = vld [vmem:[%s8 + $0x18] sm:$0xff]
  %v3178 = vld [vmem:[%s8 + $0x20] sm:$0xff]
  %v3179 = vld [vmem:[%s8 + $0x28] sm:$0xff]
  %v3180 = vld [vmem:[%s8 + $0x30] sm:$0xff]
  %v3181 = vld [vmem:[%s8 + $0x38] sm:$0xff]
  %v3182 = vld [vmem:[%s8 + $0x40] sm:$0xff]
  %v3183 = vld [vmem:[%s8 + $0x48] sm:$0xff]
  %v3184 = vld [vmem:[%s8 + $0x50] sm:$0xff]
  %v3185 = vld [vmem:[%s8 + $0x58] sm:$0xff]
  %v3186 = vld [vmem:[%s8 + $0x60] sm:$0xff]
  %v3187 = vld [vmem:[%s8 + $0x68] sm:$0xff]
  %v3188 = vld [vmem:[%s8 + $0x70] sm:$0xff]
  %v3189 = vld [vmem:[%s8 + $0x78] sm:$0xff]
  %v3190 = vld [vmem:[%s8 + $0x80] sm:$0xff]
  %v3191 = vld [vmem:[%s8 + $0x88] sm:$0xff]
  %v3192 = vld [vmem:[%s8 + $0x90] sm:$0xff]
  %v3193 = vld [vmem:[%s8 + $0x98] sm:$0xff]
  %3194 = vmatprep.subr.mxu0 0.0
  %3195 = vmatpush1.msra.mxu0 %v3189
  %3196 = vmatprep.subr.mxu0 0.0
  %3197 = vmatpush1.msra.mxu0 %v3188
  %3198 = vmatprep.subr.mxu0 0.0
  %3199 = vmatpush1.msra.mxu0 %v3187
  %3200 = vmatprep.subr.mxu0 0.0
  %3201 = vmatpush1.msra.mxu0 %v3186
  %3202 = vmatprep.subr.mxu0 0.0
  %3203 = vmatpush1.msra.mxu0 %v3185
  %3204 = vmatprep.subr.mxu0 0.0
  %3205 = vmatpush1.msra.mxu0 %v3184
  %3206 = vmatprep.subr.mxu0 0.0
  %3207 = vmatpush1.msra.mxu0 %v3183
  %3208 = vmatprep.subr.mxu0 0.0
  %3209 = vmatpush1.msra.mxu0 %v3182
  %3210 = vmatprep.subr.mxu0 0.0
  %3211 = vmatpush1.msra.mxu0 %v3181
  %3212 = vmatprep.subr.mxu0 0.0
  %3213 = vmatpush1.msra.mxu0 %v3180
  %3214 = vmatprep.subr.mxu0 0.0
  %3215 = vmatpush1.msra.mxu0 %v3179
  %3216 = vmatprep.subr.mxu0 0.0
  %3217 = vmatpush1.msra.mxu0 %v3178
  %3218 = vmatprep.subr.mxu0 0.0
  %3219 = vmatpush1.msra.mxu0 %v3177
  %3220 = vmatprep.subr.mxu0 0.0
  %3221 = vmatpush1.msra.mxu0 %v3176
  %3222 = vmatprep.subr.mxu0 0.0
  %3223 = vmatpush1.msra.mxu0 %v3175
  %3224 = vmatprep.subr.mxu0 0.0
  %3225 = vmatpush1.msra.mxu0 %v3174
  %3226 = vmatprep.subr.mxu0 0.0
  %3227 = vmatpush2.msra.mxu0 0.0
  %3228 = vmatprep.subr.mxu0 0.0
  %3229 = vmatpush2.msra.mxu0 0.0
  %3230 = vmatprep.subr.mxu0 0.0
  %3231 = vmatpush2.msra.mxu0 0.0
  %3232 = vmatprep.subr.mxu0 0.0
  %3233 = vmatpush2.msra.mxu0 0.0
  %3234 = vmatprep.subr.mxu0 0.0
  %3235 = vmatpush2.msra.mxu0 0.0
  %3236 = vmatprep.subr.mxu0 0.0
  %3237 = vmatpush2.msra.mxu0 0.0
  %3238 = vmatprep.subr.mxu0 0.0
  %3239 = vmatpush2.msra.mxu0 0.0
  %3240 = vmatprep.subr.mxu0 0.0
  %3241 = vmatpush2.msra.mxu0 0.0
  %3242 = vmatprep.subr.mxu0 0.0
  %3243 = vmatpush2.msra.mxu0 0.0
  %3244 = vmatprep.subr.mxu0 0.0
  %3245 = vmatpush2.msra.mxu0 0.0
  %3246 = vmatprep.subr.mxu0 0.0
  %3247 = vmatpush2.msra.mxu0 0.0
  %3248 = vmatprep.subr.mxu0 0.0
  %3249 = vmatpush2.msra.mxu0 0.0
  %3250 = vmatprep.subr.mxu0 0.0
  %3251 = vmatpush2.msra.mxu0 %v3193
  %3252 = vmatprep.subr.mxu0 0.0
  %3253 = vmatpush2.msra.mxu0 %v3192
  %3254 = vmatprep.subr.mxu0 0.0
  %3255 = vmatpush2.msra.mxu0 %v3191
  %3256 = vmatprep.subr.mxu0 0.0
  %3257 = vmatpush2.msra.mxu0 %v3190
  %3258 = vmatprep.mubr.f32.mxu0 %v3078
  %3259 = vmatmul.mubr.f32.gmra.mxu0 %v3049
  %v3260 = vpop.f32.mrf.mxu0
  %v3261 = vadd.f32 0.0, %v3260
  %v3262 = vpop.f32.mrf.mxu0
  %3263 = vmatprep.mubr.f32.mxu0 %v3081
  %3264 = vmatmul.mubr.f32.gmra.mxu0 %v3051
  %v3265 = vpop.f32.mrf.mxu0
  %v3266 = vadd.f32 0.0, %v3265
  %v3267 = vpop.f32.mrf.mxu0
  %3268 = vmatprep.mubr.f32.mxu0 %v3084
  %3269 = vmatmul.mubr.f32.gmra.mxu0 %v3053
  %v3270 = vpop.f32.mrf.mxu0
  %v3271 = vadd.f32 0.0, %v3270
  %v3272 = vpop.f32.mrf.mxu0
  %3273 = vmatprep.mubr.f32.mxu0 %v3087
  %3274 = vmatmul.mubr.f32.gmra.mxu0 %v3055
  %v3275 = vpop.f32.mrf.mxu0
  %v3276 = vadd.f32 0.0, %v3275
  %v3277 = vpop.f32.mrf.mxu0
  %3278 = vdwg.mxu0
  %v3279 = vmax.f32 %v3156, %v3261
  %v3280 = vmax.f32 %v3161, %v3266
  %v3281 = vmax.f32 %v3166, %v3271
  %v3282 = vmax.f32 %v3171, %v3276
  %v3283 = vmax.f32 %v3279, 0.0
  %v3284 = vmax.f32 %v3280, 0.0
  %v3285 = vmax.f32 %v3281, 0.0
  %v3286 = vmax.f32 %v3282, 0.0
  %v3287 = vld [vmem:[%s9] sm:$0xff]
  %v3288 = vld [vmem:[%s9 + $0x8] sm:$0xff]
  %v3289 = vld [vmem:[%s9 + $0x10] sm:$0xff]
  %v3290 = vld [vmem:[%s9 + $0x18] sm:$0xff]
  %v3291 = vld [vmem:[%s9 + $0x20] sm:$0xff]
  %v3292 = vld [vmem:[%s9 + $0x28] sm:$0xff]
  %v3293 = vld [vmem:[%s9 + $0x30] sm:$0xff]
  %v3294 = vld [vmem:[%s9 + $0x38] sm:$0xff]
  %v3295 = vld [vmem:[%s9 + $0x40] sm:$0xff]
  %v3296 = vld [vmem:[%s9 + $0x48] sm:$0xff]
  %s3297 = scalar_lea.vmem %s9, 80
  %v3298 = vld [vmem:[%s3297] sm:$0xff]
  %v3299 = vld [vmem:[%s3297 + $0x8] sm:$0xff]
  %v3300 = vld [vmem:[%s3297 + $0x10] sm:$0xff]
  %v3301 = vld [vmem:[%s3297 + $0x18] sm:$0xff]
  %v3302 = vld [vmem:[%s3297 + $0x20] sm:$0xff]
  %v3303 = vld [vmem:[%s3297 + $0x28] sm:$0xff]
  %v3304 = vld [vmem:[%s3297 + $0x30] sm:$0xff]
  %v3305 = vld [vmem:[%s3297 + $0x38] sm:$0xff]
  %v3306 = vld [vmem:[%s3297 + $0x40] sm:$0xff]
  %v3307 = vld [vmem:[%s3297 + $0x48] sm:$0xff]
  %vm3308 = vcmask 654336
  %v3310 = vsel %vm3308, %v3284, 0
  %3312 = vmatprep.subr.mxu0 0.0
  %3313 = vmatpush1.msra.mxu0 0.0
  %3314 = vmatprep.subr.mxu0 0.0
  %3315 = vmatpush1.msra.mxu0 0.0
  %3316 = vmatprep.subr.mxu0 0.0
  %3317 = vmatpush1.msra.mxu0 0.0
  %3318 = vmatprep.subr.mxu0 0.0
  %3319 = vmatpush1.msra.mxu0 0.0
  %3320 = vmatprep.subr.mxu0 0.0
  %3321 = vmatpush1.msra.mxu0 0.0
  %3322 = vmatprep.subr.mxu0 0.0
  %3323 = vmatpush1.msra.mxu0 0.0
  %3324 = vmatprep.subr.mxu0 0.0
  %3325 = vmatpush1.msra.mxu0 %v3307
  %3326 = vmatprep.subr.mxu0 0.0
  %3327 = vmatpush1.msra.mxu0 %v3306
  %3328 = vmatprep.subr.mxu0 0.0
  %3329 = vmatpush1.msra.mxu0 %v3305
  %3330 = vmatprep.subr.mxu0 0.0
  %3331 = vmatpush1.msra.mxu0 %v3304
  %3332 = vmatprep.subr.mxu0 0.0
  %3333 = vmatpush1.msra.mxu0 %v3303
  %3334 = vmatprep.subr.mxu0 0.0
  %3335 = vmatpush1.msra.mxu0 %v3302
  %3336 = vmatprep.subr.mxu0 0.0
  %3337 = vmatpush1.msra.mxu0 %v3301
  %3338 = vmatprep.subr.mxu0 0.0
  %3339 = vmatpush1.msra.mxu0 %v3300
  %3340 = vmatprep.subr.mxu0 0.0
  %3341 = vmatpush1.msra.mxu0 %v3299
  %3342 = vmatprep.subr.mxu0 0.0
  %3343 = vmatpush1.msra.mxu0 %v3298
  %3344 = vmatprep.subr.mxu0 0.0
  %3345 = vmatpush2.msra.mxu0 0.0
  %3346 = vmatprep.subr.mxu0 0.0
  %3347 = vmatpush2.msra.mxu0 0.0
  %3348 = vmatprep.subr.mxu0 0.0
  %3349 = vmatpush2.msra.mxu0 0.0
  %3350 = vmatprep.subr.mxu0 0.0
  %3351 = vmatpush2.msra.mxu0 0.0
  %3352 = vmatprep.subr.mxu0 0.0
  %3353 = vmatpush2.msra.mxu0 0.0
  %3354 = vmatprep.subr.mxu0 0.0
  %3355 = vmatpush2.msra.mxu0 0.0
  %3356 = vmatprep.subr.mxu0 0.0
  %3357 = vmatpush2.msra.mxu0 0.0
  %3358 = vmatprep.subr.mxu0 0.0
  %3359 = vmatpush2.msra.mxu0 0.0
  %3360 = vmatprep.subr.mxu0 0.0
  %3361 = vmatpush2.msra.mxu0 0.0
  %3362 = vmatprep.subr.mxu0 0.0
  %3363 = vmatpush2.msra.mxu0 0.0
  %3364 = vmatprep.subr.mxu0 0.0
  %3365 = vmatpush2.msra.mxu0 0.0
  %3366 = vmatprep.subr.mxu0 0.0
  %3367 = vmatpush2.msra.mxu0 0.0
  %3368 = vmatprep.subr.mxu0 0.0
  %3369 = vmatpush2.msra.mxu0 0.0
  %3370 = vmatprep.subr.mxu0 0.0
  %3371 = vmatpush2.msra.mxu0 0.0
  %3372 = vmatprep.subr.mxu0 0.0
  %3373 = vmatpush2.msra.mxu0 0.0
  %3374 = vmatprep.subr.mxu0 0.0
  %3375 = vmatpush2.msra.mxu0 0.0
  %3376 = vmatprep.mubr.f32.mxu0 0.0
  %3377 = vmatmul.mubr.f32.gmra.mxu0 %v3310
  %v3378 = vpop.f32.mrf.mxu0
  %v3379 = vadd.f32 0.0, %v3378
  %v3380 = vpop.f32.mrf.mxu0
  %3381 = vdwg.mxu0
  %v3383 = vsel %vm3308, %v3283, 0
  %3385 = vmatprep.subr.mxu0 0.0
  %3386 = vmatpush1.msra.mxu0 0.0
  %3387 = vmatprep.subr.mxu0 0.0
  %3388 = vmatpush1.msra.mxu0 0.0
  %3389 = vmatprep.subr.mxu0 0.0
  %3390 = vmatpush1.msra.mxu0 0.0
  %3391 = vmatprep.subr.mxu0 0.0
  %3392 = vmatpush1.msra.mxu0 0.0
  %3393 = vmatprep.subr.mxu0 0.0
  %3394 = vmatpush1.msra.mxu0 0.0
  %3395 = vmatprep.subr.mxu0 0.0
  %3396 = vmatpush1.msra.mxu0 0.0
  %3397 = vmatprep.subr.mxu0 0.0
  %3398 = vmatpush1.msra.mxu0 %v3296
  %3399 = vmatprep.subr.mxu0 0.0
  %3400 = vmatpush1.msra.mxu0 %v3295
  %3401 = vmatprep.subr.mxu0 0.0
  %3402 = vmatpush1.msra.mxu0 %v3294
  %3403 = vmatprep.subr.mxu0 0.0
  %3404 = vmatpush1.msra.mxu0 %v3293
  %3405 = vmatprep.subr.mxu0 0.0
  %3406 = vmatpush1.msra.mxu0 %v3292
  %3407 = vmatprep.subr.mxu0 0.0
  %3408 = vmatpush1.msra.mxu0 %v3291
  %3409 = vmatprep.subr.mxu0 0.0
  %3410 = vmatpush1.msra.mxu0 %v3290
  %3411 = vmatprep.subr.mxu0 0.0
  %3412 = vmatpush1.msra.mxu0 %v3289
  %3413 = vmatprep.subr.mxu0 0.0
  %3414 = vmatpush1.msra.mxu0 %v3288
  %3415 = vmatprep.subr.mxu0 0.0
  %3416 = vmatpush1.msra.mxu0 %v3287
  %3417 = vmatprep.subr.mxu0 0.0
  %3418 = vmatpush2.msra.mxu0 0.0
  %3419 = vmatprep.subr.mxu0 0.0
  %3420 = vmatpush2.msra.mxu0 0.0
  %3421 = vmatprep.subr.mxu0 0.0
  %3422 = vmatpush2.msra.mxu0 0.0
  %3423 = vmatprep.subr.mxu0 0.0
  %3424 = vmatpush2.msra.mxu0 0.0
  %3425 = vmatprep.subr.mxu0 0.0
  %3426 = vmatpush2.msra.mxu0 0.0
  %3427 = vmatprep.subr.mxu0 0.0
  %3428 = vmatpush2.msra.mxu0 0.0
  %3429 = vmatprep.subr.mxu0 0.0
  %3430 = vmatpush2.msra.mxu0 0.0
  %3431 = vmatprep.subr.mxu0 0.0
  %3432 = vmatpush2.msra.mxu0 0.0
  %3433 = vmatprep.subr.mxu0 0.0
  %3434 = vmatpush2.msra.mxu0 0.0
  %3435 = vmatprep.subr.mxu0 0.0
  %3436 = vmatpush2.msra.mxu0 0.0
  %3437 = vmatprep.subr.mxu0 0.0
  %3438 = vmatpush2.msra.mxu0 0.0
  %3439 = vmatprep.subr.mxu0 0.0
  %3440 = vmatpush2.msra.mxu0 0.0
  %3441 = vmatprep.subr.mxu0 0.0
  %3442 = vmatpush2.msra.mxu0 0.0
  %3443 = vmatprep.subr.mxu0 0.0
  %3444 = vmatpush2.msra.mxu0 0.0
  %3445 = vmatprep.subr.mxu0 0.0
  %3446 = vmatpush2.msra.mxu0 0.0
  %3447 = vmatprep.subr.mxu0 0.0
  %3448 = vmatpush2.msra.mxu0 0.0
  %3449 = vmatprep.mubr.f32.mxu0 0.0
  %3450 = vmatmul.mubr.f32.gmra.mxu0 %v3383
  %v3451 = vpop.f32.mrf.mxu0
  %v3452 = vadd.f32 %v3379, %v3451
  %v3453 = vpop.f32.mrf.mxu0
  %3454 = vdwg.mxu0
  %s3455 = scalar_lea.vmem %s9, 160
  %v3456 = vld [vmem:[%s3455] sm:$0xff]
  %v3457 = vld [vmem:[%s3455 + $0x8] sm:$0xff]
  %v3458 = vld [vmem:[%s3455 + $0x10] sm:$0xff]
  %v3459 = vld [vmem:[%s3455 + $0x18] sm:$0xff]
  %v3460 = vld [vmem:[%s3455 + $0x20] sm:$0xff]
  %v3461 = vld [vmem:[%s3455 + $0x28] sm:$0xff]
  %v3462 = vld [vmem:[%s3455 + $0x30] sm:$0xff]
  %v3463 = vld [vmem:[%s3455 + $0x38] sm:$0xff]
  %v3464 = vld [vmem:[%s3455 + $0x40] sm:$0xff]
  %v3465 = vld [vmem:[%s3455 + $0x48] sm:$0xff]
  %v3467 = vsel %vm3308, %v3285, 0
  %3469 = vmatprep.subr.mxu0 0.0
  %3470 = vmatpush1.msra.mxu0 0.0
  %3471 = vmatprep.subr.mxu0 0.0
  %3472 = vmatpush1.msra.mxu0 0.0
  %3473 = vmatprep.subr.mxu0 0.0
  %3474 = vmatpush1.msra.mxu0 0.0
  %3475 = vmatprep.subr.mxu0 0.0
  %3476 = vmatpush1.msra.mxu0 0.0
  %3477 = vmatprep.subr.mxu0 0.0
  %3478 = vmatpush1.msra.mxu0 0.0
  %3479 = vmatprep.subr.mxu0 0.0
  %3480 = vmatpush1.msra.mxu0 0.0
  %3481 = vmatprep.subr.mxu0 0.0
  %3482 = vmatpush1.msra.mxu0 %v3465
  %3483 = vmatprep.subr.mxu0 0.0
  %3484 = vmatpush1.msra.mxu0 %v3464
  %3485 = vmatprep.subr.mxu0 0.0
  %3486 = vmatpush1.msra.mxu0 %v3463
  %3487 = vmatprep.subr.mxu0 0.0
  %3488 = vmatpush1.msra.mxu0 %v3462
  %3489 = vmatprep.subr.mxu0 0.0
  %3490 = vmatpush1.msra.mxu0 %v3461
  %3491 = vmatprep.subr.mxu0 0.0
  %3492 = vmatpush1.msra.mxu0 %v3460
  %3493 = vmatprep.subr.mxu0 0.0
  %3494 = vmatpush1.msra.mxu0 %v3459
  %3495 = vmatprep.subr.mxu0 0.0
  %3496 = vmatpush1.msra.mxu0 %v3458
  %3497 = vmatprep.subr.mxu0 0.0
  %3498 = vmatpush1.msra.mxu0 %v3457
  %3499 = vmatprep.subr.mxu0 0.0
  %3500 = vmatpush1.msra.mxu0 %v3456
  %3501 = vmatprep.subr.mxu0 0.0
  %3502 = vmatpush2.msra.mxu0 0.0
  %3503 = vmatprep.subr.mxu0 0.0
  %3504 = vmatpush2.msra.mxu0 0.0
  %3505 = vmatprep.subr.mxu0 0.0
  %3506 = vmatpush2.msra.mxu0 0.0
  %3507 = vmatprep.subr.mxu0 0.0
  %3508 = vmatpush2.msra.mxu0 0.0
  %3509 = vmatprep.subr.mxu0 0.0
  %3510 = vmatpush2.msra.mxu0 0.0
  %3511 = vmatprep.subr.mxu0 0.0
  %3512 = vmatpush2.msra.mxu0 0.0
  %3513 = vmatprep.subr.mxu0 0.0
  %3514 = vmatpush2.msra.mxu0 0.0
  %3515 = vmatprep.subr.mxu0 0.0
  %3516 = vmatpush2.msra.mxu0 0.0
  %3517 = vmatprep.subr.mxu0 0.0
  %3518 = vmatpush2.msra.mxu0 0.0
  %3519 = vmatprep.subr.mxu0 0.0
  %3520 = vmatpush2.msra.mxu0 0.0
  %3521 = vmatprep.subr.mxu0 0.0
  %3522 = vmatpush2.msra.mxu0 0.0
  %3523 = vmatprep.subr.mxu0 0.0
  %3524 = vmatpush2.msra.mxu0 0.0
  %3525 = vmatprep.subr.mxu0 0.0
  %3526 = vmatpush2.msra.mxu0 0.0
  %3527 = vmatprep.subr.mxu0 0.0
  %3528 = vmatpush2.msra.mxu0 0.0
  %3529 = vmatprep.subr.mxu0 0.0
  %3530 = vmatpush2.msra.mxu0 0.0
  %3531 = vmatprep.subr.mxu0 0.0
  %3532 = vmatpush2.msra.mxu0 0.0
  %3533 = vmatprep.mubr.f32.mxu0 0.0
  %3534 = vmatmul.mubr.f32.gmra.mxu0 %v3467
  %v3535 = vpop.f32.mrf.mxu0
  %v3536 = vadd.f32 0.0, %v3535
  %v3537 = vpop.f32.mrf.mxu0
  %3538 = vdwg.mxu0
  %v3539 = vadd.f32 %v3452, %v3536
  %s3540 = scalar_lea.vmem %s9, 240
  %v3541 = vld [vmem:[%s3540] sm:$0xff]
  %v3542 = vld [vmem:[%s3540 + $0x8] sm:$0xff]
  %v3543 = vld [vmem:[%s3540 + $0x10] sm:$0xff]
  %v3544 = vld [vmem:[%s3540 + $0x18] sm:$0xff]
  %v3545 = vld [vmem:[%s3540 + $0x20] sm:$0xff]
  %v3546 = vld [vmem:[%s3540 + $0x28] sm:$0xff]
  %v3547 = vld [vmem:[%s3540 + $0x30] sm:$0xff]
  %v3548 = vld [vmem:[%s3540 + $0x38] sm:$0xff]
  %v3549 = vld [vmem:[%s3540 + $0x40] sm:$0xff]
  %v3550 = vld [vmem:[%s3540 + $0x48] sm:$0xff]
  %v3552 = vsel %vm3308, %v3286, 0
  %3554 = vmatprep.subr.mxu0 0.0
  %3555 = vmatpush1.msra.mxu0 0.0
  %3556 = vmatprep.subr.mxu0 0.0
  %3557 = vmatpush1.msra.mxu0 0.0
  %3558 = vmatprep.subr.mxu0 0.0
  %3559 = vmatpush1.msra.mxu0 0.0
  %3560 = vmatprep.subr.mxu0 0.0
  %3561 = vmatpush1.msra.mxu0 0.0
  %3562 = vmatprep.subr.mxu0 0.0
  %3563 = vmatpush1.msra.mxu0 0.0
  %3564 = vmatprep.subr.mxu0 0.0
  %3565 = vmatpush1.msra.mxu0 0.0
  %3566 = vmatprep.subr.mxu0 0.0
  %3567 = vmatpush1.msra.mxu0 %v3550
  %3568 = vmatprep.subr.mxu0 0.0
  %3569 = vmatpush1.msra.mxu0 %v3549
  %3570 = vmatprep.subr.mxu0 0.0
  %3571 = vmatpush1.msra.mxu0 %v3548
  %3572 = vmatprep.subr.mxu0 0.0
  %3573 = vmatpush1.msra.mxu0 %v3547
  %3574 = vmatprep.subr.mxu0 0.0
  %3575 = vmatpush1.msra.mxu0 %v3546
  %3576 = vmatprep.subr.mxu0 0.0
  %3577 = vmatpush1.msra.mxu0 %v3545
  %3578 = vmatprep.subr.mxu0 0.0
  %3579 = vmatpush1.msra.mxu0 %v3544
  %3580 = vmatprep.subr.mxu0 0.0
  %3581 = vmatpush1.msra.mxu0 %v3543
  %3582 = vmatprep.subr.mxu0 0.0
  %3583 = vmatpush1.msra.mxu0 %v3542
  %3584 = vmatprep.subr.mxu0 0.0
  %3585 = vmatpush1.msra.mxu0 %v3541
  %3586 = vmatprep.subr.mxu0 0.0
  %3587 = vmatpush2.msra.mxu0 0.0
  %3588 = vmatprep.subr.mxu0 0.0
  %3589 = vmatpush2.msra.mxu0 0.0
  %3590 = vmatprep.subr.mxu0 0.0
  %3591 = vmatpush2.msra.mxu0 0.0
  %3592 = vmatprep.subr.mxu0 0.0
  %3593 = vmatpush2.msra.mxu0 0.0
  %3594 = vmatprep.subr.mxu0 0.0
  %3595 = vmatpush2.msra.mxu0 0.0
  %3596 = vmatprep.subr.mxu0 0.0
  %3597 = vmatpush2.msra.mxu0 0.0
  %3598 = vmatprep.subr.mxu0 0.0
  %3599 = vmatpush2.msra.mxu0 0.0
  %3600 = vmatprep.subr.mxu0 0.0
  %3601 = vmatpush2.msra.mxu0 0.0
  %3602 = vmatprep.subr.mxu0 0.0
  %3603 = vmatpush2.msra.mxu0 0.0
  %3604 = vmatprep.subr.mxu0 0.0
  %3605 = vmatpush2.msra.mxu0 0.0
  %3606 = vmatprep.subr.mxu0 0.0
  %3607 = vmatpush2.msra.mxu0 0.0
  %3608 = vmatprep.subr.mxu0 0.0
  %3609 = vmatpush2.msra.mxu0 0.0
  %3610 = vmatprep.subr.mxu0 0.0
  %3611 = vmatpush2.msra.mxu0 0.0
  %3612 = vmatprep.subr.mxu0 0.0
  %3613 = vmatpush2.msra.mxu0 0.0
  %3614 = vmatprep.subr.mxu0 0.0
  %3615 = vmatpush2.msra.mxu0 0.0
  %3616 = vmatprep.subr.mxu0 0.0
  %3617 = vmatpush2.msra.mxu0 0.0
  %3618 = vmatprep.mubr.f32.mxu0 0.0
  %3619 = vmatmul.mubr.f32.gmra.mxu0 %v3552
  %v3620 = vpop.f32.mrf.mxu0
  %v3621 = vadd.f32 0.0, %v3620
  %v3622 = vpop.f32.mrf.mxu0
  %3623 = vdwg.mxu0
  %v3624 = vadd.f32 %v3539, %v3621
  %v3625 = vld [vmem:[%s10] sm:$0x1]
  %v3627 = vlaneseq
  %v3628 = vshrl.u32 %v3627, 7
  %v3629 = vsub.s32 0, %v3628
  %v3630 = vrot.slane %v3625, %v3629
  %v3632 = vadd.f32 %v3624, %v3630
  %v3633 = vmax.f32 %v3632, 0.0
  %v3634 = vld [vmem:[%s11] sm:$0xff]
  %v3635 = vld [vmem:[%s11 + $0x8] sm:$0xff]
  %v3636 = vld [vmem:[%s11 + $0x10] sm:$0xff]
  %v3637 = vld [vmem:[%s11 + $0x18] sm:$0xff]
  %v3638 = vld [vmem:[%s11 + $0x20] sm:$0xff]
  %v3639 = vld [vmem:[%s11 + $0x28] sm:$0xff]
  %v3640 = vld [vmem:[%s11 + $0x30] sm:$0x3]
  %v3641 = vld [vmem:[%s12] sm:$0x1]
  %v3643 = vlaneseq
  %v3644 = vshrl.u32 %v3643, 7
  %v3645 = vsub.s32 0, %v3644
  %v3646 = vrot.slane %v3641, %v3645
  %vm3648 = vcmask 408576
  %v3650 = vsel %vm3648, %v3633, 0
  %vm3652 = vcmask 1041408
  %v3654 = vsel %vm3652, %v3640, 0
  %3656 = vmatprep.subr.mxu0 0.0
  %3657 = vmatpush1.msra.mxu0 0.0
  %3658 = vmatprep.subr.mxu0 0.0
  %3659 = vmatpush1.msra.mxu0 0.0
  %3660 = vmatprep.subr.mxu0 0.0
  %3661 = vmatpush1.msra.mxu0 0.0
  %3662 = vmatprep.subr.mxu0 0.0
  %3663 = vmatpush1.msra.mxu0 0.0
  %3664 = vmatprep.subr.mxu0 0.0
  %3665 = vmatpush1.msra.mxu0 0.0
  %3666 = vmatprep.subr.mxu0 0.0
  %3667 = vmatpush1.msra.mxu0 0.0
  %3668 = vmatprep.subr.mxu0 0.0
  %3669 = vmatpush1.msra.mxu0 0.0
  %3670 = vmatprep.subr.mxu0 0.0
  %3671 = vmatpush1.msra.mxu0 0.0
  %3672 = vmatprep.subr.mxu0 0.0
  %3673 = vmatpush1.msra.mxu0 0.0
  %3674 = vmatprep.subr.mxu0 0.0
  %3675 = vmatpush1.msra.mxu0 %v3654
  %3676 = vmatprep.subr.mxu0 0.0
  %3677 = vmatpush1.msra.mxu0 %v3639
  %3678 = vmatprep.subr.mxu0 0.0
  %3679 = vmatpush1.msra.mxu0 %v3638
  %3680 = vmatprep.subr.mxu0 0.0
  %3681 = vmatpush1.msra.mxu0 %v3637
  %3682 = vmatprep.subr.mxu0 0.0
  %3683 = vmatpush1.msra.mxu0 %v3636
  %3684 = vmatprep.subr.mxu0 0.0
  %3685 = vmatpush1.msra.mxu0 %v3635
  %3686 = vmatprep.subr.mxu0 0.0
  %3687 = vmatpush1.msra.mxu0 %v3634
  %3688 = vmatprep.subr.mxu0 0.0
  %3689 = vmatpush2.msra.mxu0 0.0
  %3690 = vmatprep.subr.mxu0 0.0
  %3691 = vmatpush2.msra.mxu0 0.0
  %3692 = vmatprep.subr.mxu0 0.0
  %3693 = vmatpush2.msra.mxu0 0.0
  %3694 = vmatprep.subr.mxu0 0.0
  %3695 = vmatpush2.msra.mxu0 0.0
  %3696 = vmatprep.subr.mxu0 0.0
  %3697 = vmatpush2.msra.mxu0 0.0
  %3698 = vmatprep.subr.mxu0 0.0
  %3699 = vmatpush2.msra.mxu0 0.0
  %3700 = vmatprep.subr.mxu0 0.0
  %3701 = vmatpush2.msra.mxu0 0.0
  %3702 = vmatprep.subr.mxu0 0.0
  %3703 = vmatpush2.msra.mxu0 0.0
  %3704 = vmatprep.subr.mxu0 0.0
  %3705 = vmatpush2.msra.mxu0 0.0
  %3706 = vmatprep.subr.mxu0 0.0
  %3707 = vmatpush2.msra.mxu0 0.0
  %3708 = vmatprep.subr.mxu0 0.0
  %3709 = vmatpush2.msra.mxu0 0.0
  %3710 = vmatprep.subr.mxu0 0.0
  %3711 = vmatpush2.msra.mxu0 0.0
  %3712 = vmatprep.subr.mxu0 0.0
  %3713 = vmatpush2.msra.mxu0 0.0
  %3714 = vmatprep.subr.mxu0 0.0
  %3715 = vmatpush2.msra.mxu0 0.0
  %3716 = vmatprep.subr.mxu0 0.0
  %3717 = vmatpush2.msra.mxu0 0.0
  %3718 = vmatprep.subr.mxu0 0.0
  %3719 = vmatpush2.msra.mxu0 0.0
  %3720 = vmatprep.mubr.f32.mxu0 0.0
  %3721 = vmatmul.mubr.f32.gmra.mxu0 %v3650
  %v3722 = vpop.f32.mrf.mxu0
  %v3723 = vadd.f32 %v3646, %v3722
  %v3724 = vpop.f32.mrf.mxu0
  %3725 = vdwg.mxu0
  %vm3726 = vcmask 80896
  %v3727 = vsel %vm3726, %v3723, -inf
  %3728 = vmax.xlane.f32.xlu0 %v3727
  %v3729 = vpop.xlane.xlu0 %3728
  %v3730 = vsub.f32 %v3723, %v3729
  %v3731 = vmul.f32 %v3730, 1.442695
  %v3732 = vpow.pop %v3731
  %v3733 = vsel %vm3726, %v3732, 0.0
  %3734 = vadd.xlane.f32.xlu0 %v3733
  %v3735 = vpop.xlane.xlu0 %3734
  %v3736 = vlog2.pop %v3735
  %v3737 = vmul.f32 %v3736, 0.6931472
  %v3738 = vsub.f32 %v3730, %v3737
  %3739 = vst.msk [vmem:[%s13] sm:$0xff] %vm3726, %v3738
  // Predicated region
  $region54: #{net_forward.1} parent=0 // pred_check
    _
  $region55: #{net_forward.1} parent=0 // pred_check_branch
    %3741 = sbr.rel (0) target = $region57
  $region56: #{net_forward.1} parent=0 // pred_region
    _
  $region57: #{net_forward.1} parent=0 // pred_fallthru
    _
  // Predicated region
  $region58: #{net_forward.1} parent=0 // pred_check
    _
  $region59: #{net_forward.1} parent=0 // pred_check_branch
    %3743 = sbr.rel (0) target = $region61
  $region60: #{net_forward.1} parent=0 // pred_region
    _
  $region61: #{net_forward.1} parent=0 // pred_fallthru
    _

</llo_original>
